<compile_context>
chip_gen: v5e
topology: v5e:2x2
jax: 0.10.0
libtpu: 0.0.40
codegen_flags: <defaults>
</compile_context>

<pallas_src>
import functools

import numpy as np
import jax
import jax.numpy as jnp
from jax import lax
from jax.experimental import pallas as pl
from jax.experimental.pallas import tpu as pltpu


_GATE_ORDER = (0, 1, 3, 2)   # PyTorch gate order [i|f|g|o] -> packed [i|f|o|g]


def _align8(x):
    return ((x + 7) // 8) * 8


# ---------------------------------------------------------------------------
# Host-side weight packing helpers
# ---------------------------------------------------------------------------

def _mod_gate_cols(w, C, half):
    """(rows,4C) [i|f|g|o] -> (rows,8C): gate blocks [i|f|o|g], each [cov|fac]."""
    rows = w.shape[0]
    zeros = jnp.zeros((rows, C), w.dtype)
    blocks = []
    for g in _GATE_ORDER:
        blk = w[:, g * C:(g + 1) * C]
        blocks += ([blk, zeros] if half == 0 else [zeros, blk])
    return jnp.concatenate(blocks, axis=1)


def _mod_gate_bias(b_cov, b_fac, C):
    pieces = []
    for g in _GATE_ORDER:
        pieces += [b_cov[g * C:(g + 1) * C], b_fac[g * C:(g + 1) * C]]
    return jnp.concatenate(pieces).reshape(1, 8 * C)


def _word_gate_cols(w, H, L, layer):
    """(rows,4H) [i|f|g|o] -> (rows,4LH): gate blocks [i|f|o|g], layer-interleaved."""
    rows = w.shape[0]
    out = jnp.zeros((rows, 4 * L * H), w.dtype)
    for gi, g in enumerate(_GATE_ORDER):
        out = out.at[:, gi * L * H + layer * H: gi * L * H + (layer + 1) * H].set(
            w[:, g * H:(g + 1) * H])
    return out


def _word_gate_bias(b, H, L, layer):
    out = jnp.zeros((4 * L * H,), b.dtype)
    for gi, g in enumerate(_GATE_ORDER):
        out = out.at[gi * L * H + layer * H: gi * L * H + (layer + 1) * H].set(
            b[g * H:(g + 1) * H])
    return out.reshape(1, 4 * L * H)


def _pack_slab(pieces):
    """pieces: list of (name, 2-D array). Returns (slab, {name: (off, rows, cols)})."""
    width = max(int(a.shape[1]) for _, a in pieces)
    layout, off = {}, 0
    for name, arr in pieces:
        r, c = int(arr.shape[0]), int(arr.shape[1])
        layout[name] = (off, r, c)
        off = _align8(off + r)
    slab = jnp.zeros((off, width), jnp.float32)
    for name, arr in pieces:
        o, r, c = layout[name]
        slab = slab.at[o:o + r, 0:c].set(jnp.asarray(arr, jnp.float32))
    return slab, layout


# ---------------------------------------------------------------------------
# Fused forward kernel
# ---------------------------------------------------------------------------

def make_raven_kernel(cfg, B, T, Cv, Fd, lay_a, lay_b):
    C = cfg["cell_dim"]
    H = cfg["hidden_dim"]
    L = cfg["layer"]
    shift_weight = cfg["shift_weight"]
    N = B * T
    LH = L * H
    f32 = jnp.float32

    def _a(ref, name):
        o, r, c = lay_a[name]
        return ref[o:o + r, 0:c]

    def _b(ref, name):
        o, r, c = lay_b[name]
        return ref[o:o + r, 0:c]

    def kernel(words_ref, facet_ref, cov_ref, sa_ref, sb_ref, out_ref, states_ref):
        words = words_ref[...]                                     # (N, W)
        fac = facet_ref[...]                                       # (N, Fd)
        covf = cov_ref[...]                                        # (N, Cv), row b*T+t

        # ---- covarep BatchNorm2d(T channels), batch stats via selector matmuls --
        sel_tn = _a(sa_ref, "sel_tn")                              # (T, N) one-hot
        sel_nt = _a(sa_ref, "sel_nt")                              # (N, T) one-hot
        inv_cnt = 1.0 / float(B * Cv)
        rowsum = jnp.sum(covf, axis=1, keepdims=True)              # (N, 1)
        mean_t = jnp.dot(sel_tn, rowsum, preferred_element_type=f32) * inv_cnt
        centered = covf - jnp.dot(sel_nt, mean_t, preferred_element_type=f32)
        sqsum = jnp.sum(centered * centered, axis=1, keepdims=True)
        var_t = jnp.dot(sel_tn, sqsum, preferred_element_type=f32) * inv_cnt
        scale_t = _a(sa_ref, "bn_g") * lax.rsqrt(var_t + 1e-5)     # (T, 1)
        covn = (centered
                * jnp.dot(sel_nt, scale_t, preferred_element_type=f32)
                + jnp.dot(sel_nt, _a(sa_ref, "bn_b"), preferred_element_type=f32))

        # ---- fused modality-LSTM input gates (projections folded on host) ------
        xg = (jnp.dot(covn, _a(sa_ref, "wc"), preferred_element_type=f32)
              + jnp.dot(fac, _a(sa_ref, "wf"), preferred_element_type=f32)
              + _a(sa_ref, "b_mod"))                               # (N, 8C)

        # ---- fused covarep+facet LSTM (one sequence of length B*T, batch 1) ----
        whh = _a(sa_ref, "whh_mod")                                # (2C, 8C)
        h = jnp.zeros((1, 2 * C), f32)
        c = jnp.zeros((1, 2 * C), f32)
        for s in range(N):                    # fully unrolled serial recurrence
            g = xg[s:s + 1, :] + jnp.dot(h, whh, preferred_element_type=f32)
            sg = jax.nn.sigmoid(g[:, 0:6 * C])          # [i|f|o] contiguous
            gg = jnp.tanh(g[:, 6 * C:8 * C])            # [g]
            c = sg[:, 2 * C:4 * C] * c + sg[:, 0:2 * C] * gg
            h = sg[:, 4 * C:6 * C] * jnp.tanh(c)
            states_ref[s:s + 1, :] = h
        states = states_ref[...]                                   # (N, 2C) [h_cov|h_fac]

        # ---- non-verbal shift fusion --------------------------------------------
        w2 = (jnp.dot(states, _a(sa_ref, "wgt_state"), preferred_element_type=f32)
              + jnp.dot(words, _a(sa_ref, "wgt_word"), preferred_element_type=f32)
              + _a(sa_ref, "wgt_b"))                               # (N, 2)
        cov2 = states[:, 0:C] * w2[:, 0:1]
        fac2 = states[:, C:2 * C] * w2[:, 1:2]
        addon = (jnp.dot(cov2, _a(sa_ref, "add_wc"), preferred_element_type=f32)
                 + jnp.dot(fac2, _a(sa_ref, "add_wf"), preferred_element_type=f32)
                 + _a(sa_ref, "add_b"))                            # (N, W)
        scale = shift_weight * jnp.minimum(
            lax.rsqrt(jnp.sum(addon * addon, axis=1, keepdims=True)), 1.0)
        addon = addon * scale
        wl2 = jnp.sqrt(jnp.sum(words * words, axis=1, keepdims=True))
        word_input = words + addon * wl2                           # (N, W), rows b*T+t

        # ---- wavefront-fused stacked word LSTM (lastState=True) -----------------
        # TODO(synk): custom `lstm.LSTM` module is not provided; implemented as a
        #             standard stacked LSTM with batch-first I/O and zero init state.
        word_reord = jnp.dot(_a(sa_ref, "perm"), word_input,
                             preferred_element_type=f32)           # rows t*B+b
        xg_w = (jnp.dot(word_reord, _b(sb_ref, "wih0"), preferred_element_type=f32)
                + _b(sb_ref, "b0"))                                # (T*B, 4LH)
        w_blk = _b(sb_ref, "w_block")                              # (LH, 4LH)
        b_lay = [_b(sb_ref, f"b_l{l}") for l in range(1, L)]

        hw = jnp.zeros((B, LH), f32)
        cw = jnp.zeros((B, LH), f32)
        for k in range(T + L - 1):            # wavefront: layer l computes t = k - l
            g = jnp.dot(hw, w_blk, preferred_element_type=f32)     # (B, 4LH)
            if k < T:
                g = g + xg_w[k * B:(k + 1) * B, :]
            for l in range(1, L):
                if k >= l:                    # keeps layer-l state exactly 0 before start
                    g = g + b_lay[l - 1]
            sg = jax.nn.sigmoid(g[:, 0:3 * LH])         # [i|f|o] contiguous
            gg = jnp.tanh(g[:, 3 * LH:4 * LH])          # [g]
            cw = sg[:, LH:2 * LH] * cw + sg[:, 0:LH] * gg
            hw = sg[:, 2 * LH:3 * LH] * jnp.tanh(cw)

        last_h = hw[:, (L - 1) * H:L * H]                          # (B, H), t = T-1
        out_ref[...] = (jnp.dot(last_h, _a(sa_ref, "final_w"),
                                preferred_element_type=f32)
                        + _a(sa_ref, "final_b"))

    return kernel


# ---------------------------------------------------------------------------
# RAVEN forward (single fused pallas_call)
# ---------------------------------------------------------------------------

def raven_forward(params, words, facet, covarep, cfg):
    B, T, W = words.shape
    Fd = facet.shape[-1]
    Cv = covarep.shape[-1]
    ND = cfg["norm_dim"]
    C = cfg["cell_dim"]
    H = cfg["hidden_dim"]
    L = cfg["layer"]
    N = B * T
    LH = L * H

    words_flat = words.reshape(N, W)
    facet_flat = facet.reshape(N, Fd)
    cov_flat = covarep.reshape(N, Cv)

    # --- modality-LSTM fusion: block-diag, gate-interleaved, projection-folded --
    wih_cov = _mod_gate_cols(params["covlstm_wih"], C, 0)          # (ND, 8C)
    wih_fac = _mod_gate_cols(params["faclstm_wih"], C, 1)          # (ND, 8C)
    whh_mod = jnp.concatenate(
        [_mod_gate_cols(params["covlstm_whh"], C, 0),
         _mod_gate_cols(params["faclstm_whh"], C, 1)], axis=0)     # (2C, 8C)
    wc_fold = params["covproj_w"] @ wih_cov                        # (Cv, 8C)
    wf_fold = params["facproj_w"] @ wih_fac                        # (Fd, 8C)
    b_mod = (_mod_gate_bias(params["covlstm_b"], params["faclstm_b"], C)
             + params["covproj_b"].reshape(1, ND) @ wih_cov
             + params["facproj_b"].reshape(1, ND) @ wih_fac)       # (1, 8C)

    # --- shift-fusion weights: one 2-column matmul pair gives both gate weights -
    zc = jnp.zeros((C, 1), jnp.float32)
    wgt_state = jnp.concatenate(
        [jnp.concatenate([params["covW_w"][:C, :], zc], axis=1),
         jnp.concatenate([zc, params["facW_w"][:C, :]], axis=1)], axis=0)   # (2C, 2)
    wgt_word = jnp.concatenate([params["covW_w"][C:, :],
                                params["facW_w"][C:, :]], axis=1)           # (W, 2)
    wgt_b = jnp.concatenate([params["covW_b"], params["facW_b"]], axis=1)   # (1, 2)

    # --- word-LSTM wavefront fusion: block matrix over [h_0 | ... | h_{L-1}] ----
    w_block = jnp.zeros((LH, 4 * LH), jnp.float32)
    for l in range(L):
        w_block = w_block.at[l * H:(l + 1) * H, :].add(
            _word_gate_cols(params[f"lstm1_whh_{l}"], H, L, l))
        if l >= 1:
            w_block = w_block.at[(l - 1) * H:l * H, :].add(
                _word_gate_cols(params[f"lstm1_wih_{l}"], H, L, l))
    wih0_big = _word_gate_cols(params["lstm1_wih_0"], H, L, 0)     # (W, 4LH)
    b0_big = _word_gate_bias(params["lstm1_b_0"], H, L, 0)         # (1, 4LH)

    # --- tiny one-hot constants: BN time selectors and (b*T+t)->(t*B+b) permute -
    sel_tn = np.zeros((T, N), np.float32)
    for b in range(B):
        for t in range(T):
            sel_tn[t, b * T + t] = 1.0
    sel_nt = np.ascontiguousarray(sel_tn.T)
    perm = np.zeros((N, N), np.float32)
    for t in range(T):
        for b in range(B):
            perm[t * B + b, b * T + t] = 1.0

    pieces_a = [
        ("wc", wc_fold), ("wf", wf_fold), ("whh_mod", whh_mod), ("b_mod", b_mod),
        ("wgt_state", wgt_state), ("wgt_word", wgt_word), ("wgt_b", wgt_b),
        ("add_wc", params["add_w"][:C, :]), ("add_wf", params["add_w"][C:, :]),
        ("add_b", params["add_b"]),
        ("final_w", params["final_w"]), ("final_b", params["final_b"].reshape(1, 1)),
        ("bn_g", params["bn_gamma"].reshape(T, 1)),
        ("bn_b", params["bn_beta"].reshape(T, 1)),
        ("sel_tn", sel_tn), ("sel_nt", sel_nt), ("perm", perm),
    ]
    pieces_b = [("wih0", wih0_big), ("w_block", w_block), ("b0", b0_big)]
    for l in range(1, L):
        pieces_b.append((f"b_l{l}", _word_gate_bias(params[f"lstm1_b_{l}"], H, L, l)))

    slab_a, lay_a = _pack_slab(pieces_a)
    slab_b, lay_b = _pack_slab(pieces_b)

    kern = make_raven_kernel(cfg, B, T, Cv, Fd, lay_a, lay_b)
    vmem = pl.BlockSpec(memory_space=pltpu.MemorySpace.VMEM)
    return pl.pallas_call(
        kern,
        out_shape=jax.ShapeDtypeStruct((B, 1), jnp.float32),
        in_specs=[vmem] * 5,
        out_specs=vmem,
        scratch_shapes=[pltpu.VMEM((N, 2 * C), jnp.float32)],
    )(words_flat, facet_flat, cov_flat, slab_a, slab_b)


# ---------------------------------------------------------------------------
# Deterministic parameter construction (PyTorch [i|f|g|o] gate convention)
# ---------------------------------------------------------------------------

def init_params(key, cfg):
    word_dim = cfg["word_dim"]
    fac_dim = cfg["facet_dim"]
    cov_dim = cfg["cov_dim"]
    norm_dim = cfg["norm_dim"]
    cell_dim = cfg["cell_dim"]
    hid_dim = cfg["hidden_dim"]
    T = cfg["padding_len"]

    def u(k, shape, scale=0.1):
        return jax.random.uniform(k, shape, jnp.float32, -scale, scale)

    keys = iter(jax.random.split(key, 64))
    p = {}
    # BatchNorm2d(padding_len) affine params (default init: gamma=1, beta=0)
    p["bn_gamma"] = jnp.ones((T,), jnp.float32)
    p["bn_beta"] = jnp.zeros((T,), jnp.float32)
    # fc_rszcovarep / fc_rszFacet
    p["covproj_w"] = u(next(keys), (cov_dim, norm_dim))
    p["covproj_b"] = u(next(keys), (norm_dim,))
    p["facproj_w"] = u(next(keys), (fac_dim, norm_dim))
    p["facproj_b"] = u(next(keys), (norm_dim,))
    # covarepLSTM / facetLSTM  (weights stored transposed; bias = b_ih + b_hh)
    p["covlstm_wih"] = u(next(keys), (norm_dim, 4 * cell_dim))
    p["covlstm_whh"] = u(next(keys), (cell_dim, 4 * cell_dim))
    p["covlstm_b"] = u(next(keys), (4 * cell_dim,))
    p["faclstm_wih"] = u(next(keys), (norm_dim, 4 * cell_dim))
    p["faclstm_whh"] = u(next(keys), (cell_dim, 4 * cell_dim))
    p["faclstm_b"] = u(next(keys), (4 * cell_dim,))
    # covarepW / facetW (Linear(cellDim + wordDim, 1)), calcAddon
    p["covW_w"] = u(next(keys), (cell_dim + word_dim, 1))
    p["covW_b"] = u(next(keys), (1, 1))
    p["facW_w"] = u(next(keys), (cell_dim + word_dim, 1))
    p["facW_b"] = u(next(keys), (1, 1))
    p["add_w"] = u(next(keys), (2 * cell_dim, word_dim))
    p["add_b"] = u(next(keys), (1, word_dim))
    # lstm1 stacked layers
    din = word_dim
    for l in range(cfg["layer"]):
        p[f"lstm1_wih_{l}"] = u(next(keys), (din, 4 * hid_dim))
        p[f"lstm1_whh_{l}"] = u(next(keys), (hid_dim, 4 * hid_dim))
        p[f"lstm1_b_{l}"] = u(next(keys), (4 * hid_dim,))
        din = hid_dim
    # fc_afterLSTM (lastState=True -> Linear(hiddenDim, 1))
    p["final_w"] = u(next(keys), (hid_dim, 1))
    p["final_b"] = u(next(keys), (1,))
    return p


# ---------------------------------------------------------------------------
# Main
# ---------------------------------------------------------------------------

if __name__ == "__main__":
    cfg = dict(
        word_dim=16,        # input_dims[0]
        facet_dim=10,       # input_dims[1]
        cov_dim=12,         # input_dims[2]
        norm_dim=16,
        cell_dim=16,
        hidden_dim=32,
        padding_len=8,      # max_seq_len == T
        shift_padding_len=1,
        layer=2,
        shift_weight=0.5,
        last_state=True,
    )
    B, T = 2, cfg["padding_len"]

    root = jax.random.PRNGKey(0)
    k_params, k_w, k_f, k_c = jax.random.split(root, 4)
    params = init_params(k_params, cfg)

    words = jax.random.normal(k_w, (B, T, cfg["word_dim"]), jnp.float32)
    facet = jax.random.normal(k_f, (B, T, cfg["facet_dim"]), jnp.float32)
    covarep = jax.random.normal(k_c, (B, T, cfg["cov_dim"]), jnp.float32)

    fwd = jax.jit(functools.partial(raven_forward, cfg=cfg))
    final = fwd(params, words, facet, covarep)
    final = jax.block_until_ready(final)
    assert final.shape == (B, 1), final.shape
    assert jnp.all(jnp.isfinite(final))
    print("KERNEL_OK")
</pallas_src>

<mosaic_0001>
module attributes {stable_mosaic.version = 11 : i64} {
  func.func @kernel(%arg0: memref<16x16xf32, #tpu.memory_space<vmem>>, %arg1: memref<16x10xf32, #tpu.memory_space<vmem>>, %arg2: memref<16x12xf32, #tpu.memory_space<vmem>>, %arg3: memref<264x128xf32, #tpu.memory_space<vmem>>, %arg4: memref<96x256xf32, #tpu.memory_space<vmem>>, %arg5: memref<2x1xf32, #tpu.memory_space<vmem>>, %arg6: memref<16x32xf32, #tpu.memory_space<vmem>>) attributes {dimension_semantics = [], scalar_prefetch = 0 : i64, scratch_operands = 1 : i64, tpu.core_type = #tpu.core_type<tc>} {
    %c0 = arith.constant 0 : index
    %c0_0 = arith.constant 0 : index
    %0 = vector.load %arg0[%c0, %c0_0] : memref<16x16xf32, #tpu.memory_space<vmem>>, vector<16x16xf32>
    %c0_1 = arith.constant 0 : index
    %c0_2 = arith.constant 0 : index
    %1 = vector.load %arg1[%c0_1, %c0_2] : memref<16x10xf32, #tpu.memory_space<vmem>>, vector<16x10xf32>
    %c0_3 = arith.constant 0 : index
    %c0_4 = arith.constant 0 : index
    %2 = vector.load %arg2[%c0_3, %c0_4] : memref<16x12xf32, #tpu.memory_space<vmem>>, vector<16x12xf32>
    %c224 = arith.constant 224 : index
    %c0_5 = arith.constant 0 : index
    %3 = vector.load %arg3[%c224, %c0_5] : memref<264x128xf32, #tpu.memory_space<vmem>>, vector<8x16xf32>
    %c232 = arith.constant 232 : index
    %c0_6 = arith.constant 0 : index
    %4 = vector.load %arg3[%c232, %c0_6] : memref<264x128xf32, #tpu.memory_space<vmem>>, vector<16x8xf32>
    %cst = arith.constant dense<0.000000e+00> : vector<16xf32>
    %5 = vector.multi_reduction <add>, %2, %cst [1] : vector<16x12xf32> to vector<16xf32>
    %6 = vector.shape_cast %5 : vector<16xf32> to vector<16x1xf32>
    %cst_7 = arith.constant dense<0.000000e+00> : vector<8x1xf32>
    %7 = tpu.matmul %3, %6, %cst_7 {dimension_numbers = #tpu.dot_dimension_numbers<[1], [0], [0], [1], [0, 0, 1, 1], [], []>} : vector<8x16xf32>, vector<16x1xf32>, vector<8x1xf32> -> vector<8x1xf32>
    %cst_8 = arith.constant 0.0416666679 : f32
    %8 = vector.broadcast %cst_8 : f32 to vector<8x1xf32>
    %9 = arith.mulf %7, %8 : vector<8x1xf32>
    %cst_9 = arith.constant dense<0.000000e+00> : vector<16x1xf32>
    %10 = tpu.matmul %4, %9, %cst_9 {dimension_numbers = #tpu.dot_dimension_numbers<[1], [0], [0], [1], [0, 0, 1, 1], [], []>} : vector<16x8xf32>, vector<8x1xf32>, vector<16x1xf32> -> vector<16x1xf32>
    %11 = vector.broadcast %10 : vector<16x1xf32> to vector<16x12xf32>
    %12 = arith.subf %2, %11 : vector<16x12xf32>
    %13 = arith.mulf %12, %12 : vector<16x12xf32>
    %cst_10 = arith.constant dense<0.000000e+00> : vector<16xf32>
    %14 = vector.multi_reduction <add>, %13, %cst_10 [1] : vector<16x12xf32> to vector<16xf32>
    %15 = vector.shape_cast %14 : vector<16xf32> to vector<16x1xf32>
    %cst_11 = arith.constant dense<0.000000e+00> : vector<8x1xf32>
    %16 = tpu.matmul %3, %15, %cst_11 {dimension_numbers = #tpu.dot_dimension_numbers<[1], [0], [0], [1], [0, 0, 1, 1], [], []>} : vector<8x16xf32>, vector<16x1xf32>, vector<8x1xf32> -> vector<8x1xf32>
    %cst_12 = arith.constant 0.0416666679 : f32
    %17 = vector.broadcast %cst_12 : f32 to vector<8x1xf32>
    %18 = arith.mulf %16, %17 : vector<8x1xf32>
    %c208 = arith.constant 208 : index
    %c0_13 = arith.constant 0 : index
    %19 = vector.load %arg3[%c208, %c0_13] : memref<264x128xf32, #tpu.memory_space<vmem>>, vector<8x1xf32>
    %cst_14 = arith.constant 9.99999974E-6 : f32
    %20 = vector.broadcast %cst_14 : f32 to vector<8x1xf32>
    %21 = arith.addf %18, %20 : vector<8x1xf32>
    %22 = math.rsqrt %21 : vector<8x1xf32>
    %23 = arith.mulf %19, %22 : vector<8x1xf32>
    %cst_15 = arith.constant dense<0.000000e+00> : vector<16x1xf32>
    %24 = tpu.matmul %4, %23, %cst_15 {dimension_numbers = #tpu.dot_dimension_numbers<[1], [0], [0], [1], [0, 0, 1, 1], [], []>} : vector<16x8xf32>, vector<8x1xf32>, vector<16x1xf32> -> vector<16x1xf32>
    %25 = vector.broadcast %24 : vector<16x1xf32> to vector<16x12xf32>
    %26 = arith.mulf %12, %25 : vector<16x12xf32>
    %c216 = arith.constant 216 : index
    %c0_16 = arith.constant 0 : index
    %27 = vector.load %arg3[%c216, %c0_16] : memref<264x128xf32, #tpu.memory_space<vmem>>, vector<8x1xf32>
    %cst_17 = arith.constant dense<0.000000e+00> : vector<16x1xf32>
    %28 = tpu.matmul %4, %27, %cst_17 {dimension_numbers = #tpu.dot_dimension_numbers<[1], [0], [0], [1], [0, 0, 1, 1], [], []>} : vector<16x8xf32>, vector<8x1xf32>, vector<16x1xf32> -> vector<16x1xf32>
    %29 = vector.broadcast %28 : vector<16x1xf32> to vector<16x12xf32>
    %30 = arith.addf %26, %29 : vector<16x12xf32>
    %c0_18 = arith.constant 0 : index
    %c0_19 = arith.constant 0 : index
    %31 = vector.load %arg3[%c0_18, %c0_19] : memref<264x128xf32, #tpu.memory_space<vmem>>, vector<12x128xf32>
    %cst_20 = arith.constant dense<0.000000e+00> : vector<16x128xf32>
    %32 = tpu.matmul %30, %31, %cst_20 {dimension_numbers = #tpu.dot_dimension_numbers<[1], [0], [0], [1], [0, 0, 1, 1], [], []>} : vector<16x12xf32>, vector<12x128xf32>, vector<16x128xf32> -> vector<16x128xf32>
    %c16 = arith.constant 16 : index
    %c0_21 = arith.constant 0 : index
    %33 = vector.load %arg3[%c16, %c0_21] : memref<264x128xf32, #tpu.memory_space<vmem>>, vector<10x128xf32>
    %cst_22 = arith.constant dense<0.000000e+00> : vector<16x128xf32>
    %34 = tpu.matmul %1, %33, %cst_22 {dimension_numbers = #tpu.dot_dimension_numbers<[1], [0], [0], [1], [0, 0, 1, 1], [], []>} : vector<16x10xf32>, vector<10x128xf32>, vector<16x128xf32> -> vector<16x128xf32>
    %35 = arith.addf %32, %34 : vector<16x128xf32>
    %c64 = arith.constant 64 : index
    %c0_23 = arith.constant 0 : index
    %36 = vector.load %arg3[%c64, %c0_23] : memref<264x128xf32, #tpu.memory_space<vmem>>, vector<1x128xf32>
    %37 = vector.broadcast %36 : vector<1x128xf32> to vector<16x128xf32>
    %38 = arith.addf %35, %37 : vector<16x128xf32>
    %c32 = arith.constant 32 : index
    %c0_24 = arith.constant 0 : index
    %39 = vector.load %arg3[%c32, %c0_24] : memref<264x128xf32, #tpu.memory_space<vmem>>, vector<32x128xf32>
    %cst_25 = arith.constant 0.000000e+00 : f32
    %40 = vector.broadcast %cst_25 : f32 to vector<1x32xf32>
    %cst_26 = arith.constant 0.000000e+00 : f32
    %41 = vector.broadcast %cst_26 : f32 to vector<1x32xf32>
    %42 = vector.extract_strided_slice %38 {offsets = [0, 0], sizes = [1, 128], strides = [1, 1]} : vector<16x128xf32> to vector<1x128xf32>
    %cst_27 = arith.constant dense<0.000000e+00> : vector<1x128xf32>
    %43 = tpu.matmul %40, %39, %cst_27 {dimension_numbers = #tpu.dot_dimension_numbers<[1], [0], [0], [1], [0, 0, 1, 1], [], []>} : vector<1x32xf32>, vector<32x128xf32>, vector<1x128xf32> -> vector<1x128xf32>
    %44 = arith.addf %42, %43 : vector<1x128xf32>
    %45 = vector.extract_strided_slice %44 {offsets = [0, 0], sizes = [1, 96], strides = [1, 1]} : vector<1x128xf32> to vector<1x96xf32>
    %46 = arith.negf %45 : vector<1x96xf32>
    %47 = math.exp %46 : vector<1x96xf32>
    %cst_28 = arith.constant 1.000000e+00 : f32
    %48 = vector.broadcast %cst_28 : f32 to vector<1x96xf32>
    %49 = arith.addf %48, %47 : vector<1x96xf32>
    %50 = arith.divf %48, %49 : vector<1x96xf32>
    %51 = vector.extract_strided_slice %44 {offsets = [0, 96], sizes = [1, 32], strides = [1, 1]} : vector<1x128xf32> to vector<1x32xf32>
    %52 = math.tanh %51 : vector<1x32xf32>
    %53 = vector.extract_strided_slice %50 {offsets = [0, 32], sizes = [1, 32], strides = [1, 1]} : vector<1x96xf32> to vector<1x32xf32>
    %54 = arith.mulf %53, %41 : vector<1x32xf32>
    %55 = vector.extract_strided_slice %50 {offsets = [0, 0], sizes = [1, 32], strides = [1, 1]} : vector<1x96xf32> to vector<1x32xf32>
    %56 = arith.mulf %55, %52 : vector<1x32xf32>
    %57 = arith.addf %54, %56 : vector<1x32xf32>
    %58 = vector.extract_strided_slice %50 {offsets = [0, 64], sizes = [1, 32], strides = [1, 1]} : vector<1x96xf32> to vector<1x32xf32>
    %59 = math.tanh %57 : vector<1x32xf32>
    %60 = arith.mulf %58, %59 : vector<1x32xf32>
    %c0_29 = arith.constant 0 : index
    %c0_30 = arith.constant 0 : index
    %61 = vector.load %arg6[%c0_29, %c0_30] : memref<16x32xf32, #tpu.memory_space<vmem>>, vector<1x32xf32>
    tpu.vector_store %arg6[%c0_29, %c0_30], %60 {strides = array<i32>} : memref<16x32xf32, #tpu.memory_space<vmem>>, vector<1x32xf32>,
    %62 = vector.extract_strided_slice %38 {offsets = [1, 0], sizes = [1, 128], strides = [1, 1]} : vector<16x128xf32> to vector<1x128xf32>
    %cst_31 = arith.constant dense<0.000000e+00> : vector<1x128xf32>
    %63 = tpu.matmul %60, %39, %cst_31 {dimension_numbers = #tpu.dot_dimension_numbers<[1], [0], [0], [1], [0, 0, 1, 1], [], []>} : vector<1x32xf32>, vector<32x128xf32>, vector<1x128xf32> -> vector<1x128xf32>
    %64 = arith.addf %62, %63 : vector<1x128xf32>
    %65 = vector.extract_strided_slice %64 {offsets = [0, 0], sizes = [1, 96], strides = [1, 1]} : vector<1x128xf32> to vector<1x96xf32>
    %66 = arith.negf %65 : vector<1x96xf32>
    %67 = math.exp %66 : vector<1x96xf32>
    %cst_32 = arith.constant 1.000000e+00 : f32
    %68 = vector.broadcast %cst_32 : f32 to vector<1x96xf32>
    %69 = arith.addf %68, %67 : vector<1x96xf32>
    %70 = arith.divf %68, %69 : vector<1x96xf32>
    %71 = vector.extract_strided_slice %64 {offsets = [0, 96], sizes = [1, 32], strides = [1, 1]} : vector<1x128xf32> to vector<1x32xf32>
    %72 = math.tanh %71 : vector<1x32xf32>
    %73 = vector.extract_strided_slice %70 {offsets = [0, 32], sizes = [1, 32], strides = [1, 1]} : vector<1x96xf32> to vector<1x32xf32>
    %74 = arith.mulf %73, %57 : vector<1x32xf32>
    %75 = vector.extract_strided_slice %70 {offsets = [0, 0], sizes = [1, 32], strides = [1, 1]} : vector<1x96xf32> to vector<1x32xf32>
    %76 = arith.mulf %75, %72 : vector<1x32xf32>
    %77 = arith.addf %74, %76 : vector<1x32xf32>
    %78 = vector.extract_strided_slice %70 {offsets = [0, 64], sizes = [1, 32], strides = [1, 1]} : vector<1x96xf32> to vector<1x32xf32>
    %79 = math.tanh %77 : vector<1x32xf32>
    %80 = arith.mulf %78, %79 : vector<1x32xf32>
    %c1 = arith.constant 1 : index
    %c0_33 = arith.constant 0 : index
    %81 = vector.load %arg6[%c1, %c0_33] : memref<16x32xf32, #tpu.memory_space<vmem>>, vector<1x32xf32>
    tpu.vector_store %arg6[%c1, %c0_33], %80 {strides = array<i32>} : memref<16x32xf32, #tpu.memory_space<vmem>>, vector<1x32xf32>,
    %82 = vector.extract_strided_slice %38 {offsets = [2, 0], sizes = [1, 128], strides = [1, 1]} : vector<16x128xf32> to vector<1x128xf32>
    %cst_34 = arith.constant dense<0.000000e+00> : vector<1x128xf32>
    %83 = tpu.matmul %80, %39, %cst_34 {dimension_numbers = #tpu.dot_dimension_numbers<[1], [0], [0], [1], [0, 0, 1, 1], [], []>} : vector<1x32xf32>, vector<32x128xf32>, vector<1x128xf32> -> vector<1x128xf32>
    %84 = arith.addf %82, %83 : vector<1x128xf32>
    %85 = vector.extract_strided_slice %84 {offsets = [0, 0], sizes = [1, 96], strides = [1, 1]} : vector<1x128xf32> to vector<1x96xf32>
    %86 = arith.negf %85 : vector<1x96xf32>
    %87 = math.exp %86 : vector<1x96xf32>
    %cst_35 = arith.constant 1.000000e+00 : f32
    %88 = vector.broadcast %cst_35 : f32 to vector<1x96xf32>
    %89 = arith.addf %88, %87 : vector<1x96xf32>
    %90 = arith.divf %88, %89 : vector<1x96xf32>
    %91 = vector.extract_strided_slice %84 {offsets = [0, 96], sizes = [1, 32], strides = [1, 1]} : vector<1x128xf32> to vector<1x32xf32>
    %92 = math.tanh %91 : vector<1x32xf32>
    %93 = vector.extract_strided_slice %90 {offsets = [0, 32], sizes = [1, 32], strides = [1, 1]} : vector<1x96xf32> to vector<1x32xf32>
    %94 = arith.mulf %93, %77 : vector<1x32xf32>
    %95 = vector.extract_strided_slice %90 {offsets = [0, 0], sizes = [1, 32], strides = [1, 1]} : vector<1x96xf32> to vector<1x32xf32>
    %96 = arith.mulf %95, %92 : vector<1x32xf32>
    %97 = arith.addf %94, %96 : vector<1x32xf32>
    %98 = vector.extract_strided_slice %90 {offsets = [0, 64], sizes = [1, 32], strides = [1, 1]} : vector<1x96xf32> to vector<1x32xf32>
    %99 = math.tanh %97 : vector<1x32xf32>
    %100 = arith.mulf %98, %99 : vector<1x32xf32>
    %c2 = arith.constant 2 : index
    %c0_36 = arith.constant 0 : index
    %101 = vector.load %arg6[%c2, %c0_36] : memref<16x32xf32, #tpu.memory_space<vmem>>, vector<1x32xf32>
    tpu.vector_store %arg6[%c2, %c0_36], %100 {strides = array<i32>} : memref<16x32xf32, #tpu.memory_space<vmem>>, vector<1x32xf32>,
    %102 = vector.extract_strided_slice %38 {offsets = [3, 0], sizes = [1, 128], strides = [1, 1]} : vector<16x128xf32> to vector<1x128xf32>
    %cst_37 = arith.constant dense<0.000000e+00> : vector<1x128xf32>
    %103 = tpu.matmul %100, %39, %cst_37 {dimension_numbers = #tpu.dot_dimension_numbers<[1], [0], [0], [1], [0, 0, 1, 1], [], []>} : vector<1x32xf32>, vector<32x128xf32>, vector<1x128xf32> -> vector<1x128xf32>
    %104 = arith.addf %102, %103 : vector<1x128xf32>
    %105 = vector.extract_strided_slice %104 {offsets = [0, 0], sizes = [1, 96], strides = [1, 1]} : vector<1x128xf32> to vector<1x96xf32>
    %106 = arith.negf %105 : vector<1x96xf32>
    %107 = math.exp %106 : vector<1x96xf32>
    %cst_38 = arith.constant 1.000000e+00 : f32
    %108 = vector.broadcast %cst_38 : f32 to vector<1x96xf32>
    %109 = arith.addf %108, %107 : vector<1x96xf32>
    %110 = arith.divf %108, %109 : vector<1x96xf32>
    %111 = vector.extract_strided_slice %104 {offsets = [0, 96], sizes = [1, 32], strides = [1, 1]} : vector<1x128xf32> to vector<1x32xf32>
    %112 = math.tanh %111 : vector<1x32xf32>
    %113 = vector.extract_strided_slice %110 {offsets = [0, 32], sizes = [1, 32], strides = [1, 1]} : vector<1x96xf32> to vector<1x32xf32>
    %114 = arith.mulf %113, %97 : vector<1x32xf32>
    %115 = vector.extract_strided_slice %110 {offsets = [0, 0], sizes = [1, 32], strides = [1, 1]} : vector<1x96xf32> to vector<1x32xf32>
    %116 = arith.mulf %115, %112 : vector<1x32xf32>
    %117 = arith.addf %114, %116 : vector<1x32xf32>
    %118 = vector.extract_strided_slice %110 {offsets = [0, 64], sizes = [1, 32], strides = [1, 1]} : vector<1x96xf32> to vector<1x32xf32>
    %119 = math.tanh %117 : vector<1x32xf32>
    %120 = arith.mulf %118, %119 : vector<1x32xf32>
    %c3 = arith.constant 3 : index
    %c0_39 = arith.constant 0 : index
    %121 = vector.load %arg6[%c3, %c0_39] : memref<16x32xf32, #tpu.memory_space<vmem>>, vector<1x32xf32>
    tpu.vector_store %arg6[%c3, %c0_39], %120 {strides = array<i32>} : memref<16x32xf32, #tpu.memory_space<vmem>>, vector<1x32xf32>,
    %122 = vector.extract_strided_slice %38 {offsets = [4, 0], sizes = [1, 128], strides = [1, 1]} : vector<16x128xf32> to vector<1x128xf32>
    %cst_40 = arith.constant dense<0.000000e+00> : vector<1x128xf32>
    %123 = tpu.matmul %120, %39, %cst_40 {dimension_numbers = #tpu.dot_dimension_numbers<[1], [0], [0], [1], [0, 0, 1, 1], [], []>} : vector<1x32xf32>, vector<32x128xf32>, vector<1x128xf32> -> vector<1x128xf32>
    %124 = arith.addf %122, %123 : vector<1x128xf32>
    %125 = vector.extract_strided_slice %124 {offsets = [0, 0], sizes = [1, 96], strides = [1, 1]} : vector<1x128xf32> to vector<1x96xf32>
    %126 = arith.negf %125 : vector<1x96xf32>
    %127 = math.exp %126 : vector<1x96xf32>
    %cst_41 = arith.constant 1.000000e+00 : f32
    %128 = vector.broadcast %cst_41 : f32 to vector<1x96xf32>
    %129 = arith.addf %128, %127 : vector<1x96xf32>
    %130 = arith.divf %128, %129 : vector<1x96xf32>
    %131 = vector.extract_strided_slice %124 {offsets = [0, 96], sizes = [1, 32], strides = [1, 1]} : vector<1x128xf32> to vector<1x32xf32>
    %132 = math.tanh %131 : vector<1x32xf32>
    %133 = vector.extract_strided_slice %130 {offsets = [0, 32], sizes = [1, 32], strides = [1, 1]} : vector<1x96xf32> to vector<1x32xf32>
    %134 = arith.mulf %133, %117 : vector<1x32xf32>
    %135 = vector.extract_strided_slice %130 {offsets = [0, 0], sizes = [1, 32], strides = [1, 1]} : vector<1x96xf32> to vector<1x32xf32>
    %136 = arith.mulf %135, %132 : vector<1x32xf32>
    %137 = arith.addf %134, %136 : vector<1x32xf32>
    %138 = vector.extract_strided_slice %130 {offsets = [0, 64], sizes = [1, 32], strides = [1, 1]} : vector<1x96xf32> to vector<1x32xf32>
    %139 = math.tanh %137 : vector<1x32xf32>
    %140 = arith.mulf %138, %139 : vector<1x32xf32>
    %c4 = arith.constant 4 : index
    %c0_42 = arith.constant 0 : index
    %141 = vector.load %arg6[%c4, %c0_42] : memref<16x32xf32, #tpu.memory_space<vmem>>, vector<1x32xf32>
    tpu.vector_store %arg6[%c4, %c0_42], %140 {strides = array<i32>} : memref<16x32xf32, #tpu.memory_space<vmem>>, vector<1x32xf32>,
    %142 = vector.extract_strided_slice %38 {offsets = [5, 0], sizes = [1, 128], strides = [1, 1]} : vector<16x128xf32> to vector<1x128xf32>
    %cst_43 = arith.constant dense<0.000000e+00> : vector<1x128xf32>
    %143 = tpu.matmul %140, %39, %cst_43 {dimension_numbers = #tpu.dot_dimension_numbers<[1], [0], [0], [1], [0, 0, 1, 1], [], []>} : vector<1x32xf32>, vector<32x128xf32>, vector<1x128xf32> -> vector<1x128xf32>
    %144 = arith.addf %142, %143 : vector<1x128xf32>
    %145 = vector.extract_strided_slice %144 {offsets = [0, 0], sizes = [1, 96], strides = [1, 1]} : vector<1x128xf32> to vector<1x96xf32>
    %146 = arith.negf %145 : vector<1x96xf32>
    %147 = math.exp %146 : vector<1x96xf32>
    %cst_44 = arith.constant 1.000000e+00 : f32
    %148 = vector.broadcast %cst_44 : f32 to vector<1x96xf32>
    %149 = arith.addf %148, %147 : vector<1x96xf32>
    %150 = arith.divf %148, %149 : vector<1x96xf32>
    %151 = vector.extract_strided_slice %144 {offsets = [0, 96], sizes = [1, 32], strides = [1, 1]} : vector<1x128xf32> to vector<1x32xf32>
    %152 = math.tanh %151 : vector<1x32xf32>
    %153 = vector.extract_strided_slice %150 {offsets = [0, 32], sizes = [1, 32], strides = [1, 1]} : vector<1x96xf32> to vector<1x32xf32>
    %154 = arith.mulf %153, %137 : vector<1x32xf32>
    %155 = vector.extract_strided_slice %150 {offsets = [0, 0], sizes = [1, 32], strides = [1, 1]} : vector<1x96xf32> to vector<1x32xf32>
    %156 = arith.mulf %155, %152 : vector<1x32xf32>
    %157 = arith.addf %154, %156 : vector<1x32xf32>
    %158 = vector.extract_strided_slice %150 {offsets = [0, 64], sizes = [1, 32], strides = [1, 1]} : vector<1x96xf32> to vector<1x32xf32>
    %159 = math.tanh %157 : vector<1x32xf32>
    %160 = arith.mulf %158, %159 : vector<1x32xf32>
    %c5 = arith.constant 5 : index
    %c0_45 = arith.constant 0 : index
    %161 = vector.load %arg6[%c5, %c0_45] : memref<16x32xf32, #tpu.memory_space<vmem>>, vector<1x32xf32>
    tpu.vector_store %arg6[%c5, %c0_45], %160 {strides = array<i32>} : memref<16x32xf32, #tpu.memory_space<vmem>>, vector<1x32xf32>,
    %162 = vector.extract_strided_slice %38 {offsets = [6, 0], sizes = [1, 128], strides = [1, 1]} : vector<16x128xf32> to vector<1x128xf32>
    %cst_46 = arith.constant dense<0.000000e+00> : vector<1x128xf32>
    %163 = tpu.matmul %160, %39, %cst_46 {dimension_numbers = #tpu.dot_dimension_numbers<[1], [0], [0], [1], [0, 0, 1, 1], [], []>} : vector<1x32xf32>, vector<32x128xf32>, vector<1x128xf32> -> vector<1x128xf32>
    %164 = arith.addf %162, %163 : vector<1x128xf32>
    %165 = vector.extract_strided_slice %164 {offsets = [0, 0], sizes = [1, 96], strides = [1, 1]} : vector<1x128xf32> to vector<1x96xf32>
    %166 = arith.negf %165 : vector<1x96xf32>
    %167 = math.exp %166 : vector<1x96xf32>
    %cst_47 = arith.constant 1.000000e+00 : f32
    %168 = vector.broadcast %cst_47 : f32 to vector<1x96xf32>
    %169 = arith.addf %168, %167 : vector<1x96xf32>
    %170 = arith.divf %168, %169 : vector<1x96xf32>
    %171 = vector.extract_strided_slice %164 {offsets = [0, 96], sizes = [1, 32], strides = [1, 1]} : vector<1x128xf32> to vector<1x32xf32>
    %172 = math.tanh %171 : vector<1x32xf32>
    %173 = vector.extract_strided_slice %170 {offsets = [0, 32], sizes = [1, 32], strides = [1, 1]} : vector<1x96xf32> to vector<1x32xf32>
    %174 = arith.mulf %173, %157 : vector<1x32xf32>
    %175 = vector.extract_strided_slice %170 {offsets = [0, 0], sizes = [1, 32], strides = [1, 1]} : vector<1x96xf32> to vector<1x32xf32>
    %176 = arith.mulf %175, %172 : vector<1x32xf32>
    %177 = arith.addf %174, %176 : vector<1x32xf32>
    %178 = vector.extract_strided_slice %170 {offsets = [0, 64], sizes = [1, 32], strides = [1, 1]} : vector<1x96xf32> to vector<1x32xf32>
    %179 = math.tanh %177 : vector<1x32xf32>
    %180 = arith.mulf %178, %179 : vector<1x32xf32>
    %c6 = arith.constant 6 : index
    %c0_48 = arith.constant 0 : index
    %181 = vector.load %arg6[%c6, %c0_48] : memref<16x32xf32, #tpu.memory_space<vmem>>, vector<1x32xf32>
    tpu.vector_store %arg6[%c6, %c0_48], %180 {strides = array<i32>} : memref<16x32xf32, #tpu.memory_space<vmem>>, vector<1x32xf32>,
    %182 = vector.extract_strided_slice %38 {offsets = [7, 0], sizes = [1, 128], strides = [1, 1]} : vector<16x128xf32> to vector<1x128xf32>
    %cst_49 = arith.constant dense<0.000000e+00> : vector<1x128xf32>
    %183 = tpu.matmul %180, %39, %cst_49 {dimension_numbers = #tpu.dot_dimension_numbers<[1], [0], [0], [1], [0, 0, 1, 1], [], []>} : vector<1x32xf32>, vector<32x128xf32>, vector<1x128xf32> -> vector<1x128xf32>
    %184 = arith.addf %182, %183 : vector<1x128xf32>
    %185 = vector.extract_strided_slice %184 {offsets = [0, 0], sizes = [1, 96], strides = [1, 1]} : vector<1x128xf32> to vector<1x96xf32>
    %186 = arith.negf %185 : vector<1x96xf32>
    %187 = math.exp %186 : vector<1x96xf32>
    %cst_50 = arith.constant 1.000000e+00 : f32
    %188 = vector.broadcast %cst_50 : f32 to vector<1x96xf32>
    %189 = arith.addf %188, %187 : vector<1x96xf32>
    %190 = arith.divf %188, %189 : vector<1x96xf32>
    %191 = vector.extract_strided_slice %184 {offsets = [0, 96], sizes = [1, 32], strides = [1, 1]} : vector<1x128xf32> to vector<1x32xf32>
    %192 = math.tanh %191 : vector<1x32xf32>
    %193 = vector.extract_strided_slice %190 {offsets = [0, 32], sizes = [1, 32], strides = [1, 1]} : vector<1x96xf32> to vector<1x32xf32>
    %194 = arith.mulf %193, %177 : vector<1x32xf32>
    %195 = vector.extract_strided_slice %190 {offsets = [0, 0], sizes = [1, 32], strides = [1, 1]} : vector<1x96xf32> to vector<1x32xf32>
    %196 = arith.mulf %195, %192 : vector<1x32xf32>
    %197 = arith.addf %194, %196 : vector<1x32xf32>
    %198 = vector.extract_strided_slice %190 {offsets = [0, 64], sizes = [1, 32], strides = [1, 1]} : vector<1x96xf32> to vector<1x32xf32>
    %199 = math.tanh %197 : vector<1x32xf32>
    %200 = arith.mulf %198, %199 : vector<1x32xf32>
    %c7 = arith.constant 7 : index
    %c0_51 = arith.constant 0 : index
    %201 = vector.load %arg6[%c7, %c0_51] : memref<16x32xf32, #tpu.memory_space<vmem>>, vector<1x32xf32>
    tpu.vector_store %arg6[%c7, %c0_51], %200 {strides = array<i32>} : memref<16x32xf32, #tpu.memory_space<vmem>>, vector<1x32xf32>,
    %202 = vector.extract_strided_slice %38 {offsets = [8, 0], sizes = [1, 128], strides = [1, 1]} : vector<16x128xf32> to vector<1x128xf32>
    %cst_52 = arith.constant dense<0.000000e+00> : vector<1x128xf32>
    %203 = tpu.matmul %200, %39, %cst_52 {dimension_numbers = #tpu.dot_dimension_numbers<[1], [0], [0], [1], [0, 0, 1, 1], [], []>} : vector<1x32xf32>, vector<32x128xf32>, vector<1x128xf32> -> vector<1x128xf32>
    %204 = arith.addf %202, %203 : vector<1x128xf32>
    %205 = vector.extract_strided_slice %204 {offsets = [0, 0], sizes = [1, 96], strides = [1, 1]} : vector<1x128xf32> to vector<1x96xf32>
    %206 = arith.negf %205 : vector<1x96xf32>
    %207 = math.exp %206 : vector<1x96xf32>
    %cst_53 = arith.constant 1.000000e+00 : f32
    %208 = vector.broadcast %cst_53 : f32 to vector<1x96xf32>
    %209 = arith.addf %208, %207 : vector<1x96xf32>
    %210 = arith.divf %208, %209 : vector<1x96xf32>
    %211 = vector.extract_strided_slice %204 {offsets = [0, 96], sizes = [1, 32], strides = [1, 1]} : vector<1x128xf32> to vector<1x32xf32>
    %212 = math.tanh %211 : vector<1x32xf32>
    %213 = vector.extract_strided_slice %210 {offsets = [0, 32], sizes = [1, 32], strides = [1, 1]} : vector<1x96xf32> to vector<1x32xf32>
    %214 = arith.mulf %213, %197 : vector<1x32xf32>
    %215 = vector.extract_strided_slice %210 {offsets = [0, 0], sizes = [1, 32], strides = [1, 1]} : vector<1x96xf32> to vector<1x32xf32>
    %216 = arith.mulf %215, %212 : vector<1x32xf32>
    %217 = arith.addf %214, %216 : vector<1x32xf32>
    %218 = vector.extract_strided_slice %210 {offsets = [0, 64], sizes = [1, 32], strides = [1, 1]} : vector<1x96xf32> to vector<1x32xf32>
    %219 = math.tanh %217 : vector<1x32xf32>
    %220 = arith.mulf %218, %219 : vector<1x32xf32>
    %c8 = arith.constant 8 : index
    %c0_54 = arith.constant 0 : index
    %221 = vector.load %arg6[%c8, %c0_54] : memref<16x32xf32, #tpu.memory_space<vmem>>, vector<1x32xf32>
    tpu.vector_store %arg6[%c8, %c0_54], %220 {strides = array<i32>} : memref<16x32xf32, #tpu.memory_space<vmem>>, vector<1x32xf32>,
    %222 = vector.extract_strided_slice %38 {offsets = [9, 0], sizes = [1, 128], strides = [1, 1]} : vector<16x128xf32> to vector<1x128xf32>
    %cst_55 = arith.constant dense<0.000000e+00> : vector<1x128xf32>
    %223 = tpu.matmul %220, %39, %cst_55 {dimension_numbers = #tpu.dot_dimension_numbers<[1], [0], [0], [1], [0, 0, 1, 1], [], []>} : vector<1x32xf32>, vector<32x128xf32>, vector<1x128xf32> -> vector<1x128xf32>
    %224 = arith.addf %222, %223 : vector<1x128xf32>
    %225 = vector.extract_strided_slice %224 {offsets = [0, 0], sizes = [1, 96], strides = [1, 1]} : vector<1x128xf32> to vector<1x96xf32>
    %226 = arith.negf %225 : vector<1x96xf32>
    %227 = math.exp %226 : vector<1x96xf32>
    %cst_56 = arith.constant 1.000000e+00 : f32
    %228 = vector.broadcast %cst_56 : f32 to vector<1x96xf32>
    %229 = arith.addf %228, %227 : vector<1x96xf32>
    %230 = arith.divf %228, %229 : vector<1x96xf32>
    %231 = vector.extract_strided_slice %224 {offsets = [0, 96], sizes = [1, 32], strides = [1, 1]} : vector<1x128xf32> to vector<1x32xf32>
    %232 = math.tanh %231 : vector<1x32xf32>
    %233 = vector.extract_strided_slice %230 {offsets = [0, 32], sizes = [1, 32], strides = [1, 1]} : vector<1x96xf32> to vector<1x32xf32>
    %234 = arith.mulf %233, %217 : vector<1x32xf32>
    %235 = vector.extract_strided_slice %230 {offsets = [0, 0], sizes = [1, 32], strides = [1, 1]} : vector<1x96xf32> to vector<1x32xf32>
    %236 = arith.mulf %235, %232 : vector<1x32xf32>
    %237 = arith.addf %234, %236 : vector<1x32xf32>
    %238 = vector.extract_strided_slice %230 {offsets = [0, 64], sizes = [1, 32], strides = [1, 1]} : vector<1x96xf32> to vector<1x32xf32>
    %239 = math.tanh %237 : vector<1x32xf32>
    %240 = arith.mulf %238, %239 : vector<1x32xf32>
    %c9 = arith.constant 9 : index
    %c0_57 = arith.constant 0 : index
    %241 = vector.load %arg6[%c9, %c0_57] : memref<16x32xf32, #tpu.memory_space<vmem>>, vector<1x32xf32>
    tpu.vector_store %arg6[%c9, %c0_57], %240 {strides = array<i32>} : memref<16x32xf32, #tpu.memory_space<vmem>>, vector<1x32xf32>,
    %242 = vector.extract_strided_slice %38 {offsets = [10, 0], sizes = [1, 128], strides = [1, 1]} : vector<16x128xf32> to vector<1x128xf32>
    %cst_58 = arith.constant dense<0.000000e+00> : vector<1x128xf32>
    %243 = tpu.matmul %240, %39, %cst_58 {dimension_numbers = #tpu.dot_dimension_numbers<[1], [0], [0], [1], [0, 0, 1, 1], [], []>} : vector<1x32xf32>, vector<32x128xf32>, vector<1x128xf32> -> vector<1x128xf32>
    %244 = arith.addf %242, %243 : vector<1x128xf32>
    %245 = vector.extract_strided_slice %244 {offsets = [0, 0], sizes = [1, 96], strides = [1, 1]} : vector<1x128xf32> to vector<1x96xf32>
    %246 = arith.negf %245 : vector<1x96xf32>
    %247 = math.exp %246 : vector<1x96xf32>
    %cst_59 = arith.constant 1.000000e+00 : f32
    %248 = vector.broadcast %cst_59 : f32 to vector<1x96xf32>
    %249 = arith.addf %248, %247 : vector<1x96xf32>
    %250 = arith.divf %248, %249 : vector<1x96xf32>
    %251 = vector.extract_strided_slice %244 {offsets = [0, 96], sizes = [1, 32], strides = [1, 1]} : vector<1x128xf32> to vector<1x32xf32>
    %252 = math.tanh %251 : vector<1x32xf32>
    %253 = vector.extract_strided_slice %250 {offsets = [0, 32], sizes = [1, 32], strides = [1, 1]} : vector<1x96xf32> to vector<1x32xf32>
    %254 = arith.mulf %253, %237 : vector<1x32xf32>
    %255 = vector.extract_strided_slice %250 {offsets = [0, 0], sizes = [1, 32], strides = [1, 1]} : vector<1x96xf32> to vector<1x32xf32>
    %256 = arith.mulf %255, %252 : vector<1x32xf32>
    %257 = arith.addf %254, %256 : vector<1x32xf32>
    %258 = vector.extract_strided_slice %250 {offsets = [0, 64], sizes = [1, 32], strides = [1, 1]} : vector<1x96xf32> to vector<1x32xf32>
    %259 = math.tanh %257 : vector<1x32xf32>
    %260 = arith.mulf %258, %259 : vector<1x32xf32>
    %c10 = arith.constant 10 : index
    %c0_60 = arith.constant 0 : index
    %261 = vector.load %arg6[%c10, %c0_60] : memref<16x32xf32, #tpu.memory_space<vmem>>, vector<1x32xf32>
    tpu.vector_store %arg6[%c10, %c0_60], %260 {strides = array<i32>} : memref<16x32xf32, #tpu.memory_space<vmem>>, vector<1x32xf32>,
    %262 = vector.extract_strided_slice %38 {offsets = [11, 0], sizes = [1, 128], strides = [1, 1]} : vector<16x128xf32> to vector<1x128xf32>
    %cst_61 = arith.constant dense<0.000000e+00> : vector<1x128xf32>
    %263 = tpu.matmul %260, %39, %cst_61 {dimension_numbers = #tpu.dot_dimension_numbers<[1], [0], [0], [1], [0, 0, 1, 1], [], []>} : vector<1x32xf32>, vector<32x128xf32>, vector<1x128xf32> -> vector<1x128xf32>
    %264 = arith.addf %262, %263 : vector<1x128xf32>
    %265 = vector.extract_strided_slice %264 {offsets = [0, 0], sizes = [1, 96], strides = [1, 1]} : vector<1x128xf32> to vector<1x96xf32>
    %266 = arith.negf %265 : vector<1x96xf32>
    %267 = math.exp %266 : vector<1x96xf32>
    %cst_62 = arith.constant 1.000000e+00 : f32
    %268 = vector.broadcast %cst_62 : f32 to vector<1x96xf32>
    %269 = arith.addf %268, %267 : vector<1x96xf32>
    %270 = arith.divf %268, %269 : vector<1x96xf32>
    %271 = vector.extract_strided_slice %264 {offsets = [0, 96], sizes = [1, 32], strides = [1, 1]} : vector<1x128xf32> to vector<1x32xf32>
    %272 = math.tanh %271 : vector<1x32xf32>
    %273 = vector.extract_strided_slice %270 {offsets = [0, 32], sizes = [1, 32], strides = [1, 1]} : vector<1x96xf32> to vector<1x32xf32>
    %274 = arith.mulf %273, %257 : vector<1x32xf32>
    %275 = vector.extract_strided_slice %270 {offsets = [0, 0], sizes = [1, 32], strides = [1, 1]} : vector<1x96xf32> to vector<1x32xf32>
    %276 = arith.mulf %275, %272 : vector<1x32xf32>
    %277 = arith.addf %274, %276 : vector<1x32xf32>
    %278 = vector.extract_strided_slice %270 {offsets = [0, 64], sizes = [1, 32], strides = [1, 1]} : vector<1x96xf32> to vector<1x32xf32>
    %279 = math.tanh %277 : vector<1x32xf32>
    %280 = arith.mulf %278, %279 : vector<1x32xf32>
    %c11 = arith.constant 11 : index
    %c0_63 = arith.constant 0 : index
    %281 = vector.load %arg6[%c11, %c0_63] : memref<16x32xf32, #tpu.memory_space<vmem>>, vector<1x32xf32>
    tpu.vector_store %arg6[%c11, %c0_63], %280 {strides = array<i32>} : memref<16x32xf32, #tpu.memory_space<vmem>>, vector<1x32xf32>,
    %282 = vector.extract_strided_slice %38 {offsets = [12, 0], sizes = [1, 128], strides = [1, 1]} : vector<16x128xf32> to vector<1x128xf32>
    %cst_64 = arith.constant dense<0.000000e+00> : vector<1x128xf32>
    %283 = tpu.matmul %280, %39, %cst_64 {dimension_numbers = #tpu.dot_dimension_numbers<[1], [0], [0], [1], [0, 0, 1, 1], [], []>} : vector<1x32xf32>, vector<32x128xf32>, vector<1x128xf32> -> vector<1x128xf32>
    %284 = arith.addf %282, %283 : vector<1x128xf32>
    %285 = vector.extract_strided_slice %284 {offsets = [0, 0], sizes = [1, 96], strides = [1, 1]} : vector<1x128xf32> to vector<1x96xf32>
    %286 = arith.negf %285 : vector<1x96xf32>
    %287 = math.exp %286 : vector<1x96xf32>
    %cst_65 = arith.constant 1.000000e+00 : f32
    %288 = vector.broadcast %cst_65 : f32 to vector<1x96xf32>
    %289 = arith.addf %288, %287 : vector<1x96xf32>
    %290 = arith.divf %288, %289 : vector<1x96xf32>
    %291 = vector.extract_strided_slice %284 {offsets = [0, 96], sizes = [1, 32], strides = [1, 1]} : vector<1x128xf32> to vector<1x32xf32>
    %292 = math.tanh %291 : vector<1x32xf32>
    %293 = vector.extract_strided_slice %290 {offsets = [0, 32], sizes = [1, 32], strides = [1, 1]} : vector<1x96xf32> to vector<1x32xf32>
    %294 = arith.mulf %293, %277 : vector<1x32xf32>
    %295 = vector.extract_strided_slice %290 {offsets = [0, 0], sizes = [1, 32], strides = [1, 1]} : vector<1x96xf32> to vector<1x32xf32>
    %296 = arith.mulf %295, %292 : vector<1x32xf32>
    %297 = arith.addf %294, %296 : vector<1x32xf32>
    %298 = vector.extract_strided_slice %290 {offsets = [0, 64], sizes = [1, 32], strides = [1, 1]} : vector<1x96xf32> to vector<1x32xf32>
    %299 = math.tanh %297 : vector<1x32xf32>
    %300 = arith.mulf %298, %299 : vector<1x32xf32>
    %c12 = arith.constant 12 : index
    %c0_66 = arith.constant 0 : index
    %301 = vector.load %arg6[%c12, %c0_66] : memref<16x32xf32, #tpu.memory_space<vmem>>, vector<1x32xf32>
    tpu.vector_store %arg6[%c12, %c0_66], %300 {strides = array<i32>} : memref<16x32xf32, #tpu.memory_space<vmem>>, vector<1x32xf32>,
    %302 = vector.extract_strided_slice %38 {offsets = [13, 0], sizes = [1, 128], strides = [1, 1]} : vector<16x128xf32> to vector<1x128xf32>
    %cst_67 = arith.constant dense<0.000000e+00> : vector<1x128xf32>
    %303 = tpu.matmul %300, %39, %cst_67 {dimension_numbers = #tpu.dot_dimension_numbers<[1], [0], [0], [1], [0, 0, 1, 1], [], []>} : vector<1x32xf32>, vector<32x128xf32>, vector<1x128xf32> -> vector<1x128xf32>
    %304 = arith.addf %302, %303 : vector<1x128xf32>
    %305 = vector.extract_strided_slice %304 {offsets = [0, 0], sizes = [1, 96], strides = [1, 1]} : vector<1x128xf32> to vector<1x96xf32>
    %306 = arith.negf %305 : vector<1x96xf32>
    %307 = math.exp %306 : vector<1x96xf32>
    %cst_68 = arith.constant 1.000000e+00 : f32
    %308 = vector.broadcast %cst_68 : f32 to vector<1x96xf32>
    %309 = arith.addf %308, %307 : vector<1x96xf32>
    %310 = arith.divf %308, %309 : vector<1x96xf32>
    %311 = vector.extract_strided_slice %304 {offsets = [0, 96], sizes = [1, 32], strides = [1, 1]} : vector<1x128xf32> to vector<1x32xf32>
    %312 = math.tanh %311 : vector<1x32xf32>
    %313 = vector.extract_strided_slice %310 {offsets = [0, 32], sizes = [1, 32], strides = [1, 1]} : vector<1x96xf32> to vector<1x32xf32>
    %314 = arith.mulf %313, %297 : vector<1x32xf32>
    %315 = vector.extract_strided_slice %310 {offsets = [0, 0], sizes = [1, 32], strides = [1, 1]} : vector<1x96xf32> to vector<1x32xf32>
    %316 = arith.mulf %315, %312 : vector<1x32xf32>
    %317 = arith.addf %314, %316 : vector<1x32xf32>
    %318 = vector.extract_strided_slice %310 {offsets = [0, 64], sizes = [1, 32], strides = [1, 1]} : vector<1x96xf32> to vector<1x32xf32>
    %319 = math.tanh %317 : vector<1x32xf32>
    %320 = arith.mulf %318, %319 : vector<1x32xf32>
    %c13 = arith.constant 13 : index
    %c0_69 = arith.constant 0 : index
    %321 = vector.load %arg6[%c13, %c0_69] : memref<16x32xf32, #tpu.memory_space<vmem>>, vector<1x32xf32>
    tpu.vector_store %arg6[%c13, %c0_69], %320 {strides = array<i32>} : memref<16x32xf32, #tpu.memory_space<vmem>>, vector<1x32xf32>,
    %322 = vector.extract_strided_slice %38 {offsets = [14, 0], sizes = [1, 128], strides = [1, 1]} : vector<16x128xf32> to vector<1x128xf32>
    %cst_70 = arith.constant dense<0.000000e+00> : vector<1x128xf32>
    %323 = tpu.matmul %320, %39, %cst_70 {dimension_numbers = #tpu.dot_dimension_numbers<[1], [0], [0], [1], [0, 0, 1, 1], [], []>} : vector<1x32xf32>, vector<32x128xf32>, vector<1x128xf32> -> vector<1x128xf32>
    %324 = arith.addf %322, %323 : vector<1x128xf32>
    %325 = vector.extract_strided_slice %324 {offsets = [0, 0], sizes = [1, 96], strides = [1, 1]} : vector<1x128xf32> to vector<1x96xf32>
    %326 = arith.negf %325 : vector<1x96xf32>
    %327 = math.exp %326 : vector<1x96xf32>
    %cst_71 = arith.constant 1.000000e+00 : f32
    %328 = vector.broadcast %cst_71 : f32 to vector<1x96xf32>
    %329 = arith.addf %328, %327 : vector<1x96xf32>
    %330 = arith.divf %328, %329 : vector<1x96xf32>
    %331 = vector.extract_strided_slice %324 {offsets = [0, 96], sizes = [1, 32], strides = [1, 1]} : vector<1x128xf32> to vector<1x32xf32>
    %332 = math.tanh %331 : vector<1x32xf32>
    %333 = vector.extract_strided_slice %330 {offsets = [0, 32], sizes = [1, 32], strides = [1, 1]} : vector<1x96xf32> to vector<1x32xf32>
    %334 = arith.mulf %333, %317 : vector<1x32xf32>
    %335 = vector.extract_strided_slice %330 {offsets = [0, 0], sizes = [1, 32], strides = [1, 1]} : vector<1x96xf32> to vector<1x32xf32>
    %336 = arith.mulf %335, %332 : vector<1x32xf32>
    %337 = arith.addf %334, %336 : vector<1x32xf32>
    %338 = vector.extract_strided_slice %330 {offsets = [0, 64], sizes = [1, 32], strides = [1, 1]} : vector<1x96xf32> to vector<1x32xf32>
    %339 = math.tanh %337 : vector<1x32xf32>
    %340 = arith.mulf %338, %339 : vector<1x32xf32>
    %c14 = arith.constant 14 : index
    %c0_72 = arith.constant 0 : index
    %341 = vector.load %arg6[%c14, %c0_72] : memref<16x32xf32, #tpu.memory_space<vmem>>, vector<1x32xf32>
    tpu.vector_store %arg6[%c14, %c0_72], %340 {strides = array<i32>} : memref<16x32xf32, #tpu.memory_space<vmem>>, vector<1x32xf32>,
    %342 = vector.extract_strided_slice %38 {offsets = [15, 0], sizes = [1, 128], strides = [1, 1]} : vector<16x128xf32> to vector<1x128xf32>
    %cst_73 = arith.constant dense<0.000000e+00> : vector<1x128xf32>
    %343 = tpu.matmul %340, %39, %cst_73 {dimension_numbers = #tpu.dot_dimension_numbers<[1], [0], [0], [1], [0, 0, 1, 1], [], []>} : vector<1x32xf32>, vector<32x128xf32>, vector<1x128xf32> -> vector<1x128xf32>
    %344 = arith.addf %342, %343 : vector<1x128xf32>
    %345 = vector.extract_strided_slice %344 {offsets = [0, 0], sizes = [1, 96], strides = [1, 1]} : vector<1x128xf32> to vector<1x96xf32>
    %346 = arith.negf %345 : vector<1x96xf32>
    %347 = math.exp %346 : vector<1x96xf32>
    %cst_74 = arith.constant 1.000000e+00 : f32
    %348 = vector.broadcast %cst_74 : f32 to vector<1x96xf32>
    %349 = arith.addf %348, %347 : vector<1x96xf32>
    %350 = arith.divf %348, %349 : vector<1x96xf32>
    %351 = vector.extract_strided_slice %344 {offsets = [0, 96], sizes = [1, 32], strides = [1, 1]} : vector<1x128xf32> to vector<1x32xf32>
    %352 = math.tanh %351 : vector<1x32xf32>
    %353 = vector.extract_strided_slice %350 {offsets = [0, 32], sizes = [1, 32], strides = [1, 1]} : vector<1x96xf32> to vector<1x32xf32>
    %354 = arith.mulf %353, %337 : vector<1x32xf32>
    %355 = vector.extract_strided_slice %350 {offsets = [0, 0], sizes = [1, 32], strides = [1, 1]} : vector<1x96xf32> to vector<1x32xf32>
    %356 = arith.mulf %355, %352 : vector<1x32xf32>
    %357 = arith.addf %354, %356 : vector<1x32xf32>
    %358 = vector.extract_strided_slice %350 {offsets = [0, 64], sizes = [1, 32], strides = [1, 1]} : vector<1x96xf32> to vector<1x32xf32>
    %359 = math.tanh %357 : vector<1x32xf32>
    %360 = arith.mulf %358, %359 : vector<1x32xf32>
    %c15 = arith.constant 15 : index
    %c0_75 = arith.constant 0 : index
    %361 = vector.load %arg6[%c15, %c0_75] : memref<16x32xf32, #tpu.memory_space<vmem>>, vector<1x32xf32>
    tpu.vector_store %arg6[%c15, %c0_75], %360 {strides = array<i32>} : memref<16x32xf32, #tpu.memory_space<vmem>>, vector<1x32xf32>,
    %c0_76 = arith.constant 0 : index
    %c0_77 = arith.constant 0 : index
    %362 = vector.load %arg6[%c0_76, %c0_77] : memref<16x32xf32, #tpu.memory_space<vmem>>, vector<16x32xf32>
    %c72 = arith.constant 72 : index
    %c0_78 = arith.constant 0 : index
    %363 = vector.load %arg3[%c72, %c0_78] : memref<264x128xf32, #tpu.memory_space<vmem>>, vector<32x2xf32>
    %cst_79 = arith.constant dense<0.000000e+00> : vector<16x2xf32>
    %364 = tpu.matmul %362, %363, %cst_79 {dimension_numbers = #tpu.dot_dimension_numbers<[1], [0], [0], [1], [0, 0, 1, 1], [], []>} : vector<16x32xf32>, vector<32x2xf32>, vector<16x2xf32> -> vector<16x2xf32>
    %c104 = arith.constant 104 : index
    %c0_80 = arith.constant 0 : index
    %365 = vector.load %arg3[%c104, %c0_80] : memref<264x128xf32, #tpu.memory_space<vmem>>, vector<16x2xf32>
    %cst_81 = arith.constant dense<0.000000e+00> : vector<16x2xf32>
    %366 = tpu.matmul %0, %365, %cst_81 {dimension_numbers = #tpu.dot_dimension_numbers<[1], [0], [0], [1], [0, 0, 1, 1], [], []>} : vector<16x16xf32>, vector<16x2xf32>, vector<16x2xf32> -> vector<16x2xf32>
    %367 = arith.addf %364, %366 : vector<16x2xf32>
    %c120 = arith.constant 120 : index
    %c0_82 = arith.constant 0 : index
    %368 = vector.load %arg3[%c120, %c0_82] : memref<264x128xf32, #tpu.memory_space<vmem>>, vector<1x2xf32>
    %369 = vector.broadcast %368 : vector<1x2xf32> to vector<16x2xf32>
    %370 = arith.addf %367, %369 : vector<16x2xf32>
    %371 = vector.extract_strided_slice %362 {offsets = [0, 0], sizes = [16, 16], strides = [1, 1]} : vector<16x32xf32> to vector<16x16xf32>
    %372 = vector.extract_strided_slice %370 {offsets = [0, 0], sizes = [16, 1], strides = [1, 1]} : vector<16x2xf32> to vector<16x1xf32>
    %373 = vector.broadcast %372 : vector<16x1xf32> to vector<16x16xf32>
    %374 = arith.mulf %371, %373 : vector<16x16xf32>
    %375 = vector.extract_strided_slice %362 {offsets = [0, 16], sizes = [16, 16], strides = [1, 1]} : vector<16x32xf32> to vector<16x16xf32>
    %376 = vector.extract_strided_slice %370 {offsets = [0, 1], sizes = [16, 1], strides = [1, 1]} : vector<16x2xf32> to vector<16x1xf32>
    %377 = vector.broadcast %376 : vector<16x1xf32> to vector<16x16xf32>
    %378 = arith.mulf %375, %377 : vector<16x16xf32>
    %c128 = arith.constant 128 : index
    %c0_83 = arith.constant 0 : index
    %379 = vector.load %arg3[%c128, %c0_83] : memref<264x128xf32, #tpu.memory_space<vmem>>, vector<16x16xf32>
    %cst_84 = arith.constant dense<0.000000e+00> : vector<16x16xf32>
    %380 = tpu.matmul %374, %379, %cst_84 {dimension_numbers = #tpu.dot_dimension_numbers<[1], [0], [0], [1], [0, 0, 1, 1], [], []>} : vector<16x16xf32>, vector<16x16xf32>, vector<16x16xf32> -> vector<16x16xf32>
    %c144 = arith.constant 144 : index
    %c0_85 = arith.constant 0 : index
    %381 = vector.load %arg3[%c144, %c0_85] : memref<264x128xf32, #tpu.memory_space<vmem>>, vector<16x16xf32>
    %cst_86 = arith.constant dense<0.000000e+00> : vector<16x16xf32>
    %382 = tpu.matmul %378, %381, %cst_86 {dimension_numbers = #tpu.dot_dimension_numbers<[1], [0], [0], [1], [0, 0, 1, 1], [], []>} : vector<16x16xf32>, vector<16x16xf32>, vector<16x16xf32> -> vector<16x16xf32>
    %383 = arith.addf %380, %382 : vector<16x16xf32>
    %c160 = arith.constant 160 : index
    %c0_87 = arith.constant 0 : index
    %384 = vector.load %arg3[%c160, %c0_87] : memref<264x128xf32, #tpu.memory_space<vmem>>, vector<1x16xf32>
    %385 = vector.broadcast %384 : vector<1x16xf32> to vector<16x16xf32>
    %386 = arith.addf %383, %385 : vector<16x16xf32>
    %387 = arith.mulf %386, %386 : vector<16x16xf32>
    %cst_88 = arith.constant dense<0.000000e+00> : vector<16xf32>
    %388 = vector.multi_reduction <add>, %387, %cst_88 [1] : vector<16x16xf32> to vector<16xf32>
    %389 = vector.shape_cast %388 : vector<16xf32> to vector<16x1xf32>
    %390 = math.rsqrt %389 : vector<16x1xf32>
    %cst_89 = arith.constant 1.000000e+00 : f32
    %391 = vector.broadcast %cst_89 : f32 to vector<16x1xf32>
    %392 = arith.minimumf %390, %391 : vector<16x1xf32>
    %cst_90 = arith.constant 5.000000e-01 : f32
    %393 = vector.broadcast %cst_90 : f32 to vector<16x1xf32>
    %394 = arith.mulf %393, %392 : vector<16x1xf32>
    %395 = vector.broadcast %394 : vector<16x1xf32> to vector<16x16xf32>
    %396 = arith.mulf %386, %395 : vector<16x16xf32>
    %397 = arith.mulf %0, %0 : vector<16x16xf32>
    %cst_91 = arith.constant dense<0.000000e+00> : vector<16xf32>
    %398 = vector.multi_reduction <add>, %397, %cst_91 [1] : vector<16x16xf32> to vector<16xf32>
    %399 = vector.shape_cast %398 : vector<16xf32> to vector<16x1xf32>
    %400 = math.sqrt %399 : vector<16x1xf32>
    %401 = vector.broadcast %400 : vector<16x1xf32> to vector<16x16xf32>
    %402 = arith.mulf %396, %401 : vector<16x16xf32>
    %403 = arith.addf %0, %402 : vector<16x16xf32>
    %c248 = arith.constant 248 : index
    %c0_92 = arith.constant 0 : index
    %404 = vector.load %arg3[%c248, %c0_92] : memref<264x128xf32, #tpu.memory_space<vmem>>, vector<16x16xf32>
    %cst_93 = arith.constant dense<0.000000e+00> : vector<16x16xf32>
    %405 = tpu.matmul %404, %403, %cst_93 {dimension_numbers = #tpu.dot_dimension_numbers<[1], [0], [0], [1], [0, 0, 1, 1], [], []>} : vector<16x16xf32>, vector<16x16xf32>, vector<16x16xf32> -> vector<16x16xf32>
    %c0_94 = arith.constant 0 : index
    %c0_95 = arith.constant 0 : index
    %406 = vector.load %arg4[%c0_94, %c0_95] : memref<96x256xf32, #tpu.memory_space<vmem>>, vector<16x256xf32>
    %cst_96 = arith.constant dense<0.000000e+00> : vector<16x256xf32>
    %407 = tpu.matmul %405, %406, %cst_96 {dimension_numbers = #tpu.dot_dimension_numbers<[1], [0], [0], [1], [0, 0, 1, 1], [], []>} : vector<16x16xf32>, vector<16x256xf32>, vector<16x256xf32> -> vector<16x256xf32>
    %c80 = arith.constant 80 : index
    %c0_97 = arith.constant 0 : index
    %408 = vector.load %arg4[%c80, %c0_97] : memref<96x256xf32, #tpu.memory_space<vmem>>, vector<1x256xf32>
    %409 = vector.broadcast %408 : vector<1x256xf32> to vector<16x256xf32>
    %410 = arith.addf %407, %409 : vector<16x256xf32>
    %c16_98 = arith.constant 16 : index
    %c0_99 = arith.constant 0 : index
    %411 = vector.load %arg4[%c16_98, %c0_99] : memref<96x256xf32, #tpu.memory_space<vmem>>, vector<64x256xf32>
    %c88 = arith.constant 88 : index
    %c0_100 = arith.constant 0 : index
    %412 = vector.load %arg4[%c88, %c0_100] : memref<96x256xf32, #tpu.memory_space<vmem>>, vector<1x256xf32>
    %cst_101 = arith.constant 0.000000e+00 : f32
    %413 = vector.broadcast %cst_101 : f32 to vector<2x64xf32>
    %cst_102 = arith.constant 0.000000e+00 : f32
    %414 = vector.broadcast %cst_102 : f32 to vector<2x64xf32>
    %cst_103 = arith.constant dense<0.000000e+00> : vector<2x256xf32>
    %415 = tpu.matmul %413, %411, %cst_103 {dimension_numbers = #tpu.dot_dimension_numbers<[1], [0], [0], [1], [0, 0, 1, 1], [], []>} : vector<2x64xf32>, vector<64x256xf32>, vector<2x256xf32> -> vector<2x256xf32>
    %416 = vector.extract_strided_slice %410 {offsets = [0, 0], sizes = [2, 256], strides = [1, 1]} : vector<16x256xf32> to vector<2x256xf32>
    %417 = arith.addf %415, %416 : vector<2x256xf32>
    %418 = vector.extract_strided_slice %417 {offsets = [0, 0], sizes = [2, 192], strides = [1, 1]} : vector<2x256xf32> to vector<2x192xf32>
    %419 = arith.negf %418 : vector<2x192xf32>
    %420 = math.exp %419 : vector<2x192xf32>
    %cst_104 = arith.constant 1.000000e+00 : f32
    %421 = vector.broadcast %cst_104 : f32 to vector<2x192xf32>
    %422 = arith.addf %421, %420 : vector<2x192xf32>
    %423 = arith.divf %421, %422 : vector<2x192xf32>
    %424 = vector.extract_strided_slice %417 {offsets = [0, 192], sizes = [2, 64], strides = [1, 1]} : vector<2x256xf32> to vector<2x64xf32>
    %425 = math.tanh %424 : vector<2x64xf32>
    %426 = vector.extract_strided_slice %423 {offsets = [0, 64], sizes = [2, 64], strides = [1, 1]} : vector<2x192xf32> to vector<2x64xf32>
    %427 = arith.mulf %426, %414 : vector<2x64xf32>
    %428 = vector.extract_strided_slice %423 {offsets = [0, 0], sizes = [2, 64], strides = [1, 1]} : vector<2x192xf32> to vector<2x64xf32>
    %429 = arith.mulf %428, %425 : vector<2x64xf32>
    %430 = arith.addf %427, %429 : vector<2x64xf32>
    %431 = vector.extract_strided_slice %423 {offsets = [0, 128], sizes = [2, 64], strides = [1, 1]} : vector<2x192xf32> to vector<2x64xf32>
    %432 = math.tanh %430 : vector<2x64xf32>
    %433 = arith.mulf %431, %432 : vector<2x64xf32>
    %cst_105 = arith.constant dense<0.000000e+00> : vector<2x256xf32>
    %434 = tpu.matmul %433, %411, %cst_105 {dimension_numbers = #tpu.dot_dimension_numbers<[1], [0], [0], [1], [0, 0, 1, 1], [], []>} : vector<2x64xf32>, vector<64x256xf32>, vector<2x256xf32> -> vector<2x256xf32>
    %435 = vector.extract_strided_slice %410 {offsets = [2, 0], sizes = [2, 256], strides = [1, 1]} : vector<16x256xf32> to vector<2x256xf32>
    %436 = arith.addf %434, %435 : vector<2x256xf32>
    %437 = vector.broadcast %412 : vector<1x256xf32> to vector<2x256xf32>
    %438 = arith.addf %436, %437 : vector<2x256xf32>
    %439 = vector.extract_strided_slice %438 {offsets = [0, 0], sizes = [2, 192], strides = [1, 1]} : vector<2x256xf32> to vector<2x192xf32>
    %440 = arith.negf %439 : vector<2x192xf32>
    %441 = math.exp %440 : vector<2x192xf32>
    %cst_106 = arith.constant 1.000000e+00 : f32
    %442 = vector.broadcast %cst_106 : f32 to vector<2x192xf32>
    %443 = arith.addf %442, %441 : vector<2x192xf32>
    %444 = arith.divf %442, %443 : vector<2x192xf32>
    %445 = vector.extract_strided_slice %438 {offsets = [0, 192], sizes = [2, 64], strides = [1, 1]} : vector<2x256xf32> to vector<2x64xf32>
    %446 = math.tanh %445 : vector<2x64xf32>
    %447 = vector.extract_strided_slice %444 {offsets = [0, 64], sizes = [2, 64], strides = [1, 1]} : vector<2x192xf32> to vector<2x64xf32>
    %448 = arith.mulf %447, %430 : vector<2x64xf32>
    %449 = vector.extract_strided_slice %444 {offsets = [0, 0], sizes = [2, 64], strides = [1, 1]} : vector<2x192xf32> to vector<2x64xf32>
    %450 = arith.mulf %449, %446 : vector<2x64xf32>
    %451 = arith.addf %448, %450 : vector<2x64xf32>
    %452 = vector.extract_strided_slice %444 {offsets = [0, 128], sizes = [2, 64], strides = [1, 1]} : vector<2x192xf32> to vector<2x64xf32>
    %453 = math.tanh %451 : vector<2x64xf32>
    %454 = arith.mulf %452, %453 : vector<2x64xf32>
    %cst_107 = arith.constant dense<0.000000e+00> : vector<2x256xf32>
    %455 = tpu.matmul %454, %411, %cst_107 {dimension_numbers = #tpu.dot_dimension_numbers<[1], [0], [0], [1], [0, 0, 1, 1], [], []>} : vector<2x64xf32>, vector<64x256xf32>, vector<2x256xf32> -> vector<2x256xf32>
    %456 = vector.extract_strided_slice %410 {offsets = [4, 0], sizes = [2, 256], strides = [1, 1]} : vector<16x256xf32> to vector<2x256xf32>
    %457 = arith.addf %455, %456 : vector<2x256xf32>
    %458 = vector.broadcast %412 : vector<1x256xf32> to vector<2x256xf32>
    %459 = arith.addf %457, %458 : vector<2x256xf32>
    %460 = vector.extract_strided_slice %459 {offsets = [0, 0], sizes = [2, 192], strides = [1, 1]} : vector<2x256xf32> to vector<2x192xf32>
    %461 = arith.negf %460 : vector<2x192xf32>
    %462 = math.exp %461 : vector<2x192xf32>
    %cst_108 = arith.constant 1.000000e+00 : f32
    %463 = vector.broadcast %cst_108 : f32 to vector<2x192xf32>
    %464 = arith.addf %463, %462 : vector<2x192xf32>
    %465 = arith.divf %463, %464 : vector<2x192xf32>
    %466 = vector.extract_strided_slice %459 {offsets = [0, 192], sizes = [2, 64], strides = [1, 1]} : vector<2x256xf32> to vector<2x64xf32>
    %467 = math.tanh %466 : vector<2x64xf32>
    %468 = vector.extract_strided_slice %465 {offsets = [0, 64], sizes = [2, 64], strides = [1, 1]} : vector<2x192xf32> to vector<2x64xf32>
    %469 = arith.mulf %468, %451 : vector<2x64xf32>
    %470 = vector.extract_strided_slice %465 {offsets = [0, 0], sizes = [2, 64], strides = [1, 1]} : vector<2x192xf32> to vector<2x64xf32>
    %471 = arith.mulf %470, %467 : vector<2x64xf32>
    %472 = arith.addf %469, %471 : vector<2x64xf32>
    %473 = vector.extract_strided_slice %465 {offsets = [0, 128], sizes = [2, 64], strides = [1, 1]} : vector<2x192xf32> to vector<2x64xf32>
    %474 = math.tanh %472 : vector<2x64xf32>
    %475 = arith.mulf %473, %474 : vector<2x64xf32>
    %cst_109 = arith.constant dense<0.000000e+00> : vector<2x256xf32>
    %476 = tpu.matmul %475, %411, %cst_109 {dimension_numbers = #tpu.dot_dimension_numbers<[1], [0], [0], [1], [0, 0, 1, 1], [], []>} : vector<2x64xf32>, vector<64x256xf32>, vector<2x256xf32> -> vector<2x256xf32>
    %477 = vector.extract_strided_slice %410 {offsets = [6, 0], sizes = [2, 256], strides = [1, 1]} : vector<16x256xf32> to vector<2x256xf32>
    %478 = arith.addf %476, %477 : vector<2x256xf32>
    %479 = vector.broadcast %412 : vector<1x256xf32> to vector<2x256xf32>
    %480 = arith.addf %478, %479 : vector<2x256xf32>
    %481 = vector.extract_strided_slice %480 {offsets = [0, 0], sizes = [2, 192], strides = [1, 1]} : vector<2x256xf32> to vector<2x192xf32>
    %482 = arith.negf %481 : vector<2x192xf32>
    %483 = math.exp %482 : vector<2x192xf32>
    %cst_110 = arith.constant 1.000000e+00 : f32
    %484 = vector.broadcast %cst_110 : f32 to vector<2x192xf32>
    %485 = arith.addf %484, %483 : vector<2x192xf32>
    %486 = arith.divf %484, %485 : vector<2x192xf32>
    %487 = vector.extract_strided_slice %480 {offsets = [0, 192], sizes = [2, 64], strides = [1, 1]} : vector<2x256xf32> to vector<2x64xf32>
    %488 = math.tanh %487 : vector<2x64xf32>
    %489 = vector.extract_strided_slice %486 {offsets = [0, 64], sizes = [2, 64], strides = [1, 1]} : vector<2x192xf32> to vector<2x64xf32>
    %490 = arith.mulf %489, %472 : vector<2x64xf32>
    %491 = vector.extract_strided_slice %486 {offsets = [0, 0], sizes = [2, 64], strides = [1, 1]} : vector<2x192xf32> to vector<2x64xf32>
    %492 = arith.mulf %491, %488 : vector<2x64xf32>
    %493 = arith.addf %490, %492 : vector<2x64xf32>
    %494 = vector.extract_strided_slice %486 {offsets = [0, 128], sizes = [2, 64], strides = [1, 1]} : vector<2x192xf32> to vector<2x64xf32>
    %495 = math.tanh %493 : vector<2x64xf32>
    %496 = arith.mulf %494, %495 : vector<2x64xf32>
    %cst_111 = arith.constant dense<0.000000e+00> : vector<2x256xf32>
    %497 = tpu.matmul %496, %411, %cst_111 {dimension_numbers = #tpu.dot_dimension_numbers<[1], [0], [0], [1], [0, 0, 1, 1], [], []>} : vector<2x64xf32>, vector<64x256xf32>, vector<2x256xf32> -> vector<2x256xf32>
    %498 = vector.extract_strided_slice %410 {offsets = [8, 0], sizes = [2, 256], strides = [1, 1]} : vector<16x256xf32> to vector<2x256xf32>
    %499 = arith.addf %497, %498 : vector<2x256xf32>
    %500 = vector.broadcast %412 : vector<1x256xf32> to vector<2x256xf32>
    %501 = arith.addf %499, %500 : vector<2x256xf32>
    %502 = vector.extract_strided_slice %501 {offsets = [0, 0], sizes = [2, 192], strides = [1, 1]} : vector<2x256xf32> to vector<2x192xf32>
    %503 = arith.negf %502 : vector<2x192xf32>
    %504 = math.exp %503 : vector<2x192xf32>
    %cst_112 = arith.constant 1.000000e+00 : f32
    %505 = vector.broadcast %cst_112 : f32 to vector<2x192xf32>
    %506 = arith.addf %505, %504 : vector<2x192xf32>
    %507 = arith.divf %505, %506 : vector<2x192xf32>
    %508 = vector.extract_strided_slice %501 {offsets = [0, 192], sizes = [2, 64], strides = [1, 1]} : vector<2x256xf32> to vector<2x64xf32>
    %509 = math.tanh %508 : vector<2x64xf32>
    %510 = vector.extract_strided_slice %507 {offsets = [0, 64], sizes = [2, 64], strides = [1, 1]} : vector<2x192xf32> to vector<2x64xf32>
    %511 = arith.mulf %510, %493 : vector<2x64xf32>
    %512 = vector.extract_strided_slice %507 {offsets = [0, 0], sizes = [2, 64], strides = [1, 1]} : vector<2x192xf32> to vector<2x64xf32>
    %513 = arith.mulf %512, %509 : vector<2x64xf32>
    %514 = arith.addf %511, %513 : vector<2x64xf32>
    %515 = vector.extract_strided_slice %507 {offsets = [0, 128], sizes = [2, 64], strides = [1, 1]} : vector<2x192xf32> to vector<2x64xf32>
    %516 = math.tanh %514 : vector<2x64xf32>
    %517 = arith.mulf %515, %516 : vector<2x64xf32>
    %cst_113 = arith.constant dense<0.000000e+00> : vector<2x256xf32>
    %518 = tpu.matmul %517, %411, %cst_113 {dimension_numbers = #tpu.dot_dimension_numbers<[1], [0], [0], [1], [0, 0, 1, 1], [], []>} : vector<2x64xf32>, vector<64x256xf32>, vector<2x256xf32> -> vector<2x256xf32>
    %519 = vector.extract_strided_slice %410 {offsets = [10, 0], sizes = [2, 256], strides = [1, 1]} : vector<16x256xf32> to vector<2x256xf32>
    %520 = arith.addf %518, %519 : vector<2x256xf32>
    %521 = vector.broadcast %412 : vector<1x256xf32> to vector<2x256xf32>
    %522 = arith.addf %520, %521 : vector<2x256xf32>
    %523 = vector.extract_strided_slice %522 {offsets = [0, 0], sizes = [2, 192], strides = [1, 1]} : vector<2x256xf32> to vector<2x192xf32>
    %524 = arith.negf %523 : vector<2x192xf32>
    %525 = math.exp %524 : vector<2x192xf32>
    %cst_114 = arith.constant 1.000000e+00 : f32
    %526 = vector.broadcast %cst_114 : f32 to vector<2x192xf32>
    %527 = arith.addf %526, %525 : vector<2x192xf32>
    %528 = arith.divf %526, %527 : vector<2x192xf32>
    %529 = vector.extract_strided_slice %522 {offsets = [0, 192], sizes = [2, 64], strides = [1, 1]} : vector<2x256xf32> to vector<2x64xf32>
    %530 = math.tanh %529 : vector<2x64xf32>
    %531 = vector.extract_strided_slice %528 {offsets = [0, 64], sizes = [2, 64], strides = [1, 1]} : vector<2x192xf32> to vector<2x64xf32>
    %532 = arith.mulf %531, %514 : vector<2x64xf32>
    %533 = vector.extract_strided_slice %528 {offsets = [0, 0], sizes = [2, 64], strides = [1, 1]} : vector<2x192xf32> to vector<2x64xf32>
    %534 = arith.mulf %533, %530 : vector<2x64xf32>
    %535 = arith.addf %532, %534 : vector<2x64xf32>
    %536 = vector.extract_strided_slice %528 {offsets = [0, 128], sizes = [2, 64], strides = [1, 1]} : vector<2x192xf32> to vector<2x64xf32>
    %537 = math.tanh %535 : vector<2x64xf32>
    %538 = arith.mulf %536, %537 : vector<2x64xf32>
    %cst_115 = arith.constant dense<0.000000e+00> : vector<2x256xf32>
    %539 = tpu.matmul %538, %411, %cst_115 {dimension_numbers = #tpu.dot_dimension_numbers<[1], [0], [0], [1], [0, 0, 1, 1], [], []>} : vector<2x64xf32>, vector<64x256xf32>, vector<2x256xf32> -> vector<2x256xf32>
    %540 = vector.extract_strided_slice %410 {offsets = [12, 0], sizes = [2, 256], strides = [1, 1]} : vector<16x256xf32> to vector<2x256xf32>
    %541 = arith.addf %539, %540 : vector<2x256xf32>
    %542 = vector.broadcast %412 : vector<1x256xf32> to vector<2x256xf32>
    %543 = arith.addf %541, %542 : vector<2x256xf32>
    %544 = vector.extract_strided_slice %543 {offsets = [0, 0], sizes = [2, 192], strides = [1, 1]} : vector<2x256xf32> to vector<2x192xf32>
    %545 = arith.negf %544 : vector<2x192xf32>
    %546 = math.exp %545 : vector<2x192xf32>
    %cst_116 = arith.constant 1.000000e+00 : f32
    %547 = vector.broadcast %cst_116 : f32 to vector<2x192xf32>
    %548 = arith.addf %547, %546 : vector<2x192xf32>
    %549 = arith.divf %547, %548 : vector<2x192xf32>
    %550 = vector.extract_strided_slice %543 {offsets = [0, 192], sizes = [2, 64], strides = [1, 1]} : vector<2x256xf32> to vector<2x64xf32>
    %551 = math.tanh %550 : vector<2x64xf32>
    %552 = vector.extract_strided_slice %549 {offsets = [0, 64], sizes = [2, 64], strides = [1, 1]} : vector<2x192xf32> to vector<2x64xf32>
    %553 = arith.mulf %552, %535 : vector<2x64xf32>
    %554 = vector.extract_strided_slice %549 {offsets = [0, 0], sizes = [2, 64], strides = [1, 1]} : vector<2x192xf32> to vector<2x64xf32>
    %555 = arith.mulf %554, %551 : vector<2x64xf32>
    %556 = arith.addf %553, %555 : vector<2x64xf32>
    %557 = vector.extract_strided_slice %549 {offsets = [0, 128], sizes = [2, 64], strides = [1, 1]} : vector<2x192xf32> to vector<2x64xf32>
    %558 = math.tanh %556 : vector<2x64xf32>
    %559 = arith.mulf %557, %558 : vector<2x64xf32>
    %cst_117 = arith.constant dense<0.000000e+00> : vector<2x256xf32>
    %560 = tpu.matmul %559, %411, %cst_117 {dimension_numbers = #tpu.dot_dimension_numbers<[1], [0], [0], [1], [0, 0, 1, 1], [], []>} : vector<2x64xf32>, vector<64x256xf32>, vector<2x256xf32> -> vector<2x256xf32>
    %561 = vector.extract_strided_slice %410 {offsets = [14, 0], sizes = [2, 256], strides = [1, 1]} : vector<16x256xf32> to vector<2x256xf32>
    %562 = arith.addf %560, %561 : vector<2x256xf32>
    %563 = vector.broadcast %412 : vector<1x256xf32> to vector<2x256xf32>
    %564 = arith.addf %562, %563 : vector<2x256xf32>
    %565 = vector.extract_strided_slice %564 {offsets = [0, 0], sizes = [2, 192], strides = [1, 1]} : vector<2x256xf32> to vector<2x192xf32>
    %566 = arith.negf %565 : vector<2x192xf32>
    %567 = math.exp %566 : vector<2x192xf32>
    %cst_118 = arith.constant 1.000000e+00 : f32
    %568 = vector.broadcast %cst_118 : f32 to vector<2x192xf32>
    %569 = arith.addf %568, %567 : vector<2x192xf32>
    %570 = arith.divf %568, %569 : vector<2x192xf32>
    %571 = vector.extract_strided_slice %564 {offsets = [0, 192], sizes = [2, 64], strides = [1, 1]} : vector<2x256xf32> to vector<2x64xf32>
    %572 = math.tanh %571 : vector<2x64xf32>
    %573 = vector.extract_strided_slice %570 {offsets = [0, 64], sizes = [2, 64], strides = [1, 1]} : vector<2x192xf32> to vector<2x64xf32>
    %574 = arith.mulf %573, %556 : vector<2x64xf32>
    %575 = vector.extract_strided_slice %570 {offsets = [0, 0], sizes = [2, 64], strides = [1, 1]} : vector<2x192xf32> to vector<2x64xf32>
    %576 = arith.mulf %575, %572 : vector<2x64xf32>
    %577 = arith.addf %574, %576 : vector<2x64xf32>
    %578 = vector.extract_strided_slice %570 {offsets = [0, 128], sizes = [2, 64], strides = [1, 1]} : vector<2x192xf32> to vector<2x64xf32>
    %579 = math.tanh %577 : vector<2x64xf32>
    %580 = arith.mulf %578, %579 : vector<2x64xf32>
    %cst_119 = arith.constant dense<0.000000e+00> : vector<2x256xf32>
    %581 = tpu.matmul %580, %411, %cst_119 {dimension_numbers = #tpu.dot_dimension_numbers<[1], [0], [0], [1], [0, 0, 1, 1], [], []>} : vector<2x64xf32>, vector<64x256xf32>, vector<2x256xf32> -> vector<2x256xf32>
    %582 = vector.broadcast %412 : vector<1x256xf32> to vector<2x256xf32>
    %583 = arith.addf %581, %582 : vector<2x256xf32>
    %584 = vector.extract_strided_slice %583 {offsets = [0, 0], sizes = [2, 192], strides = [1, 1]} : vector<2x256xf32> to vector<2x192xf32>
    %585 = arith.negf %584 : vector<2x192xf32>
    %586 = math.exp %585 : vector<2x192xf32>
    %cst_120 = arith.constant 1.000000e+00 : f32
    %587 = vector.broadcast %cst_120 : f32 to vector<2x192xf32>
    %588 = arith.addf %587, %586 : vector<2x192xf32>
    %589 = arith.divf %587, %588 : vector<2x192xf32>
    %590 = vector.extract_strided_slice %583 {offsets = [0, 192], sizes = [2, 64], strides = [1, 1]} : vector<2x256xf32> to vector<2x64xf32>
    %591 = math.tanh %590 : vector<2x64xf32>
    %592 = vector.extract_strided_slice %589 {offsets = [0, 64], sizes = [2, 64], strides = [1, 1]} : vector<2x192xf32> to vector<2x64xf32>
    %593 = arith.mulf %592, %577 : vector<2x64xf32>
    %594 = vector.extract_strided_slice %589 {offsets = [0, 0], sizes = [2, 64], strides = [1, 1]} : vector<2x192xf32> to vector<2x64xf32>
    %595 = arith.mulf %594, %591 : vector<2x64xf32>
    %596 = arith.addf %593, %595 : vector<2x64xf32>
    %597 = vector.extract_strided_slice %589 {offsets = [0, 128], sizes = [2, 64], strides = [1, 1]} : vector<2x192xf32> to vector<2x64xf32>
    %598 = math.tanh %596 : vector<2x64xf32>
    %599 = arith.mulf %597, %598 : vector<2x64xf32>
    %600 = vector.extract_strided_slice %599 {offsets = [0, 32], sizes = [2, 32], strides = [1, 1]} : vector<2x64xf32> to vector<2x32xf32>
    %c168 = arith.constant 168 : index
    %c0_121 = arith.constant 0 : index
    %601 = vector.load %arg3[%c168, %c0_121] : memref<264x128xf32, #tpu.memory_space<vmem>>, vector<32x1xf32>
    %cst_122 = arith.constant dense<0.000000e+00> : vector<2x1xf32>
    %602 = tpu.matmul %600, %601, %cst_122 {dimension_numbers = #tpu.dot_dimension_numbers<[1], [0], [0], [1], [0, 0, 1, 1], [], []>} : vector<2x32xf32>, vector<32x1xf32>, vector<2x1xf32> -> vector<2x1xf32>
    %c200 = arith.constant 200 : index
    %c0_123 = arith.constant 0 : index
    %603 = vector.load %arg3[%c200, %c0_123] : memref<264x128xf32, #tpu.memory_space<vmem>>, vector<1x1xf32>
    %604 = vector.broadcast %603 : vector<1x1xf32> to vector<2x1xf32>
    %605 = arith.addf %602, %604 : vector<2x1xf32>
    %c0_124 = arith.constant 0 : index
    %c0_125 = arith.constant 0 : index
    %606 = vector.load %arg5[%c0_124, %c0_125] : memref<2x1xf32, #tpu.memory_space<vmem>>, vector<2x1xf32>
    tpu.vector_store %arg5[%c0_124, %c0_125], %605 {strides = array<i32>} : memref<2x1xf32, #tpu.memory_space<vmem>>, vector<2x1xf32>,
    return
  }
}

</mosaic_0001>

<llo_original>
// kernel: raven_forward.1
$region0: #{raven_forward.1}
  #allocation0 [shape = 'u32[]', space=smem, size = 0x4, offset = 0x4, fixed_abs, tag = 'smem constant byte address 0x4 - core index']
  #allocation1 [shape = 'u32[72,128]{1,0:T(1,128)}', space=vmem, size = 0x9000, scoped, tag = 'internal scratch']
  #allocation2 [shape = 'f32[16,32]{1,0:T(8,128)}', space=vmem, size = 0x2000, scoped, tag = 'scratch operand']
  %s0 = inlined_call_operand.vmem [shape: f32[16,16], index: 0, kind: input, shape index: {}]
  %s1 = inlined_call_operand.vmem [shape: f32[16,10], index: 1, kind: input, shape index: {}]
  %s2 = inlined_call_operand.vmem [shape: f32[16,12], index: 2, kind: input, shape index: {}]
  %s3 = inlined_call_operand.vmem [shape: f32[264,128], index: 3, kind: input, shape index: {}]
  %s4 = inlined_call_operand.vmem [shape: f32[96,256], index: 4, kind: input, shape index: {}]
  %s5 = inlined_call_operand.vmem [shape: f32[2,1], index: 5, kind: output, shape index: {}]
  %s6 = sld [smem:[#allocation0]]
  $region30: #{raven_forward.1} parent=0
    _
  %s8 = ssub.s32 1, %s6
  %s9 = scalar_select 0, %s8, %s6
  // Predicated region
  $region2: #{raven_forward.1} parent=0 // pred_check
    _
  $region3: #{raven_forward.1} parent=0 // pred_check_branch
    %11 = sbr.rel (0) target = $region5
  $region4: #{raven_forward.1} parent=0 // pred_region
    _
  $region5: #{raven_forward.1} parent=0 // pred_fallthru
    _
  // Predicated region
  $region6: #{raven_forward.1} parent=0 // pred_check
    _
  $region7: #{raven_forward.1} parent=0 // pred_check_branch
    %13 = sbr.rel (0) target = $region9
  $region8: #{raven_forward.1} parent=0 // pred_region
    _
  $region9: #{raven_forward.1} parent=0 // pred_fallthru
    _
  // Predicated region
  $region10: #{raven_forward.1} parent=0 // pred_check
    _
  $region11: #{raven_forward.1} parent=0 // pred_check_branch
    %15 = sbr.rel (0) target = $region13
  $region12: #{raven_forward.1} parent=0 // pred_region
    _
  $region13: #{raven_forward.1} parent=0 // pred_fallthru
    _
  // Predicated region
  $region14: #{raven_forward.1} parent=0 // pred_check
    _
  $region15: #{raven_forward.1} parent=0 // pred_check_branch
    %17 = sbr.rel (0) target = $region17
  $region16: #{raven_forward.1} parent=0 // pred_region
    _
  $region17: #{raven_forward.1} parent=0 // pred_fallthru
    _
  // Predicated region
  $region18: #{raven_forward.1} parent=0 // pred_check
    _
  $region19: #{raven_forward.1} parent=0 // pred_check_branch
    %19 = sbr.rel (0) target = $region21
  $region20: #{raven_forward.1} parent=0 // pred_region
    _
  $region21: #{raven_forward.1} parent=0 // pred_fallthru
    _
  %v20 = vld [vmem:[%s0] sm:$0xff]
  %v21 = vld [vmem:[%s0 + $0x8] sm:$0xff]
  %v22 = vld [vmem:[%s1] sm:$0xff]
  %v23 = vld [vmem:[%s1 + $0x8] sm:$0xff]
  %v24 = vld [vmem:[%s2] sm:$0xff]
  %v25 = vld [vmem:[%s2 + $0x8] sm:$0xff]
  %v26 = vld [vmem:[%s3 + $0xe0] sm:$0xff]
  %v27 = vld [vmem:[%s3 + $0xe8] sm:$0xff]
  %v28 = vld [vmem:[%s3 + $0xf0] sm:$0xff]
  %vm29 = vcmask 97280
  %v30 = vsel %vm29, %v24, 0.0
  %31 = vadd.xlane.f32.xlu0 %v30
  %v32 = vpop.xlane.xlu0 %31
  %v33 = vsel %vm29, %v25, 0.0
  %34 = vadd.xlane.f32.xlu0 %v33
  %v35 = vpop.xlane.xlu0 %34
  %vm36 = vcmask 130048
  %v38 = vsel %vm36, %v26, 0
  %40 = vmatpush.msra.mxu0 0.0
  %41 = vmatpush.msra.mxu0 0.0
  %42 = vmatpush.msra.mxu0 0.0
  %43 = vmatpush.msra.mxu0 0.0
  %44 = vmatpush.msra.mxu0 0.0
  %45 = vmatpush.msra.mxu0 0.0
  %46 = vmatpush.msra.mxu0 0.0
  %47 = vmatpush.msra.mxu0 0.0
  %48 = vmatpush.msra.mxu0 0.0
  %49 = vmatpush.msra.mxu0 0.0
  %50 = vmatpush.msra.mxu0 0.0
  %51 = vmatpush.msra.mxu0 0.0
  %52 = vmatpush.msra.mxu0 0.0
  %53 = vmatpush.msra.mxu0 0.0
  %54 = vmatpush.msra.mxu0 %v35
  %55 = vmatpush.msra.mxu0 %v32
  %56 = vmatmul.f32.gmra.mxu0 %v38
  %v57 = vpop.f32.mrf.mxu0
  %v58 = vadd.f32 0.0, %v57
  %59 = vdwg.mxu0
  %v60 = vmul.f32 %v58, 0.041666668
  %vm61 = vcmask 64512
  %v63 = vsel %vm61, %v27, 0
  %v66 = vsel %vm61, %v28, 0
  %68 = vmatpush.msra.mxu0 0.0
  %69 = vmatpush.msra.mxu0 0.0
  %70 = vmatpush.msra.mxu0 0.0
  %71 = vmatpush.msra.mxu0 0.0
  %72 = vmatpush.msra.mxu0 0.0
  %73 = vmatpush.msra.mxu0 0.0
  %74 = vmatpush.msra.mxu0 0.0
  %75 = vmatpush.msra.mxu0 0.0
  %76 = vmatpush.msra.mxu0 0.0
  %77 = vmatpush.msra.mxu0 0.0
  %78 = vmatpush.msra.mxu0 0.0
  %79 = vmatpush.msra.mxu0 0.0
  %80 = vmatpush.msra.mxu0 0.0
  %81 = vmatpush.msra.mxu0 0.0
  %82 = vmatpush.msra.mxu0 0.0
  %83 = vmatpush.msra.mxu0 %v60
  %84 = vmatmul.f32.gmra.mxu0 %v63
  %v85 = vpop.f32.mrf.mxu0
  %v86 = vadd.f32 0.0, %v85
  %87 = vmatmul.f32.gmra.mxu0 %v66
  %v88 = vpop.f32.mrf.mxu0
  %v89 = vadd.f32 0.0, %v88
  %90 = vdwg.mxu0
  %92 = vset.pattern.permute.xlu0 0
  %93 = vperm.xlu0 %92, %v86
  %v94 = vpop.permute.xlu0 %93
  %97 = vset.pattern.permute.xlu0 0
  %98 = vperm.xlu0 %97, %v89
  %v99 = vpop.permute.xlu0 %98
  %v101 = vsub.f32 %v24, %v94
  %v102 = vsub.f32 %v25, %v99
  %v103 = vmul.f32 %v101, %v101
  %v104 = vmul.f32 %v102, %v102
  %v105 = vsel %vm29, %v103, 0.0
  %106 = vadd.xlane.f32.xlu0 %v105
  %v107 = vpop.xlane.xlu0 %106
  %v108 = vsel %vm29, %v104, 0.0
  %109 = vadd.xlane.f32.xlu0 %v108
  %v110 = vpop.xlane.xlu0 %109
  %111 = vmatpush.msra.mxu0 0.0
  %112 = vmatpush.msra.mxu0 0.0
  %113 = vmatpush.msra.mxu0 0.0
  %114 = vmatpush.msra.mxu0 0.0
  %115 = vmatpush.msra.mxu0 0.0
  %116 = vmatpush.msra.mxu0 0.0
  %117 = vmatpush.msra.mxu0 0.0
  %118 = vmatpush.msra.mxu0 0.0
  %119 = vmatpush.msra.mxu0 0.0
  %120 = vmatpush.msra.mxu0 0.0
  %121 = vmatpush.msra.mxu0 0.0
  %122 = vmatpush.msra.mxu0 0.0
  %123 = vmatpush.msra.mxu0 0.0
  %124 = vmatpush.msra.mxu0 0.0
  %125 = vmatpush.msra.mxu0 %v110
  %126 = vmatpush.msra.mxu0 %v107
  %127 = vmatmul.f32.gmra.mxu0 %v38
  %v128 = vpop.f32.mrf.mxu0
  %v129 = vadd.f32 0.0, %v128
  %130 = vdwg.mxu0
  %v131 = vmul.f32 %v129, 0.041666668
  %v132 = vld [vmem:[%s3 + $0xd0] sm:$0xff]
  %v133 = vadd.f32 %v131, 1e-05
  %v134 = vrsqrt.pop %v133
  %v135 = vmul.f32 %v134, %v133
  %v136 = vmul.f32 %v135, %v134
  %v137 = vmul.f32 0.5, %v136
  %v138 = vsub.f32 1.5, %v137
  %v139 = vmul.f32 %v134, %v138
  %vm140 = vweird.f32 %v133
  %vm141 = vweird.f32 %v134
  %vm142 = vmor %vm140, %vm141
  %v143 = vsel %vm142, %v134, %v139
  %v144 = vmul.f32 %v132, %v143
  %145 = vmatpush.msra.mxu0 0.0
  %146 = vmatpush.msra.mxu0 0.0
  %147 = vmatpush.msra.mxu0 0.0
  %148 = vmatpush.msra.mxu0 0.0
  %149 = vmatpush.msra.mxu0 0.0
  %150 = vmatpush.msra.mxu0 0.0
  %151 = vmatpush.msra.mxu0 0.0
  %152 = vmatpush.msra.mxu0 0.0
  %153 = vmatpush.msra.mxu0 0.0
  %154 = vmatpush.msra.mxu0 0.0
  %155 = vmatpush.msra.mxu0 0.0
  %156 = vmatpush.msra.mxu0 0.0
  %157 = vmatpush.msra.mxu0 0.0
  %158 = vmatpush.msra.mxu0 0.0
  %159 = vmatpush.msra.mxu0 0.0
  %160 = vmatpush.msra.mxu0 %v144
  %161 = vmatmul.f32.gmra.mxu0 %v63
  %v162 = vpop.f32.mrf.mxu0
  %v163 = vadd.f32 0.0, %v162
  %164 = vmatmul.f32.gmra.mxu0 %v66
  %v165 = vpop.f32.mrf.mxu0
  %v166 = vadd.f32 0.0, %v165
  %167 = vdwg.mxu0
  %169 = vset.pattern.permute.xlu0 0
  %170 = vperm.xlu0 %169, %v163
  %v171 = vpop.permute.xlu0 %170
  %174 = vset.pattern.permute.xlu0 0
  %175 = vperm.xlu0 %174, %v166
  %v176 = vpop.permute.xlu0 %175
  %v178 = vmul.f32 %v101, %v171
  %v179 = vmul.f32 %v102, %v176
  %v180 = vld [vmem:[%s3 + $0xd8] sm:$0xff]
  %181 = vmatpush.msra.mxu0 0.0
  %182 = vmatpush.msra.mxu0 0.0
  %183 = vmatpush.msra.mxu0 0.0
  %184 = vmatpush.msra.mxu0 0.0
  %185 = vmatpush.msra.mxu0 0.0
  %186 = vmatpush.msra.mxu0 0.0
  %187 = vmatpush.msra.mxu0 0.0
  %188 = vmatpush.msra.mxu0 0.0
  %189 = vmatpush.msra.mxu0 0.0
  %190 = vmatpush.msra.mxu0 0.0
  %191 = vmatpush.msra.mxu0 0.0
  %192 = vmatpush.msra.mxu0 0.0
  %193 = vmatpush.msra.mxu0 0.0
  %194 = vmatpush.msra.mxu0 0.0
  %195 = vmatpush.msra.mxu0 0.0
  %196 = vmatpush.msra.mxu0 %v180
  %197 = vmatmul.f32.gmra.mxu0 %v63
  %v198 = vpop.f32.mrf.mxu0
  %v199 = vadd.f32 0.0, %v198
  %200 = vmatmul.f32.gmra.mxu0 %v66
  %v201 = vpop.f32.mrf.mxu0
  %v202 = vadd.f32 0.0, %v201
  %203 = vdwg.mxu0
  %205 = vset.pattern.permute.xlu0 0
  %206 = vperm.xlu0 %205, %v199
  %v207 = vpop.permute.xlu0 %206
  %210 = vset.pattern.permute.xlu0 0
  %211 = vperm.xlu0 %210, %v202
  %v212 = vpop.permute.xlu0 %211
  %v214 = vadd.f32 %v178, %v207
  %v215 = vadd.f32 %v179, %v212
  %v216 = vld [vmem:[%s3] sm:$0xff]
  %v217 = vld [vmem:[%s3 + $0x8] sm:$0xf]
  %v218 = vld [vmem:[%s3 + $0x10] sm:$0xff]
  %v219 = vld [vmem:[%s3 + $0x18] sm:$0x3]
  %vm220 = vcmask 80896
  %v222 = vsel %vm220, %v22, 0
  %v225 = vsel %vm220, %v23, 0
  %vm227 = vcmask 1041408
  %v229 = vsel %vm227, %v219, 0
  %231 = vmatpush.msra.mxu0 0.0
  %232 = vmatpush.msra.mxu0 0.0
  %233 = vmatpush.msra.mxu0 0.0
  %234 = vmatpush.msra.mxu0 0.0
  %235 = vmatpush.msra.mxu0 0.0
  %236 = vmatpush.msra.mxu0 0.0
  %237 = vmatpush.msra.mxu0 0.0
  %238 = vmatpush.msra.mxu0 0.0
  %239 = vmatpush.msra.mxu0 0.0
  %240 = vmatpush.msra.mxu0 0.0
  %241 = vmatpush.msra.mxu0 0.0
  %242 = vmatpush.msra.mxu0 0.0
  %243 = vmatpush.msra.mxu0 0.0
  %244 = vmatpush.msra.mxu0 0.0
  %245 = vmatpush.msra.mxu0 %v229
  %246 = vmatpush.msra.mxu0 %v218
  %247 = vmatmul.f32.gmra.mxu0 %v222
  %v248 = vpop.f32.mrf.mxu0
  %v249 = vadd.f32 0.0, %v248
  %250 = vmatmul.f32.gmra.mxu0 %v225
  %v251 = vpop.f32.mrf.mxu0
  %v252 = vadd.f32 0.0, %v251
  %253 = vdwg.mxu0
  %v255 = vsel %vm29, %v214, 0
  %v258 = vsel %vm29, %v215, 0
  %vm260 = vcmask 1043456
  %v262 = vsel %vm260, %v217, 0
  %264 = vmatpush.msra.mxu0 0.0
  %265 = vmatpush.msra.mxu0 0.0
  %266 = vmatpush.msra.mxu0 0.0
  %267 = vmatpush.msra.mxu0 0.0
  %268 = vmatpush.msra.mxu0 0.0
  %269 = vmatpush.msra.mxu0 0.0
  %270 = vmatpush.msra.mxu0 0.0
  %271 = vmatpush.msra.mxu0 0.0
  %272 = vmatpush.msra.mxu0 0.0
  %273 = vmatpush.msra.mxu0 0.0
  %274 = vmatpush.msra.mxu0 0.0
  %275 = vmatpush.msra.mxu0 0.0
  %276 = vmatpush.msra.mxu0 0.0
  %277 = vmatpush.msra.mxu0 0.0
  %278 = vmatpush.msra.mxu0 %v262
  %279 = vmatpush.msra.mxu0 %v216
  %280 = vmatmul.f32.gmra.mxu0 %v255
  %v281 = vpop.f32.mrf.mxu0
  %v282 = vadd.f32 %v249, %v281
  %283 = vmatmul.f32.gmra.mxu0 %v258
  %v284 = vpop.f32.mrf.mxu0
  %v285 = vadd.f32 %v252, %v284
  %286 = vdwg.mxu0
  %v287 = vld [vmem:[%s3 + $0x40] sm:$0x1]
  %v288 = vperm.slane %v287, 0
  %v289 = vadd.f32 %v282, %v288
  %v290 = vadd.f32 %v285, %v288
  %v291 = vld [vmem:[%s3 + $0x20] sm:$0xff]
  %v292 = vld [vmem:[%s3 + $0x28] sm:$0xff]
  %v293 = vld [vmem:[%s3 + $0x30] sm:$0xff]
  %v294 = vld [vmem:[%s3 + $0x38] sm:$0xff]
  %vm295 = vcmask 261120
  %v297 = vsel %vm295, 0.0, 0
  %299 = vmatpush.msra.mxu0 0.0
  %300 = vmatpush.msra.mxu0 0.0
  %301 = vmatpush.msra.mxu0 0.0
  %302 = vmatpush.msra.mxu0 0.0
  %303 = vmatpush.msra.mxu0 0.0
  %304 = vmatpush.msra.mxu0 0.0
  %305 = vmatpush.msra.mxu0 0.0
  %306 = vmatpush.msra.mxu0 0.0
  %307 = vmatpush.msra.mxu0 0.0
  %308 = vmatpush.msra.mxu0 0.0
  %309 = vmatpush.msra.mxu0 0.0
  %310 = vmatpush.msra.mxu0 0.0
  %311 = vmatpush.msra.mxu0 %v294
  %312 = vmatpush.msra.mxu0 %v293
  %313 = vmatpush.msra.mxu0 %v292
  %314 = vmatpush.msra.mxu0 %v291
  %315 = vmatmul.f32.gmra.mxu0 %v297
  %v316 = vpop.f32.mrf.mxu0
  %v317 = vadd.f32 0.0, %v316
  %318 = vdwg.mxu0
  %v319 = vadd.f32 %v289, %v317
  %v320 = vxor.u32 %v319, 2147483648
  %v321 = vmul.f32 %v320, 1.442695
  %v322 = vpow.pop %v321
  %v323 = vadd.f32 %v322, 1.0
  %v324 = vrcp.pop %v323
  %v325 = vmul.f32 %v323, %v324
  %v326 = vsub.f32 1.0, %v325
  %v327 = vmul.f32 %v324, %v326
  %v328 = vadd.f32 %v324, %v327
  %vm329 = vweird.f32 %v323
  %vm330 = vweird.f32 %v324
  %vm331 = vmor %vm329, %vm330
  %v332 = vsel %vm331, %v324, %v328
  %v333 = vand.u32 2147483647, %v323
  %vm334 = vcmp.eq.f32.partialorder %v333, 8.507059e+37
  %v335 = vand.u32 %v323, 2147483648
  %v336 = vor.u32 1.1754944e-38, %v335
  %v337 = vsel %vm334, %v336, %v332
  %v338 = vmul.f32 1.0, %v337
  %v339 = vtanh.pop %v319
  %v340 = vmul.f32 %v338, 0.0
  %342 = vrot.lane.b32.xlu0 %v339, 32
  %v343 = vpop.permute.xlu0 %342
  %v345 = vmul.f32 %v338, %v343
  %347 = vrot.lane.b32.xlu0 %v345, 32
  %v348 = vpop.permute.xlu0 %347
  %v350 = vadd.f32 %v340, %v348
  %v351 = vtanh.pop %v350
  %353 = vrot.lane.b32.xlu0 %v351, 32
  %v354 = vpop.permute.xlu0 %353
  %v356 = vmul.f32 %v338, %v354
  %358 = vrot.lane.b32.xlu0 %v356, 64
  %v359 = vpop.permute.xlu0 %358
  %vm361 = vcmask 253952
  %362 = vst.msk [vmem:[#allocation2] sm:$0x1] %vm361, %v359
  %v363 = vsel %vm295, %v359, 0
  %365 = vmatpush.msra.mxu0 0.0
  %366 = vmatpush.msra.mxu0 0.0
  %367 = vmatpush.msra.mxu0 0.0
  %368 = vmatpush.msra.mxu0 0.0
  %369 = vmatpush.msra.mxu0 0.0
  %370 = vmatpush.msra.mxu0 0.0
  %371 = vmatpush.msra.mxu0 0.0
  %372 = vmatpush.msra.mxu0 0.0
  %373 = vmatpush.msra.mxu0 0.0
  %374 = vmatpush.msra.mxu0 0.0
  %375 = vmatpush.msra.mxu0 0.0
  %376 = vmatpush.msra.mxu0 0.0
  %377 = vmatpush.msra.mxu0 %v294
  %378 = vmatpush.msra.mxu0 %v293
  %379 = vmatpush.msra.mxu0 %v292
  %380 = vmatpush.msra.mxu0 %v291
  %381 = vmatmul.f32.gmra.mxu0 %v363
  %v382 = vpop.f32.mrf.mxu0
  %v383 = vadd.f32 0.0, %v382
  %384 = vdwg.mxu0
  %v386 = vrot.slane %v383, 7
  %v388 = vadd.f32 %v289, %v386
  %v389 = vxor.u32 %v388, 2147483648
  %v390 = vmul.f32 %v389, 1.442695
  %v391 = vpow.pop %v390
  %v392 = vadd.f32 %v391, 1.0
  %v393 = vrcp.pop %v392
  %v394 = vmul.f32 %v392, %v393
  %v395 = vsub.f32 1.0, %v394
  %v396 = vmul.f32 %v393, %v395
  %v397 = vadd.f32 %v393, %v396
  %vm398 = vweird.f32 %v392
  %vm399 = vweird.f32 %v393
  %vm400 = vmor %vm398, %vm399
  %v401 = vsel %vm400, %v393, %v397
  %v402 = vand.u32 2147483647, %v392
  %vm403 = vcmp.eq.f32.partialorder %v402, 8.507059e+37
  %v404 = vand.u32 %v392, 2147483648
  %v405 = vor.u32 1.1754944e-38, %v404
  %v406 = vsel %vm403, %v405, %v401
  %v407 = vmul.f32 1.0, %v406
  %v408 = vtanh.pop %v388
  %v410 = vrot.slane %v350, 7
  %v412 = vmul.f32 %v407, %v410
  %414 = vrot.lane.b32.xlu0 %v408, 32
  %v415 = vpop.permute.xlu0 %414
  %v417 = vmul.f32 %v407, %v415
  %419 = vrot.lane.b32.xlu0 %v417, 32
  %v420 = vpop.permute.xlu0 %419
  %v422 = vadd.f32 %v412, %v420
  %v423 = vtanh.pop %v422
  %425 = vrot.lane.b32.xlu0 %v423, 32
  %v426 = vpop.permute.xlu0 %425
  %v428 = vmul.f32 %v407, %v426
  %430 = vrot.lane.b32.xlu0 %v428, 64
  %v431 = vpop.permute.xlu0 %430
  %vm433 = vcmask 254977
  %434 = vst.msk [vmem:[#allocation2] sm:$0x2] %vm433, %v431
  %v435 = vrot.slane %v428, 1
  %436 = vrot.lane.b32.xlu0 %v435, 64
  %v437 = vpop.permute.xlu0 %436
  %v438 = vsel %vm295, %v437, 0
  %440 = vmatpush.msra.mxu0 0.0
  %441 = vmatpush.msra.mxu0 0.0
  %442 = vmatpush.msra.mxu0 0.0
  %443 = vmatpush.msra.mxu0 0.0
  %444 = vmatpush.msra.mxu0 0.0
  %445 = vmatpush.msra.mxu0 0.0
  %446 = vmatpush.msra.mxu0 0.0
  %447 = vmatpush.msra.mxu0 0.0
  %448 = vmatpush.msra.mxu0 0.0
  %449 = vmatpush.msra.mxu0 0.0
  %450 = vmatpush.msra.mxu0 0.0
  %451 = vmatpush.msra.mxu0 0.0
  %452 = vmatpush.msra.mxu0 %v294
  %453 = vmatpush.msra.mxu0 %v293
  %454 = vmatpush.msra.mxu0 %v292
  %455 = vmatpush.msra.mxu0 %v291
  %456 = vmatmul.f32.gmra.mxu0 %v438
  %v457 = vpop.f32.mrf.mxu0
  %v458 = vadd.f32 0.0, %v457
  %459 = vdwg.mxu0
  %v461 = vrot.slane %v458, 6
  %v463 = vadd.f32 %v289, %v461
  %v464 = vxor.u32 %v463, 2147483648
  %v465 = vmul.f32 %v464, 1.442695
  %v466 = vpow.pop %v465
  %v467 = vadd.f32 %v466, 1.0
  %v468 = vrcp.pop %v467
  %v469 = vmul.f32 %v467, %v468
  %v470 = vsub.f32 1.0, %v469
  %v471 = vmul.f32 %v468, %v470
  %v472 = vadd.f32 %v468, %v471
  %vm473 = vweird.f32 %v467
  %vm474 = vweird.f32 %v468
  %vm475 = vmor %vm473, %vm474
  %v476 = vsel %vm475, %v468, %v472
  %v477 = vand.u32 2147483647, %v467
  %vm478 = vcmp.eq.f32.partialorder %v477, 8.507059e+37
  %v479 = vand.u32 %v467, 2147483648
  %v480 = vor.u32 1.1754944e-38, %v479
  %v481 = vsel %vm478, %v480, %v476
  %v482 = vmul.f32 1.0, %v481
  %v483 = vtanh.pop %v463
  %v485 = vrot.slane %v422, 7
  %v487 = vmul.f32 %v482, %v485
  %489 = vrot.lane.b32.xlu0 %v483, 32
  %v490 = vpop.permute.xlu0 %489
  %v492 = vmul.f32 %v482, %v490
  %494 = vrot.lane.b32.xlu0 %v492, 32
  %v495 = vpop.permute.xlu0 %494
  %v497 = vadd.f32 %v487, %v495
  %v498 = vtanh.pop %v497
  %500 = vrot.lane.b32.xlu0 %v498, 32
  %v501 = vpop.permute.xlu0 %500
  %v503 = vmul.f32 %v482, %v501
  %505 = vrot.lane.b32.xlu0 %v503, 64
  %v506 = vpop.permute.xlu0 %505
  %vm508 = vcmask 256002
  %509 = vst.msk [vmem:[#allocation2] sm:$0x4] %vm508, %v506
  %v510 = vrot.slane %v503, 2
  %511 = vrot.lane.b32.xlu0 %v510, 64
  %v512 = vpop.permute.xlu0 %511
  %v513 = vsel %vm295, %v512, 0
  %515 = vmatpush.msra.mxu0 0.0
  %516 = vmatpush.msra.mxu0 0.0
  %517 = vmatpush.msra.mxu0 0.0
  %518 = vmatpush.msra.mxu0 0.0
  %519 = vmatpush.msra.mxu0 0.0
  %520 = vmatpush.msra.mxu0 0.0
  %521 = vmatpush.msra.mxu0 0.0
  %522 = vmatpush.msra.mxu0 0.0
  %523 = vmatpush.msra.mxu0 0.0
  %524 = vmatpush.msra.mxu0 0.0
  %525 = vmatpush.msra.mxu0 0.0
  %526 = vmatpush.msra.mxu0 0.0
  %527 = vmatpush.msra.mxu0 %v294
  %528 = vmatpush.msra.mxu0 %v293
  %529 = vmatpush.msra.mxu0 %v292
  %530 = vmatpush.msra.mxu0 %v291
  %531 = vmatmul.f32.gmra.mxu0 %v513
  %v532 = vpop.f32.mrf.mxu0
  %v533 = vadd.f32 0.0, %v532
  %534 = vdwg.mxu0
  %v536 = vrot.slane %v533, 5
  %v538 = vadd.f32 %v289, %v536
  %v539 = vxor.u32 %v538, 2147483648
  %v540 = vmul.f32 %v539, 1.442695
  %v541 = vpow.pop %v540
  %v542 = vadd.f32 %v541, 1.0
  %v543 = vrcp.pop %v542
  %v544 = vmul.f32 %v542, %v543
  %v545 = vsub.f32 1.0, %v544
  %v546 = vmul.f32 %v543, %v545
  %v547 = vadd.f32 %v543, %v546
  %vm548 = vweird.f32 %v542
  %vm549 = vweird.f32 %v543
  %vm550 = vmor %vm548, %vm549
  %v551 = vsel %vm550, %v543, %v547
  %v552 = vand.u32 2147483647, %v542
  %vm553 = vcmp.eq.f32.partialorder %v552, 8.507059e+37
  %v554 = vand.u32 %v542, 2147483648
  %v555 = vor.u32 1.1754944e-38, %v554
  %v556 = vsel %vm553, %v555, %v551
  %v557 = vmul.f32 1.0, %v556
  %v558 = vtanh.pop %v538
  %v560 = vrot.slane %v497, 7
  %v562 = vmul.f32 %v557, %v560
  %564 = vrot.lane.b32.xlu0 %v558, 32
  %v565 = vpop.permute.xlu0 %564
  %v567 = vmul.f32 %v557, %v565
  %569 = vrot.lane.b32.xlu0 %v567, 32
  %v570 = vpop.permute.xlu0 %569
  %v572 = vadd.f32 %v562, %v570
  %v573 = vtanh.pop %v572
  %575 = vrot.lane.b32.xlu0 %v573, 32
  %v576 = vpop.permute.xlu0 %575
  %v578 = vmul.f32 %v557, %v576
  %580 = vrot.lane.b32.xlu0 %v578, 64
  %v581 = vpop.permute.xlu0 %580
  %vm583 = vcmask 257027
  %584 = vst.msk [vmem:[#allocation2] sm:$0x8] %vm583, %v581
  %v585 = vrot.slane %v578, 3
  %586 = vrot.lane.b32.xlu0 %v585, 64
  %v587 = vpop.permute.xlu0 %586
  %v588 = vsel %vm295, %v587, 0
  %590 = vmatpush.msra.mxu0 0.0
  %591 = vmatpush.msra.mxu0 0.0
  %592 = vmatpush.msra.mxu0 0.0
  %593 = vmatpush.msra.mxu0 0.0
  %594 = vmatpush.msra.mxu0 0.0
  %595 = vmatpush.msra.mxu0 0.0
  %596 = vmatpush.msra.mxu0 0.0
  %597 = vmatpush.msra.mxu0 0.0
  %598 = vmatpush.msra.mxu0 0.0
  %599 = vmatpush.msra.mxu0 0.0
  %600 = vmatpush.msra.mxu0 0.0
  %601 = vmatpush.msra.mxu0 0.0
  %602 = vmatpush.msra.mxu0 %v294
  %603 = vmatpush.msra.mxu0 %v293
  %604 = vmatpush.msra.mxu0 %v292
  %605 = vmatpush.msra.mxu0 %v291
  %606 = vmatmul.f32.gmra.mxu0 %v588
  %v607 = vpop.f32.mrf.mxu0
  %v608 = vadd.f32 0.0, %v607
  %609 = vdwg.mxu0
  %v611 = vrot.slane %v608, 4
  %v613 = vadd.f32 %v289, %v611
  %v614 = vxor.u32 %v613, 2147483648
  %v615 = vmul.f32 %v614, 1.442695
  %v616 = vpow.pop %v615
  %v617 = vadd.f32 %v616, 1.0
  %v618 = vrcp.pop %v617
  %v619 = vmul.f32 %v617, %v618
  %v620 = vsub.f32 1.0, %v619
  %v621 = vmul.f32 %v618, %v620
  %v622 = vadd.f32 %v618, %v621
  %vm623 = vweird.f32 %v617
  %vm624 = vweird.f32 %v618
  %vm625 = vmor %vm623, %vm624
  %v626 = vsel %vm625, %v618, %v622
  %v627 = vand.u32 2147483647, %v617
  %vm628 = vcmp.eq.f32.partialorder %v627, 8.507059e+37
  %v629 = vand.u32 %v617, 2147483648
  %v630 = vor.u32 1.1754944e-38, %v629
  %v631 = vsel %vm628, %v630, %v626
  %v632 = vmul.f32 1.0, %v631
  %v633 = vtanh.pop %v613
  %v635 = vrot.slane %v572, 7
  %v637 = vmul.f32 %v632, %v635
  %639 = vrot.lane.b32.xlu0 %v633, 32
  %v640 = vpop.permute.xlu0 %639
  %v642 = vmul.f32 %v632, %v640
  %644 = vrot.lane.b32.xlu0 %v642, 32
  %v645 = vpop.permute.xlu0 %644
  %v647 = vadd.f32 %v637, %v645
  %v648 = vtanh.pop %v647
  %650 = vrot.lane.b32.xlu0 %v648, 32
  %v651 = vpop.permute.xlu0 %650
  %v653 = vmul.f32 %v632, %v651
  %655 = vrot.lane.b32.xlu0 %v653, 64
  %v656 = vpop.permute.xlu0 %655
  %vm658 = vcmask 258052
  %659 = vst.msk [vmem:[#allocation2] sm:$0x10] %vm658, %v656
  %v660 = vrot.slane %v653, 4
  %661 = vrot.lane.b32.xlu0 %v660, 64
  %v662 = vpop.permute.xlu0 %661
  %v663 = vsel %vm295, %v662, 0
  %665 = vmatpush.msra.mxu0 0.0
  %666 = vmatpush.msra.mxu0 0.0
  %667 = vmatpush.msra.mxu0 0.0
  %668 = vmatpush.msra.mxu0 0.0
  %669 = vmatpush.msra.mxu0 0.0
  %670 = vmatpush.msra.mxu0 0.0
  %671 = vmatpush.msra.mxu0 0.0
  %672 = vmatpush.msra.mxu0 0.0
  %673 = vmatpush.msra.mxu0 0.0
  %674 = vmatpush.msra.mxu0 0.0
  %675 = vmatpush.msra.mxu0 0.0
  %676 = vmatpush.msra.mxu0 0.0
  %677 = vmatpush.msra.mxu0 %v294
  %678 = vmatpush.msra.mxu0 %v293
  %679 = vmatpush.msra.mxu0 %v292
  %680 = vmatpush.msra.mxu0 %v291
  %681 = vmatmul.f32.gmra.mxu0 %v663
  %v682 = vpop.f32.mrf.mxu0
  %v683 = vadd.f32 0.0, %v682
  %684 = vdwg.mxu0
  %v686 = vrot.slane %v683, 3
  %v688 = vadd.f32 %v289, %v686
  %v689 = vxor.u32 %v688, 2147483648
  %v690 = vmul.f32 %v689, 1.442695
  %v691 = vpow.pop %v690
  %v692 = vadd.f32 %v691, 1.0
  %v693 = vrcp.pop %v692
  %v694 = vmul.f32 %v692, %v693
  %v695 = vsub.f32 1.0, %v694
  %v696 = vmul.f32 %v693, %v695
  %v697 = vadd.f32 %v693, %v696
  %vm698 = vweird.f32 %v692
  %vm699 = vweird.f32 %v693
  %vm700 = vmor %vm698, %vm699
  %v701 = vsel %vm700, %v693, %v697
  %v702 = vand.u32 2147483647, %v692
  %vm703 = vcmp.eq.f32.partialorder %v702, 8.507059e+37
  %v704 = vand.u32 %v692, 2147483648
  %v705 = vor.u32 1.1754944e-38, %v704
  %v706 = vsel %vm703, %v705, %v701
  %v707 = vmul.f32 1.0, %v706
  %v708 = vtanh.pop %v688
  %v710 = vrot.slane %v647, 7
  %v712 = vmul.f32 %v707, %v710
  %714 = vrot.lane.b32.xlu0 %v708, 32
  %v715 = vpop.permute.xlu0 %714
  %v717 = vmul.f32 %v707, %v715
  %719 = vrot.lane.b32.xlu0 %v717, 32
  %v720 = vpop.permute.xlu0 %719
  %v722 = vadd.f32 %v712, %v720
  %v723 = vtanh.pop %v722
  %725 = vrot.lane.b32.xlu0 %v723, 32
  %v726 = vpop.permute.xlu0 %725
  %v728 = vmul.f32 %v707, %v726
  %730 = vrot.lane.b32.xlu0 %v728, 64
  %v731 = vpop.permute.xlu0 %730
  %vm733 = vcmask 259077
  %734 = vst.msk [vmem:[#allocation2] sm:$0x20] %vm733, %v731
  %v735 = vrot.slane %v728, 5
  %736 = vrot.lane.b32.xlu0 %v735, 64
  %v737 = vpop.permute.xlu0 %736
  %v738 = vsel %vm295, %v737, 0
  %740 = vmatpush.msra.mxu0 0.0
  %741 = vmatpush.msra.mxu0 0.0
  %742 = vmatpush.msra.mxu0 0.0
  %743 = vmatpush.msra.mxu0 0.0
  %744 = vmatpush.msra.mxu0 0.0
  %745 = vmatpush.msra.mxu0 0.0
  %746 = vmatpush.msra.mxu0 0.0
  %747 = vmatpush.msra.mxu0 0.0
  %748 = vmatpush.msra.mxu0 0.0
  %749 = vmatpush.msra.mxu0 0.0
  %750 = vmatpush.msra.mxu0 0.0
  %751 = vmatpush.msra.mxu0 0.0
  %752 = vmatpush.msra.mxu0 %v294
  %753 = vmatpush.msra.mxu0 %v293
  %754 = vmatpush.msra.mxu0 %v292
  %755 = vmatpush.msra.mxu0 %v291
  %756 = vmatmul.f32.gmra.mxu0 %v738
  %v757 = vpop.f32.mrf.mxu0
  %v758 = vadd.f32 0.0, %v757
  %759 = vdwg.mxu0
  %v761 = vrot.slane %v758, 2
  %v763 = vadd.f32 %v289, %v761
  %v764 = vxor.u32 %v763, 2147483648
  %v765 = vmul.f32 %v764, 1.442695
  %v766 = vpow.pop %v765
  %v767 = vadd.f32 %v766, 1.0
  %v768 = vrcp.pop %v767
  %v769 = vmul.f32 %v767, %v768
  %v770 = vsub.f32 1.0, %v769
  %v771 = vmul.f32 %v768, %v770
  %v772 = vadd.f32 %v768, %v771
  %vm773 = vweird.f32 %v767
  %vm774 = vweird.f32 %v768
  %vm775 = vmor %vm773, %vm774
  %v776 = vsel %vm775, %v768, %v772
  %v777 = vand.u32 2147483647, %v767
  %vm778 = vcmp.eq.f32.partialorder %v777, 8.507059e+37
  %v779 = vand.u32 %v767, 2147483648
  %v780 = vor.u32 1.1754944e-38, %v779
  %v781 = vsel %vm778, %v780, %v776
  %v782 = vmul.f32 1.0, %v781
  %v783 = vtanh.pop %v763
  %v785 = vrot.slane %v722, 7
  %v787 = vmul.f32 %v782, %v785
  %789 = vrot.lane.b32.xlu0 %v783, 32
  %v790 = vpop.permute.xlu0 %789
  %v792 = vmul.f32 %v782, %v790
  %794 = vrot.lane.b32.xlu0 %v792, 32
  %v795 = vpop.permute.xlu0 %794
  %v797 = vadd.f32 %v787, %v795
  %v798 = vtanh.pop %v797
  %800 = vrot.lane.b32.xlu0 %v798, 32
  %v801 = vpop.permute.xlu0 %800
  %v803 = vmul.f32 %v782, %v801
  %805 = vrot.lane.b32.xlu0 %v803, 64
  %v806 = vpop.permute.xlu0 %805
  %vm808 = vcmask 260102
  %809 = vst.msk [vmem:[#allocation2] sm:$0x40] %vm808, %v806
  %v810 = vrot.slane %v803, 6
  %811 = vrot.lane.b32.xlu0 %v810, 64
  %v812 = vpop.permute.xlu0 %811
  %v813 = vsel %vm295, %v812, 0
  %815 = vmatpush.msra.mxu0 0.0
  %816 = vmatpush.msra.mxu0 0.0
  %817 = vmatpush.msra.mxu0 0.0
  %818 = vmatpush.msra.mxu0 0.0
  %819 = vmatpush.msra.mxu0 0.0
  %820 = vmatpush.msra.mxu0 0.0
  %821 = vmatpush.msra.mxu0 0.0
  %822 = vmatpush.msra.mxu0 0.0
  %823 = vmatpush.msra.mxu0 0.0
  %824 = vmatpush.msra.mxu0 0.0
  %825 = vmatpush.msra.mxu0 0.0
  %826 = vmatpush.msra.mxu0 0.0
  %827 = vmatpush.msra.mxu0 %v294
  %828 = vmatpush.msra.mxu0 %v293
  %829 = vmatpush.msra.mxu0 %v292
  %830 = vmatpush.msra.mxu0 %v291
  %831 = vmatmul.f32.gmra.mxu0 %v813
  %v832 = vpop.f32.mrf.mxu0
  %v833 = vadd.f32 0.0, %v832
  %834 = vdwg.mxu0
  %v836 = vrot.slane %v833, 1
  %v838 = vadd.f32 %v289, %v836
  %v839 = vxor.u32 %v838, 2147483648
  %v840 = vmul.f32 %v839, 1.442695
  %v841 = vpow.pop %v840
  %v842 = vadd.f32 %v841, 1.0
  %v843 = vrcp.pop %v842
  %v844 = vmul.f32 %v842, %v843
  %v845 = vsub.f32 1.0, %v844
  %v846 = vmul.f32 %v843, %v845
  %v847 = vadd.f32 %v843, %v846
  %vm848 = vweird.f32 %v842
  %vm849 = vweird.f32 %v843
  %vm850 = vmor %vm848, %vm849
  %v851 = vsel %vm850, %v843, %v847
  %v852 = vand.u32 2147483647, %v842
  %vm853 = vcmp.eq.f32.partialorder %v852, 8.507059e+37
  %v854 = vand.u32 %v842, 2147483648
  %v855 = vor.u32 1.1754944e-38, %v854
  %v856 = vsel %vm853, %v855, %v851
  %v857 = vmul.f32 1.0, %v856
  %v858 = vtanh.pop %v838
  %v860 = vrot.slane %v797, 7
  %v862 = vmul.f32 %v857, %v860
  %864 = vrot.lane.b32.xlu0 %v858, 32
  %v865 = vpop.permute.xlu0 %864
  %v867 = vmul.f32 %v857, %v865
  %869 = vrot.lane.b32.xlu0 %v867, 32
  %v870 = vpop.permute.xlu0 %869
  %v872 = vadd.f32 %v862, %v870
  %v873 = vtanh.pop %v872
  %875 = vrot.lane.b32.xlu0 %v873, 32
  %v876 = vpop.permute.xlu0 %875
  %v878 = vmul.f32 %v857, %v876
  %880 = vrot.lane.b32.xlu0 %v878, 64
  %v881 = vpop.permute.xlu0 %880
  %vm883 = vcmask 261127
  %884 = vst.msk [vmem:[#allocation2] sm:$0x80] %vm883, %v881
  %v885 = vrot.slane %v878, 7
  %886 = vrot.lane.b32.xlu0 %v885, 64
  %v887 = vpop.permute.xlu0 %886
  %v888 = vsel %vm295, %v887, 0
  %890 = vmatpush.msra.mxu0 0.0
  %891 = vmatpush.msra.mxu0 0.0
  %892 = vmatpush.msra.mxu0 0.0
  %893 = vmatpush.msra.mxu0 0.0
  %894 = vmatpush.msra.mxu0 0.0
  %895 = vmatpush.msra.mxu0 0.0
  %896 = vmatpush.msra.mxu0 0.0
  %897 = vmatpush.msra.mxu0 0.0
  %898 = vmatpush.msra.mxu0 0.0
  %899 = vmatpush.msra.mxu0 0.0
  %900 = vmatpush.msra.mxu0 0.0
  %901 = vmatpush.msra.mxu0 0.0
  %902 = vmatpush.msra.mxu0 %v294
  %903 = vmatpush.msra.mxu0 %v293
  %904 = vmatpush.msra.mxu0 %v292
  %905 = vmatpush.msra.mxu0 %v291
  %906 = vmatmul.f32.gmra.mxu0 %v888
  %v907 = vpop.f32.mrf.mxu0
  %v908 = vadd.f32 0.0, %v907
  %909 = vdwg.mxu0
  %v910 = vadd.f32 %v290, %v908
  %v911 = vxor.u32 %v910, 2147483648
  %v912 = vmul.f32 %v911, 1.442695
  %v913 = vpow.pop %v912
  %v914 = vadd.f32 %v913, 1.0
  %v915 = vrcp.pop %v914
  %v916 = vmul.f32 %v914, %v915
  %v917 = vsub.f32 1.0, %v916
  %v918 = vmul.f32 %v915, %v917
  %v919 = vadd.f32 %v915, %v918
  %vm920 = vweird.f32 %v914
  %vm921 = vweird.f32 %v915
  %vm922 = vmor %vm920, %vm921
  %v923 = vsel %vm922, %v915, %v919
  %v924 = vand.u32 2147483647, %v914
  %vm925 = vcmp.eq.f32.partialorder %v924, 8.507059e+37
  %v926 = vand.u32 %v914, 2147483648
  %v927 = vor.u32 1.1754944e-38, %v926
  %v928 = vsel %vm925, %v927, %v923
  %v929 = vmul.f32 1.0, %v928
  %v930 = vtanh.pop %v910
  %v932 = vrot.slane %v872, 7
  %v934 = vmul.f32 %v929, %v932
  %936 = vrot.lane.b32.xlu0 %v930, 32
  %v937 = vpop.permute.xlu0 %936
  %v939 = vmul.f32 %v929, %v937
  %941 = vrot.lane.b32.xlu0 %v939, 32
  %v942 = vpop.permute.xlu0 %941
  %v944 = vadd.f32 %v934, %v942
  %v945 = vtanh.pop %v944
  %947 = vrot.lane.b32.xlu0 %v945, 32
  %v948 = vpop.permute.xlu0 %947
  %v950 = vmul.f32 %v929, %v948
  %952 = vrot.lane.b32.xlu0 %v950, 64
  %v953 = vpop.permute.xlu0 %952
  %955 = vst.msk [vmem:[#allocation2 + $0x8] sm:$0x1] %vm361, %v953
  %v956 = vsel %vm295, %v953, 0
  %958 = vmatpush.msra.mxu0 0.0
  %959 = vmatpush.msra.mxu0 0.0
  %960 = vmatpush.msra.mxu0 0.0
  %961 = vmatpush.msra.mxu0 0.0
  %962 = vmatpush.msra.mxu0 0.0
  %963 = vmatpush.msra.mxu0 0.0
  %964 = vmatpush.msra.mxu0 0.0
  %965 = vmatpush.msra.mxu0 0.0
  %966 = vmatpush.msra.mxu0 0.0
  %967 = vmatpush.msra.mxu0 0.0
  %968 = vmatpush.msra.mxu0 0.0
  %969 = vmatpush.msra.mxu0 0.0
  %970 = vmatpush.msra.mxu0 %v294
  %971 = vmatpush.msra.mxu0 %v293
  %972 = vmatpush.msra.mxu0 %v292
  %973 = vmatpush.msra.mxu0 %v291
  %974 = vmatmul.f32.gmra.mxu0 %v956
  %v975 = vpop.f32.mrf.mxu0
  %v976 = vadd.f32 0.0, %v975
  %977 = vdwg.mxu0
  %v979 = vrot.slane %v976, 7
  %v981 = vadd.f32 %v290, %v979
  %v982 = vxor.u32 %v981, 2147483648
  %v983 = vmul.f32 %v982, 1.442695
  %v984 = vpow.pop %v983
  %v985 = vadd.f32 %v984, 1.0
  %v986 = vrcp.pop %v985
  %v987 = vmul.f32 %v985, %v986
  %v988 = vsub.f32 1.0, %v987
  %v989 = vmul.f32 %v986, %v988
  %v990 = vadd.f32 %v986, %v989
  %vm991 = vweird.f32 %v985
  %vm992 = vweird.f32 %v986
  %vm993 = vmor %vm991, %vm992
  %v994 = vsel %vm993, %v986, %v990
  %v995 = vand.u32 2147483647, %v985
  %vm996 = vcmp.eq.f32.partialorder %v995, 8.507059e+37
  %v997 = vand.u32 %v985, 2147483648
  %v998 = vor.u32 1.1754944e-38, %v997
  %v999 = vsel %vm996, %v998, %v994
  %v1000 = vmul.f32 1.0, %v999
  %v1001 = vtanh.pop %v981
  %v1003 = vrot.slane %v944, 7
  %v1005 = vmul.f32 %v1000, %v1003
  %1007 = vrot.lane.b32.xlu0 %v1001, 32
  %v1008 = vpop.permute.xlu0 %1007
  %v1010 = vmul.f32 %v1000, %v1008
  %1012 = vrot.lane.b32.xlu0 %v1010, 32
  %v1013 = vpop.permute.xlu0 %1012
  %v1015 = vadd.f32 %v1005, %v1013
  %v1016 = vtanh.pop %v1015
  %1018 = vrot.lane.b32.xlu0 %v1016, 32
  %v1019 = vpop.permute.xlu0 %1018
  %v1021 = vmul.f32 %v1000, %v1019
  %1023 = vrot.lane.b32.xlu0 %v1021, 64
  %v1024 = vpop.permute.xlu0 %1023
  %1026 = vst.msk [vmem:[#allocation2 + $0x8] sm:$0x2] %vm433, %v1024
  %v1027 = vrot.slane %v1021, 1
  %1028 = vrot.lane.b32.xlu0 %v1027, 64
  %v1029 = vpop.permute.xlu0 %1028
  %v1030 = vsel %vm295, %v1029, 0
  %1032 = vmatpush.msra.mxu0 0.0
  %1033 = vmatpush.msra.mxu0 0.0
  %1034 = vmatpush.msra.mxu0 0.0
  %1035 = vmatpush.msra.mxu0 0.0
  %1036 = vmatpush.msra.mxu0 0.0
  %1037 = vmatpush.msra.mxu0 0.0
  %1038 = vmatpush.msra.mxu0 0.0
  %1039 = vmatpush.msra.mxu0 0.0
  %1040 = vmatpush.msra.mxu0 0.0
  %1041 = vmatpush.msra.mxu0 0.0
  %1042 = vmatpush.msra.mxu0 0.0
  %1043 = vmatpush.msra.mxu0 0.0
  %1044 = vmatpush.msra.mxu0 %v294
  %1045 = vmatpush.msra.mxu0 %v293
  %1046 = vmatpush.msra.mxu0 %v292
  %1047 = vmatpush.msra.mxu0 %v291
  %1048 = vmatmul.f32.gmra.mxu0 %v1030
  %v1049 = vpop.f32.mrf.mxu0
  %v1050 = vadd.f32 0.0, %v1049
  %1051 = vdwg.mxu0
  %v1053 = vrot.slane %v1050, 6
  %v1055 = vadd.f32 %v290, %v1053
  %v1056 = vxor.u32 %v1055, 2147483648
  %v1057 = vmul.f32 %v1056, 1.442695
  %v1058 = vpow.pop %v1057
  %v1059 = vadd.f32 %v1058, 1.0
  %v1060 = vrcp.pop %v1059
  %v1061 = vmul.f32 %v1059, %v1060
  %v1062 = vsub.f32 1.0, %v1061
  %v1063 = vmul.f32 %v1060, %v1062
  %v1064 = vadd.f32 %v1060, %v1063
  %vm1065 = vweird.f32 %v1059
  %vm1066 = vweird.f32 %v1060
  %vm1067 = vmor %vm1065, %vm1066
  %v1068 = vsel %vm1067, %v1060, %v1064
  %v1069 = vand.u32 2147483647, %v1059
  %vm1070 = vcmp.eq.f32.partialorder %v1069, 8.507059e+37
  %v1071 = vand.u32 %v1059, 2147483648
  %v1072 = vor.u32 1.1754944e-38, %v1071
  %v1073 = vsel %vm1070, %v1072, %v1068
  %v1074 = vmul.f32 1.0, %v1073
  %v1075 = vtanh.pop %v1055
  %v1077 = vrot.slane %v1015, 7
  %v1079 = vmul.f32 %v1074, %v1077
  %1081 = vrot.lane.b32.xlu0 %v1075, 32
  %v1082 = vpop.permute.xlu0 %1081
  %v1084 = vmul.f32 %v1074, %v1082
  %1086 = vrot.lane.b32.xlu0 %v1084, 32
  %v1087 = vpop.permute.xlu0 %1086
  %v1089 = vadd.f32 %v1079, %v1087
  %v1090 = vtanh.pop %v1089
  %1092 = vrot.lane.b32.xlu0 %v1090, 32
  %v1093 = vpop.permute.xlu0 %1092
  %v1095 = vmul.f32 %v1074, %v1093
  %1097 = vrot.lane.b32.xlu0 %v1095, 64
  %v1098 = vpop.permute.xlu0 %1097
  %1100 = vst.msk [vmem:[#allocation2 + $0x8] sm:$0x4] %vm508, %v1098
  %v1101 = vrot.slane %v1095, 2
  %1102 = vrot.lane.b32.xlu0 %v1101, 64
  %v1103 = vpop.permute.xlu0 %1102
  %v1104 = vsel %vm295, %v1103, 0
  %1106 = vmatpush.msra.mxu0 0.0
  %1107 = vmatpush.msra.mxu0 0.0
  %1108 = vmatpush.msra.mxu0 0.0
  %1109 = vmatpush.msra.mxu0 0.0
  %1110 = vmatpush.msra.mxu0 0.0
  %1111 = vmatpush.msra.mxu0 0.0
  %1112 = vmatpush.msra.mxu0 0.0
  %1113 = vmatpush.msra.mxu0 0.0
  %1114 = vmatpush.msra.mxu0 0.0
  %1115 = vmatpush.msra.mxu0 0.0
  %1116 = vmatpush.msra.mxu0 0.0
  %1117 = vmatpush.msra.mxu0 0.0
  %1118 = vmatpush.msra.mxu0 %v294
  %1119 = vmatpush.msra.mxu0 %v293
  %1120 = vmatpush.msra.mxu0 %v292
  %1121 = vmatpush.msra.mxu0 %v291
  %1122 = vmatmul.f32.gmra.mxu0 %v1104
  %v1123 = vpop.f32.mrf.mxu0
  %v1124 = vadd.f32 0.0, %v1123
  %1125 = vdwg.mxu0
  %v1127 = vrot.slane %v1124, 5
  %v1129 = vadd.f32 %v290, %v1127
  %v1130 = vxor.u32 %v1129, 2147483648
  %v1131 = vmul.f32 %v1130, 1.442695
  %v1132 = vpow.pop %v1131
  %v1133 = vadd.f32 %v1132, 1.0
  %v1134 = vrcp.pop %v1133
  %v1135 = vmul.f32 %v1133, %v1134
  %v1136 = vsub.f32 1.0, %v1135
  %v1137 = vmul.f32 %v1134, %v1136
  %v1138 = vadd.f32 %v1134, %v1137
  %vm1139 = vweird.f32 %v1133
  %vm1140 = vweird.f32 %v1134
  %vm1141 = vmor %vm1139, %vm1140
  %v1142 = vsel %vm1141, %v1134, %v1138
  %v1143 = vand.u32 2147483647, %v1133
  %vm1144 = vcmp.eq.f32.partialorder %v1143, 8.507059e+37
  %v1145 = vand.u32 %v1133, 2147483648
  %v1146 = vor.u32 1.1754944e-38, %v1145
  %v1147 = vsel %vm1144, %v1146, %v1142
  %v1148 = vmul.f32 1.0, %v1147
  %v1149 = vtanh.pop %v1129
  %v1151 = vrot.slane %v1089, 7
  %v1153 = vmul.f32 %v1148, %v1151
  %1155 = vrot.lane.b32.xlu0 %v1149, 32
  %v1156 = vpop.permute.xlu0 %1155
  %v1158 = vmul.f32 %v1148, %v1156
  %1160 = vrot.lane.b32.xlu0 %v1158, 32
  %v1161 = vpop.permute.xlu0 %1160
  %v1163 = vadd.f32 %v1153, %v1161
  %v1164 = vtanh.pop %v1163
  %1166 = vrot.lane.b32.xlu0 %v1164, 32
  %v1167 = vpop.permute.xlu0 %1166
  %v1169 = vmul.f32 %v1148, %v1167
  %1171 = vrot.lane.b32.xlu0 %v1169, 64
  %v1172 = vpop.permute.xlu0 %1171
  %1174 = vst.msk [vmem:[#allocation2 + $0x8] sm:$0x8] %vm583, %v1172
  %v1175 = vrot.slane %v1169, 3
  %1176 = vrot.lane.b32.xlu0 %v1175, 64
  %v1177 = vpop.permute.xlu0 %1176
  %v1178 = vsel %vm295, %v1177, 0
  %1180 = vmatpush.msra.mxu0 0.0
  %1181 = vmatpush.msra.mxu0 0.0
  %1182 = vmatpush.msra.mxu0 0.0
  %1183 = vmatpush.msra.mxu0 0.0
  %1184 = vmatpush.msra.mxu0 0.0
  %1185 = vmatpush.msra.mxu0 0.0
  %1186 = vmatpush.msra.mxu0 0.0
  %1187 = vmatpush.msra.mxu0 0.0
  %1188 = vmatpush.msra.mxu0 0.0
  %1189 = vmatpush.msra.mxu0 0.0
  %1190 = vmatpush.msra.mxu0 0.0
  %1191 = vmatpush.msra.mxu0 0.0
  %1192 = vmatpush.msra.mxu0 %v294
  %1193 = vmatpush.msra.mxu0 %v293
  %1194 = vmatpush.msra.mxu0 %v292
  %1195 = vmatpush.msra.mxu0 %v291
  %1196 = vmatmul.f32.gmra.mxu0 %v1178
  %v1197 = vpop.f32.mrf.mxu0
  %v1198 = vadd.f32 0.0, %v1197
  %1199 = vdwg.mxu0
  %v1201 = vrot.slane %v1198, 4
  %v1203 = vadd.f32 %v290, %v1201
  %v1204 = vxor.u32 %v1203, 2147483648
  %v1205 = vmul.f32 %v1204, 1.442695
  %v1206 = vpow.pop %v1205
  %v1207 = vadd.f32 %v1206, 1.0
  %v1208 = vrcp.pop %v1207
  %v1209 = vmul.f32 %v1207, %v1208
  %v1210 = vsub.f32 1.0, %v1209
  %v1211 = vmul.f32 %v1208, %v1210
  %v1212 = vadd.f32 %v1208, %v1211
  %vm1213 = vweird.f32 %v1207
  %vm1214 = vweird.f32 %v1208
  %vm1215 = vmor %vm1213, %vm1214
  %v1216 = vsel %vm1215, %v1208, %v1212
  %v1217 = vand.u32 2147483647, %v1207
  %vm1218 = vcmp.eq.f32.partialorder %v1217, 8.507059e+37
  %v1219 = vand.u32 %v1207, 2147483648
  %v1220 = vor.u32 1.1754944e-38, %v1219
  %v1221 = vsel %vm1218, %v1220, %v1216
  %v1222 = vmul.f32 1.0, %v1221
  %v1223 = vtanh.pop %v1203
  %v1225 = vrot.slane %v1163, 7
  %v1227 = vmul.f32 %v1222, %v1225
  %1229 = vrot.lane.b32.xlu0 %v1223, 32
  %v1230 = vpop.permute.xlu0 %1229
  %v1232 = vmul.f32 %v1222, %v1230
  %1234 = vrot.lane.b32.xlu0 %v1232, 32
  %v1235 = vpop.permute.xlu0 %1234
  %v1237 = vadd.f32 %v1227, %v1235
  %v1238 = vtanh.pop %v1237
  %1240 = vrot.lane.b32.xlu0 %v1238, 32
  %v1241 = vpop.permute.xlu0 %1240
  %v1243 = vmul.f32 %v1222, %v1241
  %1245 = vrot.lane.b32.xlu0 %v1243, 64
  %v1246 = vpop.permute.xlu0 %1245
  %1248 = vst.msk [vmem:[#allocation2 + $0x8] sm:$0x10] %vm658, %v1246
  %v1249 = vrot.slane %v1243, 4
  %1250 = vrot.lane.b32.xlu0 %v1249, 64
  %v1251 = vpop.permute.xlu0 %1250
  %v1252 = vsel %vm295, %v1251, 0
  %1254 = vmatpush.msra.mxu0 0.0
  %1255 = vmatpush.msra.mxu0 0.0
  %1256 = vmatpush.msra.mxu0 0.0
  %1257 = vmatpush.msra.mxu0 0.0
  %1258 = vmatpush.msra.mxu0 0.0
  %1259 = vmatpush.msra.mxu0 0.0
  %1260 = vmatpush.msra.mxu0 0.0
  %1261 = vmatpush.msra.mxu0 0.0
  %1262 = vmatpush.msra.mxu0 0.0
  %1263 = vmatpush.msra.mxu0 0.0
  %1264 = vmatpush.msra.mxu0 0.0
  %1265 = vmatpush.msra.mxu0 0.0
  %1266 = vmatpush.msra.mxu0 %v294
  %1267 = vmatpush.msra.mxu0 %v293
  %1268 = vmatpush.msra.mxu0 %v292
  %1269 = vmatpush.msra.mxu0 %v291
  %1270 = vmatmul.f32.gmra.mxu0 %v1252
  %v1271 = vpop.f32.mrf.mxu0
  %v1272 = vadd.f32 0.0, %v1271
  %1273 = vdwg.mxu0
  %v1275 = vrot.slane %v1272, 3
  %v1277 = vadd.f32 %v290, %v1275
  %v1278 = vxor.u32 %v1277, 2147483648
  %v1279 = vmul.f32 %v1278, 1.442695
  %v1280 = vpow.pop %v1279
  %v1281 = vadd.f32 %v1280, 1.0
  %v1282 = vrcp.pop %v1281
  %v1283 = vmul.f32 %v1281, %v1282
  %v1284 = vsub.f32 1.0, %v1283
  %v1285 = vmul.f32 %v1282, %v1284
  %v1286 = vadd.f32 %v1282, %v1285
  %vm1287 = vweird.f32 %v1281
  %vm1288 = vweird.f32 %v1282
  %vm1289 = vmor %vm1287, %vm1288
  %v1290 = vsel %vm1289, %v1282, %v1286
  %v1291 = vand.u32 2147483647, %v1281
  %vm1292 = vcmp.eq.f32.partialorder %v1291, 8.507059e+37
  %v1293 = vand.u32 %v1281, 2147483648
  %v1294 = vor.u32 1.1754944e-38, %v1293
  %v1295 = vsel %vm1292, %v1294, %v1290
  %v1296 = vmul.f32 1.0, %v1295
  %v1297 = vtanh.pop %v1277
  %v1299 = vrot.slane %v1237, 7
  %v1301 = vmul.f32 %v1296, %v1299
  %1303 = vrot.lane.b32.xlu0 %v1297, 32
  %v1304 = vpop.permute.xlu0 %1303
  %v1306 = vmul.f32 %v1296, %v1304
  %1308 = vrot.lane.b32.xlu0 %v1306, 32
  %v1309 = vpop.permute.xlu0 %1308
  %v1311 = vadd.f32 %v1301, %v1309
  %v1312 = vtanh.pop %v1311
  %1314 = vrot.lane.b32.xlu0 %v1312, 32
  %v1315 = vpop.permute.xlu0 %1314
  %v1317 = vmul.f32 %v1296, %v1315
  %1319 = vrot.lane.b32.xlu0 %v1317, 64
  %v1320 = vpop.permute.xlu0 %1319
  %1322 = vst.msk [vmem:[#allocation2 + $0x8] sm:$0x20] %vm733, %v1320
  %v1323 = vrot.slane %v1317, 5
  %1324 = vrot.lane.b32.xlu0 %v1323, 64
  %v1325 = vpop.permute.xlu0 %1324
  %v1326 = vsel %vm295, %v1325, 0
  %1328 = vmatpush.msra.mxu0 0.0
  %1329 = vmatpush.msra.mxu0 0.0
  %1330 = vmatpush.msra.mxu0 0.0
  %1331 = vmatpush.msra.mxu0 0.0
  %1332 = vmatpush.msra.mxu0 0.0
  %1333 = vmatpush.msra.mxu0 0.0
  %1334 = vmatpush.msra.mxu0 0.0
  %1335 = vmatpush.msra.mxu0 0.0
  %1336 = vmatpush.msra.mxu0 0.0
  %1337 = vmatpush.msra.mxu0 0.0
  %1338 = vmatpush.msra.mxu0 0.0
  %1339 = vmatpush.msra.mxu0 0.0
  %1340 = vmatpush.msra.mxu0 %v294
  %1341 = vmatpush.msra.mxu0 %v293
  %1342 = vmatpush.msra.mxu0 %v292
  %1343 = vmatpush.msra.mxu0 %v291
  %1344 = vmatmul.f32.gmra.mxu0 %v1326
  %v1345 = vpop.f32.mrf.mxu0
  %v1346 = vadd.f32 0.0, %v1345
  %1347 = vdwg.mxu0
  %v1349 = vrot.slane %v1346, 2
  %v1351 = vadd.f32 %v290, %v1349
  %v1352 = vxor.u32 %v1351, 2147483648
  %v1353 = vmul.f32 %v1352, 1.442695
  %v1354 = vpow.pop %v1353
  %v1355 = vadd.f32 %v1354, 1.0
  %v1356 = vrcp.pop %v1355
  %v1357 = vmul.f32 %v1355, %v1356
  %v1358 = vsub.f32 1.0, %v1357
  %v1359 = vmul.f32 %v1356, %v1358
  %v1360 = vadd.f32 %v1356, %v1359
  %vm1361 = vweird.f32 %v1355
  %vm1362 = vweird.f32 %v1356
  %vm1363 = vmor %vm1361, %vm1362
  %v1364 = vsel %vm1363, %v1356, %v1360
  %v1365 = vand.u32 2147483647, %v1355
  %vm1366 = vcmp.eq.f32.partialorder %v1365, 8.507059e+37
  %v1367 = vand.u32 %v1355, 2147483648
  %v1368 = vor.u32 1.1754944e-38, %v1367
  %v1369 = vsel %vm1366, %v1368, %v1364
  %v1370 = vmul.f32 1.0, %v1369
  %v1371 = vtanh.pop %v1351
  %v1373 = vrot.slane %v1311, 7
  %v1375 = vmul.f32 %v1370, %v1373
  %1377 = vrot.lane.b32.xlu0 %v1371, 32
  %v1378 = vpop.permute.xlu0 %1377
  %v1380 = vmul.f32 %v1370, %v1378
  %1382 = vrot.lane.b32.xlu0 %v1380, 32
  %v1383 = vpop.permute.xlu0 %1382
  %v1385 = vadd.f32 %v1375, %v1383
  %v1386 = vtanh.pop %v1385
  %1388 = vrot.lane.b32.xlu0 %v1386, 32
  %v1389 = vpop.permute.xlu0 %1388
  %v1391 = vmul.f32 %v1370, %v1389
  %1393 = vrot.lane.b32.xlu0 %v1391, 64
  %v1394 = vpop.permute.xlu0 %1393
  %1396 = vst.msk [vmem:[#allocation2 + $0x8] sm:$0x40] %vm808, %v1394
  %v1397 = vrot.slane %v1391, 6
  %1398 = vrot.lane.b32.xlu0 %v1397, 64
  %v1399 = vpop.permute.xlu0 %1398
  %v1400 = vsel %vm295, %v1399, 0
  %1402 = vmatpush.msra.mxu0 0.0
  %1403 = vmatpush.msra.mxu0 0.0
  %1404 = vmatpush.msra.mxu0 0.0
  %1405 = vmatpush.msra.mxu0 0.0
  %1406 = vmatpush.msra.mxu0 0.0
  %1407 = vmatpush.msra.mxu0 0.0
  %1408 = vmatpush.msra.mxu0 0.0
  %1409 = vmatpush.msra.mxu0 0.0
  %1410 = vmatpush.msra.mxu0 0.0
  %1411 = vmatpush.msra.mxu0 0.0
  %1412 = vmatpush.msra.mxu0 0.0
  %1413 = vmatpush.msra.mxu0 0.0
  %1414 = vmatpush.msra.mxu0 %v294
  %1415 = vmatpush.msra.mxu0 %v293
  %1416 = vmatpush.msra.mxu0 %v292
  %1417 = vmatpush.msra.mxu0 %v291
  %1418 = vmatmul.f32.gmra.mxu0 %v1400
  %v1419 = vpop.f32.mrf.mxu0
  %v1420 = vadd.f32 0.0, %v1419
  %1421 = vdwg.mxu0
  %v1423 = vrot.slane %v1420, 1
  %v1425 = vadd.f32 %v290, %v1423
  %v1426 = vxor.u32 %v1425, 2147483648
  %v1427 = vmul.f32 %v1426, 1.442695
  %v1428 = vpow.pop %v1427
  %v1429 = vadd.f32 %v1428, 1.0
  %v1430 = vrcp.pop %v1429
  %v1431 = vmul.f32 %v1429, %v1430
  %v1432 = vsub.f32 1.0, %v1431
  %v1433 = vmul.f32 %v1430, %v1432
  %v1434 = vadd.f32 %v1430, %v1433
  %vm1435 = vweird.f32 %v1429
  %vm1436 = vweird.f32 %v1430
  %vm1437 = vmor %vm1435, %vm1436
  %v1438 = vsel %vm1437, %v1430, %v1434
  %v1439 = vand.u32 2147483647, %v1429
  %vm1440 = vcmp.eq.f32.partialorder %v1439, 8.507059e+37
  %v1441 = vand.u32 %v1429, 2147483648
  %v1442 = vor.u32 1.1754944e-38, %v1441
  %v1443 = vsel %vm1440, %v1442, %v1438
  %v1444 = vmul.f32 1.0, %v1443
  %v1445 = vtanh.pop %v1425
  %v1447 = vrot.slane %v1385, 7
  %v1449 = vmul.f32 %v1444, %v1447
  %1451 = vrot.lane.b32.xlu0 %v1445, 32
  %v1452 = vpop.permute.xlu0 %1451
  %v1454 = vmul.f32 %v1444, %v1452
  %1456 = vrot.lane.b32.xlu0 %v1454, 32
  %v1457 = vpop.permute.xlu0 %1456
  %v1459 = vadd.f32 %v1449, %v1457
  %v1460 = vtanh.pop %v1459
  %1462 = vrot.lane.b32.xlu0 %v1460, 32
  %v1463 = vpop.permute.xlu0 %1462
  %v1465 = vmul.f32 %v1444, %v1463
  %1467 = vrot.lane.b32.xlu0 %v1465, 64
  %v1468 = vpop.permute.xlu0 %1467
  %1470 = vst.msk [vmem:[#allocation2 + $0x8] sm:$0x80] %vm883, %v1468
  %v1471 = vld [vmem:[#allocation2] sm:$0xff]
  %v1472 = vld [vmem:[#allocation2 + $0x8] sm:$0xff]
  %v1473 = vld [vmem:[%s3 + $0x48] sm:$0xff]
  %v1474 = vld [vmem:[%s3 + $0x50] sm:$0xff]
  %v1475 = vld [vmem:[%s3 + $0x58] sm:$0xff]
  %v1476 = vld [vmem:[%s3 + $0x60] sm:$0xff]
  %v1477 = vld [vmem:[%s3 + $0x68] sm:$0xff]
  %v1478 = vld [vmem:[%s3 + $0x70] sm:$0xff]
  %v1480 = vsel %vm36, %v20, 0
  %v1483 = vsel %vm36, %v21, 0
  %1485 = vmatpush.msra.mxu0 0.0
  %1486 = vmatpush.msra.mxu0 0.0
  %1487 = vmatpush.msra.mxu0 0.0
  %1488 = vmatpush.msra.mxu0 0.0
  %1489 = vmatpush.msra.mxu0 0.0
  %1490 = vmatpush.msra.mxu0 0.0
  %1491 = vmatpush.msra.mxu0 0.0
  %1492 = vmatpush.msra.mxu0 0.0
  %1493 = vmatpush.msra.mxu0 0.0
  %1494 = vmatpush.msra.mxu0 0.0
  %1495 = vmatpush.msra.mxu0 0.0
  %1496 = vmatpush.msra.mxu0 0.0
  %1497 = vmatpush.msra.mxu0 0.0
  %1498 = vmatpush.msra.mxu0 0.0
  %1499 = vmatpush.msra.mxu0 %v1478
  %1500 = vmatpush.msra.mxu0 %v1477
  %1501 = vmatmul.f32.gmra.mxu0 %v1480
  %v1502 = vpop.f32.mrf.mxu0
  %v1503 = vadd.f32 0.0, %v1502
  %1504 = vmatmul.f32.gmra.mxu0 %v1483
  %v1505 = vpop.f32.mrf.mxu0
  %v1506 = vadd.f32 0.0, %v1505
  %1507 = vdwg.mxu0
  %v1509 = vsel %vm295, %v1471, 0
  %v1512 = vsel %vm295, %v1472, 0
  %1514 = vmatpush.msra.mxu0 0.0
  %1515 = vmatpush.msra.mxu0 0.0
  %1516 = vmatpush.msra.mxu0 0.0
  %1517 = vmatpush.msra.mxu0 0.0
  %1518 = vmatpush.msra.mxu0 0.0
  %1519 = vmatpush.msra.mxu0 0.0
  %1520 = vmatpush.msra.mxu0 0.0
  %1521 = vmatpush.msra.mxu0 0.0
  %1522 = vmatpush.msra.mxu0 0.0
  %1523 = vmatpush.msra.mxu0 0.0
  %1524 = vmatpush.msra.mxu0 0.0
  %1525 = vmatpush.msra.mxu0 0.0
  %1526 = vmatpush.msra.mxu0 %v1476
  %1527 = vmatpush.msra.mxu0 %v1475
  %1528 = vmatpush.msra.mxu0 %v1474
  %1529 = vmatpush.msra.mxu0 %v1473
  %1530 = vmatmul.f32.gmra.mxu0 %v1509
  %v1531 = vpop.f32.mrf.mxu0
  %v1532 = vadd.f32 %v1503, %v1531
  %1533 = vmatmul.f32.gmra.mxu0 %v1512
  %v1534 = vpop.f32.mrf.mxu0
  %v1535 = vadd.f32 %v1506, %v1534
  %1536 = vdwg.mxu0
  %v1537 = vld [vmem:[%s3 + $0x78] sm:$0x1]
  %v1538 = vperm.slane %v1537, 0
  %v1539 = vadd.f32 %v1532, %v1538
  %v1540 = vadd.f32 %v1535, %v1538
  %1542 = vset.pattern.permute.xlu0 0
  %1543 = vperm.xlu0 %1542, %v1539
  %v1544 = vpop.permute.xlu0 %1543
  %1547 = vset.pattern.permute.xlu0 0
  %1548 = vperm.xlu0 %1547, %v1540
  %v1549 = vpop.permute.xlu0 %1548
  %v1551 = vmul.f32 %v1471, %v1544
  %v1552 = vmul.f32 %v1472, %v1549
  %1553 = vset.pattern.permute.xlu0 1
  %1554 = vperm.xlu0 %1553, %v1539
  %v1555 = vpop.permute.xlu0 %1554
  %1557 = vset.pattern.permute.xlu0 1
  %1558 = vperm.xlu0 %1557, %v1540
  %v1559 = vpop.permute.xlu0 %1558
  %v1561 = vmul.f32 %v1471, %v1555
  %v1562 = vmul.f32 %v1472, %v1559
  %v1563 = vld [vmem:[%s3 + $0x80] sm:$0xff]
  %v1564 = vld [vmem:[%s3 + $0x88] sm:$0xff]
  %v1565 = vld [vmem:[%s3 + $0x90] sm:$0xff]
  %v1566 = vld [vmem:[%s3 + $0x98] sm:$0xff]
  %1569 = vrot.lane.b32.xlu0 %v1561, 112
  %v1570 = vpop.permute.xlu0 %1569
  %1571 = vrot.lane.b32.xlu0 %v1562, 112
  %v1572 = vpop.permute.xlu0 %1571
  %v1573 = vsel %vm36, %v1570, 0
  %v1575 = vsel %vm36, %v1572, 0
  %1577 = vmatpush.msra.mxu0 0.0
  %1578 = vmatpush.msra.mxu0 0.0
  %1579 = vmatpush.msra.mxu0 0.0
  %1580 = vmatpush.msra.mxu0 0.0
  %1581 = vmatpush.msra.mxu0 0.0
  %1582 = vmatpush.msra.mxu0 0.0
  %1583 = vmatpush.msra.mxu0 0.0
  %1584 = vmatpush.msra.mxu0 0.0
  %1585 = vmatpush.msra.mxu0 0.0
  %1586 = vmatpush.msra.mxu0 0.0
  %1587 = vmatpush.msra.mxu0 0.0
  %1588 = vmatpush.msra.mxu0 0.0
  %1589 = vmatpush.msra.mxu0 0.0
  %1590 = vmatpush.msra.mxu0 0.0
  %1591 = vmatpush.msra.mxu0 %v1566
  %1592 = vmatpush.msra.mxu0 %v1565
  %1593 = vmatmul.f32.gmra.mxu0 %v1573
  %v1594 = vpop.f32.mrf.mxu0
  %v1595 = vadd.f32 0.0, %v1594
  %1596 = vmatmul.f32.gmra.mxu0 %v1575
  %v1597 = vpop.f32.mrf.mxu0
  %v1598 = vadd.f32 0.0, %v1597
  %1599 = vdwg.mxu0
  %v1601 = vsel %vm36, %v1551, 0
  %v1604 = vsel %vm36, %v1552, 0
  %1606 = vmatpush.msra.mxu0 0.0
  %1607 = vmatpush.msra.mxu0 0.0
  %1608 = vmatpush.msra.mxu0 0.0
  %1609 = vmatpush.msra.mxu0 0.0
  %1610 = vmatpush.msra.mxu0 0.0
  %1611 = vmatpush.msra.mxu0 0.0
  %1612 = vmatpush.msra.mxu0 0.0
  %1613 = vmatpush.msra.mxu0 0.0
  %1614 = vmatpush.msra.mxu0 0.0
  %1615 = vmatpush.msra.mxu0 0.0
  %1616 = vmatpush.msra.mxu0 0.0
  %1617 = vmatpush.msra.mxu0 0.0
  %1618 = vmatpush.msra.mxu0 0.0
  %1619 = vmatpush.msra.mxu0 0.0
  %1620 = vmatpush.msra.mxu0 %v1564
  %1621 = vmatpush.msra.mxu0 %v1563
  %1622 = vmatmul.f32.gmra.mxu0 %v1601
  %v1623 = vpop.f32.mrf.mxu0
  %v1624 = vadd.f32 %v1595, %v1623
  %1625 = vmatmul.f32.gmra.mxu0 %v1604
  %v1626 = vpop.f32.mrf.mxu0
  %v1627 = vadd.f32 %v1598, %v1626
  %1628 = vdwg.mxu0
  %v1629 = vld [vmem:[%s3 + $0xa0] sm:$0x1]
  %v1630 = vperm.slane %v1629, 0
  %v1631 = vadd.f32 %v1624, %v1630
  %v1632 = vadd.f32 %v1627, %v1630
  %v1633 = vmul.f32 %v1631, %v1631
  %v1634 = vmul.f32 %v1632, %v1632
  %v1635 = vsel %vm36, %v1633, 0.0
  %1636 = vadd.xlane.f32.xlu0 %v1635
  %v1637 = vpop.xlane.xlu0 %1636
  %v1638 = vsel %vm36, %v1634, 0.0
  %1639 = vadd.xlane.f32.xlu0 %v1638
  %v1640 = vpop.xlane.xlu0 %1639
  %v1641 = vrsqrt.pop %v1637
  %v1642 = vmul.f32 %v1641, %v1637
  %v1643 = vmul.f32 %v1642, %v1641
  %v1644 = vmul.f32 0.5, %v1643
  %v1645 = vsub.f32 1.5, %v1644
  %v1646 = vmul.f32 %v1641, %v1645
  %vm1647 = vweird.f32 %v1637
  %vm1648 = vweird.f32 %v1641
  %vm1649 = vmor %vm1647, %vm1648
  %v1650 = vsel %vm1649, %v1641, %v1646
  %v1651 = vrsqrt.pop %v1640
  %v1652 = vmul.f32 %v1651, %v1640
  %v1653 = vmul.f32 %v1652, %v1651
  %v1654 = vmul.f32 0.5, %v1653
  %v1655 = vsub.f32 1.5, %v1654
  %v1656 = vmul.f32 %v1651, %v1655
  %vm1657 = vweird.f32 %v1640
  %vm1658 = vweird.f32 %v1651
  %vm1659 = vmor %vm1657, %vm1658
  %v1660 = vsel %vm1659, %v1651, %v1656
  %v1661 = vmin.f32 %v1650, 1.0
  %v1662 = vmin.f32 %v1660, 1.0
  %v1663 = vmul.f32 %v1661, 0.5
  %v1664 = vmul.f32 %v1662, 0.5
  %v1665 = vmul.f32 %v1631, %v1663
  %v1666 = vmul.f32 %v1632, %v1664
  %v1667 = vmul.f32 %v20, %v20
  %v1668 = vmul.f32 %v21, %v21
  %v1669 = vsel %vm36, %v1667, 0.0
  %1670 = vadd.xlane.f32.xlu0 %v1669
  %v1671 = vpop.xlane.xlu0 %1670
  %v1672 = vsel %vm36, %v1668, 0.0
  %1673 = vadd.xlane.f32.xlu0 %v1672
  %v1674 = vpop.xlane.xlu0 %1673
  %v1675 = vrsqrt.pop %v1671
  %v1676 = vmul.f32 %v1675, %v1671
  %v1677 = vmul.f32 %v1676, %v1675
  %v1678 = vmul.f32 0.5, %v1677
  %v1679 = vsub.f32 1.5, %v1678
  %v1680 = vmul.f32 %v1675, %v1679
  %v1681 = vmul.f32 %v1671, %v1680
  %vm1682 = vcmp.eq.f32.partialorder %v1671, inf
  %v1683 = vsel %vm1682, %v1671, %v1681
  %vm1684 = vcmp.eq.f32.partialorder %v1671, 0.0
  %v1685 = vand.u32 %v1671, 2147483648
  %v1686 = vsel %vm1684, %v1685, %v1683
  %v1687 = vrsqrt.pop %v1674
  %v1688 = vmul.f32 %v1687, %v1674
  %v1689 = vmul.f32 %v1688, %v1687
  %v1690 = vmul.f32 0.5, %v1689
  %v1691 = vsub.f32 1.5, %v1690
  %v1692 = vmul.f32 %v1687, %v1691
  %v1693 = vmul.f32 %v1674, %v1692
  %vm1694 = vcmp.eq.f32.partialorder %v1674, inf
  %v1695 = vsel %vm1694, %v1674, %v1693
  %vm1696 = vcmp.eq.f32.partialorder %v1674, 0.0
  %v1697 = vand.u32 %v1674, 2147483648
  %v1698 = vsel %vm1696, %v1697, %v1695
  %v1699 = vmul.f32 %v1665, %v1686
  %v1700 = vmul.f32 %v1666, %v1698
  %v1701 = vadd.f32 %v20, %v1699
  %v1702 = vadd.f32 %v21, %v1700
  %v1703 = vld [vmem:[%s3 + $0xf8] sm:$0xff]
  %v1704 = vld [vmem:[%s3 + $0x100] sm:$0xff]
  %v1706 = vsel %vm36, %v1703, 0
  %v1709 = vsel %vm36, %v1704, 0
  %1711 = vmatpush.msra.mxu0 0.0
  %1712 = vmatpush.msra.mxu0 0.0
  %1713 = vmatpush.msra.mxu0 0.0
  %1714 = vmatpush.msra.mxu0 0.0
  %1715 = vmatpush.msra.mxu0 0.0
  %1716 = vmatpush.msra.mxu0 0.0
  %1717 = vmatpush.msra.mxu0 0.0
  %1718 = vmatpush.msra.mxu0 0.0
  %1719 = vmatpush.msra.mxu0 0.0
  %1720 = vmatpush.msra.mxu0 0.0
  %1721 = vmatpush.msra.mxu0 0.0
  %1722 = vmatpush.msra.mxu0 0.0
  %1723 = vmatpush.msra.mxu0 0.0
  %1724 = vmatpush.msra.mxu0 0.0
  %1725 = vmatpush.msra.mxu0 %v1702
  %1726 = vmatpush.msra.mxu0 %v1701
  %1727 = vmatmul.f32.gmra.mxu0 %v1706
  %v1728 = vpop.f32.mrf.mxu0
  %v1729 = vadd.f32 0.0, %v1728
  %1730 = vmatmul.f32.gmra.mxu0 %v1709
  %v1731 = vpop.f32.mrf.mxu0
  %v1732 = vadd.f32 0.0, %v1731
  %1733 = vdwg.mxu0
  %v1734 = vld [vmem:[%s4] sm:$0xff]
  %v1735 = vld [vmem:[%s4 + $0x8] sm:$0xff]
  %v1736 = vld [vmem:[%s4 + $0x10] sm:$0xff]
  %v1737 = vld [vmem:[%s4 + $0x18] sm:$0xff]
  %s1738 = scalar_lea.vmem %s4, 160
  %v1739 = vld [vmem:[%s1738] ss:$8 sm:$0x3]
  %v1741 = vperm.slane %v1739, 0
  %v1742 = vperm.slane %v1739, 1
  %v1746 = vsel %vm36, %v1729, 0
  %v1749 = vsel %vm36, %v1732, 0
  %1751 = vmatpush.msra.mxu0 0.0
  %1752 = vmatpush.msra.mxu0 0.0
  %1753 = vmatpush.msra.mxu0 0.0
  %1754 = vmatpush.msra.mxu0 0.0
  %1755 = vmatpush.msra.mxu0 0.0
  %1756 = vmatpush.msra.mxu0 0.0
  %1757 = vmatpush.msra.mxu0 0.0
  %1758 = vmatpush.msra.mxu0 0.0
  %1759 = vmatpush.msra.mxu0 0.0
  %1760 = vmatpush.msra.mxu0 0.0
  %1761 = vmatpush.msra.mxu0 0.0
  %1762 = vmatpush.msra.mxu0 0.0
  %1763 = vmatpush.msra.mxu0 0.0
  %1764 = vmatpush.msra.mxu0 0.0
  %1765 = vmatpush.msra.mxu0 %v1736
  %1766 = vmatpush.msra.mxu0 %v1734
  %1767 = vmatmul.f32.gmra.mxu0 %v1746
  %v1768 = vpop.f32.mrf.mxu0
  %v1769 = vadd.f32 %v1741, %v1768
  %1770 = vmatmul.f32.gmra.mxu0 %v1749
  %v1771 = vpop.f32.mrf.mxu0
  %v1772 = vadd.f32 %v1741, %v1771
  %1773 = vdwg.mxu0
  %1774 = vmatpush.msra.mxu0 0.0
  %1775 = vmatpush.msra.mxu0 0.0
  %1776 = vmatpush.msra.mxu0 0.0
  %1777 = vmatpush.msra.mxu0 0.0
  %1778 = vmatpush.msra.mxu0 0.0
  %1779 = vmatpush.msra.mxu0 0.0
  %1780 = vmatpush.msra.mxu0 0.0
  %1781 = vmatpush.msra.mxu0 0.0
  %1782 = vmatpush.msra.mxu0 0.0
  %1783 = vmatpush.msra.mxu0 0.0
  %1784 = vmatpush.msra.mxu0 0.0
  %1785 = vmatpush.msra.mxu0 0.0
  %1786 = vmatpush.msra.mxu0 0.0
  %1787 = vmatpush.msra.mxu0 0.0
  %1788 = vmatpush.msra.mxu0 %v1737
  %1789 = vmatpush.msra.mxu0 %v1735
  %1790 = vmatmul.f32.gmra.mxu0 %v1746
  %v1791 = vpop.f32.mrf.mxu0
  %v1792 = vadd.f32 %v1742, %v1791
  %1793 = vmatmul.f32.gmra.mxu0 %v1749
  %v1794 = vpop.f32.mrf.mxu0
  %v1795 = vadd.f32 %v1742, %v1794
  %1796 = vdwg.mxu0
  %v1797 = vld [vmem:[%s4 + $0x20] sm:$0xff]
  %v1798 = vld [vmem:[%s4 + $0x28] sm:$0xff]
  %v1799 = vld [vmem:[%s4 + $0x30] sm:$0xff]
  %v1800 = vld [vmem:[%s4 + $0x38] sm:$0xff]
  %v1801 = vld [vmem:[%s4 + $0x40] sm:$0xff]
  %v1802 = vld [vmem:[%s4 + $0x48] sm:$0xff]
  %v1803 = vld [vmem:[%s4 + $0x50] sm:$0xff]
  %v1804 = vld [vmem:[%s4 + $0x58] sm:$0xff]
  %v1805 = vld [vmem:[%s4 + $0x60] sm:$0xff]
  %v1806 = vld [vmem:[%s4 + $0x68] sm:$0xff]
  %v1807 = vld [vmem:[%s4 + $0x70] sm:$0xff]
  %v1808 = vld [vmem:[%s4 + $0x78] sm:$0xff]
  %v1809 = vld [vmem:[%s4 + $0x80] sm:$0xff]
  %v1810 = vld [vmem:[%s4 + $0x88] sm:$0xff]
  %v1811 = vld [vmem:[%s4 + $0x90] sm:$0xff]
  %v1812 = vld [vmem:[%s4 + $0x98] sm:$0xff]
  %s1813 = scalar_lea.vmem %s4, 176
  %v1814 = vld [vmem:[%s1813] ss:$8 sm:$0x3]
  %vm1815 = vcmask 523264
  %v1816 = vsel %vm1815, 0.0, 0
  %1818 = vmatpush.msra.mxu0 0.0
  %1819 = vmatpush.msra.mxu0 0.0
  %1820 = vmatpush.msra.mxu0 0.0
  %1821 = vmatpush.msra.mxu0 0.0
  %1822 = vmatpush.msra.mxu0 0.0
  %1823 = vmatpush.msra.mxu0 0.0
  %1824 = vmatpush.msra.mxu0 0.0
  %1825 = vmatpush.msra.mxu0 0.0
  %1826 = vmatpush.msra.mxu0 %v1811
  %1827 = vmatpush.msra.mxu0 %v1809
  %1828 = vmatpush.msra.mxu0 %v1807
  %1829 = vmatpush.msra.mxu0 %v1805
  %1830 = vmatpush.msra.mxu0 %v1803
  %1831 = vmatpush.msra.mxu0 %v1801
  %1832 = vmatpush.msra.mxu0 %v1799
  %1833 = vmatpush.msra.mxu0 %v1797
  %1834 = vmatmul.f32.gmra.mxu0 %v1816
  %v1835 = vpop.f32.mrf.mxu0
  %v1836 = vadd.f32 %v1769, %v1835
  %1837 = vdwg.mxu0
  %1838 = vmatpush.msra.mxu0 0.0
  %1839 = vmatpush.msra.mxu0 0.0
  %1840 = vmatpush.msra.mxu0 0.0
  %1841 = vmatpush.msra.mxu0 0.0
  %1842 = vmatpush.msra.mxu0 0.0
  %1843 = vmatpush.msra.mxu0 0.0
  %1844 = vmatpush.msra.mxu0 0.0
  %1845 = vmatpush.msra.mxu0 0.0
  %1846 = vmatpush.msra.mxu0 %v1812
  %1847 = vmatpush.msra.mxu0 %v1810
  %1848 = vmatpush.msra.mxu0 %v1808
  %1849 = vmatpush.msra.mxu0 %v1806
  %1850 = vmatpush.msra.mxu0 %v1804
  %1851 = vmatpush.msra.mxu0 %v1802
  %1852 = vmatpush.msra.mxu0 %v1800
  %1853 = vmatpush.msra.mxu0 %v1798
  %1854 = vmatmul.f32.gmra.mxu0 %v1816
  %v1855 = vpop.f32.mrf.mxu0
  %v1856 = vadd.f32 %v1792, %v1855
  %1857 = vdwg.mxu0
  %v1858 = vxor.u32 %v1836, 2147483648
  %v1859 = vxor.u32 %v1856, 2147483648
  %v1860 = vmul.f32 %v1858, 1.442695
  %v1861 = vpow.pop %v1860
  %v1862 = vmul.f32 %v1859, 1.442695
  %v1863 = vpow.pop %v1862
  %v1864 = vadd.f32 %v1861, 1.0
  %v1865 = vadd.f32 %v1863, 1.0
  %v1866 = vrcp.pop %v1864
  %v1867 = vmul.f32 %v1864, %v1866
  %v1868 = vsub.f32 1.0, %v1867
  %v1869 = vmul.f32 %v1866, %v1868
  %v1870 = vadd.f32 %v1866, %v1869
  %vm1871 = vweird.f32 %v1864
  %vm1872 = vweird.f32 %v1866
  %vm1873 = vmor %vm1871, %vm1872
  %v1874 = vsel %vm1873, %v1866, %v1870
  %v1875 = vand.u32 2147483647, %v1864
  %vm1876 = vcmp.eq.f32.partialorder %v1875, 8.507059e+37
  %v1877 = vand.u32 %v1864, 2147483648
  %v1878 = vor.u32 1.1754944e-38, %v1877
  %v1879 = vsel %vm1876, %v1878, %v1874
  %v1880 = vmul.f32 1.0, %v1879
  %v1881 = vrcp.pop %v1865
  %v1882 = vmul.f32 %v1865, %v1881
  %v1883 = vsub.f32 1.0, %v1882
  %v1884 = vmul.f32 %v1881, %v1883
  %v1885 = vadd.f32 %v1881, %v1884
  %vm1886 = vweird.f32 %v1865
  %vm1887 = vweird.f32 %v1881
  %vm1888 = vmor %vm1886, %vm1887
  %v1889 = vsel %vm1888, %v1881, %v1885
  %v1890 = vand.u32 2147483647, %v1865
  %vm1891 = vcmp.eq.f32.partialorder %v1890, 8.507059e+37
  %v1892 = vand.u32 %v1865, 2147483648
  %v1893 = vor.u32 1.1754944e-38, %v1892
  %v1894 = vsel %vm1891, %v1893, %v1889
  %v1895 = vmul.f32 1.0, %v1894
  %v1896 = vtanh.pop %v1856
  %v1897 = vmul.f32 %v1880, 0.0
  %1899 = vrot.lane.b32.xlu0 %v1896, 64
  %v1900 = vpop.permute.xlu0 %1899
  %v1902 = vmul.f32 %v1880, %v1900
  %1904 = vrot.lane.b32.xlu0 %v1902, 64
  %v1905 = vpop.permute.xlu0 %1904
  %v1907 = vadd.f32 %v1897, %v1905
  %v1908 = vtanh.pop %v1907
  %1910 = vrot.lane.b32.xlu0 %v1908, 64
  %v1911 = vpop.permute.xlu0 %1910
  %v1913 = vmul.f32 %v1895, %v1911
  %v1916 = vrot.slane %v1769, 2
  %v1917 = vrot.slane %v1792, 2
  %v1921 = vsel %vm1815, %v1913, 0
  %1923 = vmatpush.msra.mxu0 0.0
  %1924 = vmatpush.msra.mxu0 0.0
  %1925 = vmatpush.msra.mxu0 0.0
  %1926 = vmatpush.msra.mxu0 0.0
  %1927 = vmatpush.msra.mxu0 0.0
  %1928 = vmatpush.msra.mxu0 0.0
  %1929 = vmatpush.msra.mxu0 0.0
  %1930 = vmatpush.msra.mxu0 0.0
  %1931 = vmatpush.msra.mxu0 %v1811
  %1932 = vmatpush.msra.mxu0 %v1809
  %1933 = vmatpush.msra.mxu0 %v1807
  %1934 = vmatpush.msra.mxu0 %v1805
  %1935 = vmatpush.msra.mxu0 %v1803
  %1936 = vmatpush.msra.mxu0 %v1801
  %1937 = vmatpush.msra.mxu0 %v1799
  %1938 = vmatpush.msra.mxu0 %v1797
  %1939 = vmatmul.f32.gmra.mxu0 %v1921
  %v1940 = vpop.f32.mrf.mxu0
  %v1941 = vadd.f32 %v1916, %v1940
  %1942 = vdwg.mxu0
  %1943 = vmatpush.msra.mxu0 0.0
  %1944 = vmatpush.msra.mxu0 0.0
  %1945 = vmatpush.msra.mxu0 0.0
  %1946 = vmatpush.msra.mxu0 0.0
  %1947 = vmatpush.msra.mxu0 0.0
  %1948 = vmatpush.msra.mxu0 0.0
  %1949 = vmatpush.msra.mxu0 0.0
  %1950 = vmatpush.msra.mxu0 0.0
  %1951 = vmatpush.msra.mxu0 %v1812
  %1952 = vmatpush.msra.mxu0 %v1810
  %1953 = vmatpush.msra.mxu0 %v1808
  %1954 = vmatpush.msra.mxu0 %v1806
  %1955 = vmatpush.msra.mxu0 %v1804
  %1956 = vmatpush.msra.mxu0 %v1802
  %1957 = vmatpush.msra.mxu0 %v1800
  %1958 = vmatpush.msra.mxu0 %v1798
  %1959 = vmatmul.f32.gmra.mxu0 %v1921
  %v1960 = vpop.f32.mrf.mxu0
  %v1961 = vadd.f32 %v1917, %v1960
  %1962 = vdwg.mxu0
  %v1964 = vperm.slane %v1814, 0
  %v1965 = vperm.slane %v1814, 1
  %v1968 = vadd.f32 %v1941, %v1964
  %v1969 = vadd.f32 %v1961, %v1965
  %v1970 = vxor.u32 %v1968, 2147483648
  %v1971 = vxor.u32 %v1969, 2147483648
  %v1972 = vmul.f32 %v1970, 1.442695
  %v1973 = vpow.pop %v1972
  %v1974 = vmul.f32 %v1971, 1.442695
  %v1975 = vpow.pop %v1974
  %v1976 = vadd.f32 %v1973, 1.0
  %v1977 = vadd.f32 %v1975, 1.0
  %v1978 = vrcp.pop %v1976
  %v1979 = vmul.f32 %v1976, %v1978
  %v1980 = vsub.f32 1.0, %v1979
  %v1981 = vmul.f32 %v1978, %v1980
  %v1982 = vadd.f32 %v1978, %v1981
  %vm1983 = vweird.f32 %v1976
  %vm1984 = vweird.f32 %v1978
  %vm1985 = vmor %vm1983, %vm1984
  %v1986 = vsel %vm1985, %v1978, %v1982
  %v1987 = vand.u32 2147483647, %v1976
  %vm1988 = vcmp.eq.f32.partialorder %v1987, 8.507059e+37
  %v1989 = vand.u32 %v1976, 2147483648
  %v1990 = vor.u32 1.1754944e-38, %v1989
  %v1991 = vsel %vm1988, %v1990, %v1986
  %v1992 = vmul.f32 1.0, %v1991
  %v1993 = vrcp.pop %v1977
  %v1994 = vmul.f32 %v1977, %v1993
  %v1995 = vsub.f32 1.0, %v1994
  %v1996 = vmul.f32 %v1993, %v1995
  %v1997 = vadd.f32 %v1993, %v1996
  %vm1998 = vweird.f32 %v1977
  %vm1999 = vweird.f32 %v1993
  %vm2000 = vmor %vm1998, %vm1999
  %v2001 = vsel %vm2000, %v1993, %v1997
  %v2002 = vand.u32 2147483647, %v1977
  %vm2003 = vcmp.eq.f32.partialorder %v2002, 8.507059e+37
  %v2004 = vand.u32 %v1977, 2147483648
  %v2005 = vor.u32 1.1754944e-38, %v2004
  %v2006 = vsel %vm2003, %v2005, %v2001
  %v2007 = vmul.f32 1.0, %v2006
  %v2008 = vtanh.pop %v1969
  %v2009 = vmul.f32 %v1992, %v1907
  %2011 = vrot.lane.b32.xlu0 %v2008, 64
  %v2012 = vpop.permute.xlu0 %2011
  %v2014 = vmul.f32 %v1992, %v2012
  %2016 = vrot.lane.b32.xlu0 %v2014, 64
  %v2017 = vpop.permute.xlu0 %2016
  %v2019 = vadd.f32 %v2009, %v2017
  %v2020 = vtanh.pop %v2019
  %2022 = vrot.lane.b32.xlu0 %v2020, 64
  %v2023 = vpop.permute.xlu0 %2022
  %v2025 = vmul.f32 %v2007, %v2023
  %v2026 = vrot.slane %v1769, 4
  %v2027 = vrot.slane %v1792, 4
  %v2031 = vsel %vm1815, %v2025, 0
  %2033 = vmatpush.msra.mxu0 0.0
  %2034 = vmatpush.msra.mxu0 0.0
  %2035 = vmatpush.msra.mxu0 0.0
  %2036 = vmatpush.msra.mxu0 0.0
  %2037 = vmatpush.msra.mxu0 0.0
  %2038 = vmatpush.msra.mxu0 0.0
  %2039 = vmatpush.msra.mxu0 0.0
  %2040 = vmatpush.msra.mxu0 0.0
  %2041 = vmatpush.msra.mxu0 %v1811
  %2042 = vmatpush.msra.mxu0 %v1809
  %2043 = vmatpush.msra.mxu0 %v1807
  %2044 = vmatpush.msra.mxu0 %v1805
  %2045 = vmatpush.msra.mxu0 %v1803
  %2046 = vmatpush.msra.mxu0 %v1801
  %2047 = vmatpush.msra.mxu0 %v1799
  %2048 = vmatpush.msra.mxu0 %v1797
  %2049 = vmatmul.f32.gmra.mxu0 %v2031
  %v2050 = vpop.f32.mrf.mxu0
  %v2051 = vadd.f32 %v2026, %v2050
  %2052 = vdwg.mxu0
  %2053 = vmatpush.msra.mxu0 0.0
  %2054 = vmatpush.msra.mxu0 0.0
  %2055 = vmatpush.msra.mxu0 0.0
  %2056 = vmatpush.msra.mxu0 0.0
  %2057 = vmatpush.msra.mxu0 0.0
  %2058 = vmatpush.msra.mxu0 0.0
  %2059 = vmatpush.msra.mxu0 0.0
  %2060 = vmatpush.msra.mxu0 0.0
  %2061 = vmatpush.msra.mxu0 %v1812
  %2062 = vmatpush.msra.mxu0 %v1810
  %2063 = vmatpush.msra.mxu0 %v1808
  %2064 = vmatpush.msra.mxu0 %v1806
  %2065 = vmatpush.msra.mxu0 %v1804
  %2066 = vmatpush.msra.mxu0 %v1802
  %2067 = vmatpush.msra.mxu0 %v1800
  %2068 = vmatpush.msra.mxu0 %v1798
  %2069 = vmatmul.f32.gmra.mxu0 %v2031
  %v2070 = vpop.f32.mrf.mxu0
  %v2071 = vadd.f32 %v2027, %v2070
  %2072 = vdwg.mxu0
  %v2073 = vadd.f32 %v2051, %v1964
  %v2074 = vadd.f32 %v2071, %v1965
  %v2075 = vxor.u32 %v2073, 2147483648
  %v2076 = vxor.u32 %v2074, 2147483648
  %v2077 = vmul.f32 %v2075, 1.442695
  %v2078 = vpow.pop %v2077
  %v2079 = vmul.f32 %v2076, 1.442695
  %v2080 = vpow.pop %v2079
  %v2081 = vadd.f32 %v2078, 1.0
  %v2082 = vadd.f32 %v2080, 1.0
  %v2083 = vrcp.pop %v2081
  %v2084 = vmul.f32 %v2081, %v2083
  %v2085 = vsub.f32 1.0, %v2084
  %v2086 = vmul.f32 %v2083, %v2085
  %v2087 = vadd.f32 %v2083, %v2086
  %vm2088 = vweird.f32 %v2081
  %vm2089 = vweird.f32 %v2083
  %vm2090 = vmor %vm2088, %vm2089
  %v2091 = vsel %vm2090, %v2083, %v2087
  %v2092 = vand.u32 2147483647, %v2081
  %vm2093 = vcmp.eq.f32.partialorder %v2092, 8.507059e+37
  %v2094 = vand.u32 %v2081, 2147483648
  %v2095 = vor.u32 1.1754944e-38, %v2094
  %v2096 = vsel %vm2093, %v2095, %v2091
  %v2097 = vmul.f32 1.0, %v2096
  %v2098 = vrcp.pop %v2082
  %v2099 = vmul.f32 %v2082, %v2098
  %v2100 = vsub.f32 1.0, %v2099
  %v2101 = vmul.f32 %v2098, %v2100
  %v2102 = vadd.f32 %v2098, %v2101
  %vm2103 = vweird.f32 %v2082
  %vm2104 = vweird.f32 %v2098
  %vm2105 = vmor %vm2103, %vm2104
  %v2106 = vsel %vm2105, %v2098, %v2102
  %v2107 = vand.u32 2147483647, %v2082
  %vm2108 = vcmp.eq.f32.partialorder %v2107, 8.507059e+37
  %v2109 = vand.u32 %v2082, 2147483648
  %v2110 = vor.u32 1.1754944e-38, %v2109
  %v2111 = vsel %vm2108, %v2110, %v2106
  %v2112 = vmul.f32 1.0, %v2111
  %v2113 = vtanh.pop %v2074
  %v2114 = vmul.f32 %v2097, %v2019
  %2116 = vrot.lane.b32.xlu0 %v2113, 64
  %v2117 = vpop.permute.xlu0 %2116
  %v2119 = vmul.f32 %v2097, %v2117
  %2121 = vrot.lane.b32.xlu0 %v2119, 64
  %v2122 = vpop.permute.xlu0 %2121
  %v2124 = vadd.f32 %v2114, %v2122
  %v2125 = vtanh.pop %v2124
  %2127 = vrot.lane.b32.xlu0 %v2125, 64
  %v2128 = vpop.permute.xlu0 %2127
  %v2130 = vmul.f32 %v2112, %v2128
  %v2131 = vrot.slane %v1769, 6
  %v2132 = vrot.slane %v1792, 6
  %v2136 = vsel %vm1815, %v2130, 0
  %2138 = vmatpush.msra.mxu0 0.0
  %2139 = vmatpush.msra.mxu0 0.0
  %2140 = vmatpush.msra.mxu0 0.0
  %2141 = vmatpush.msra.mxu0 0.0
  %2142 = vmatpush.msra.mxu0 0.0
  %2143 = vmatpush.msra.mxu0 0.0
  %2144 = vmatpush.msra.mxu0 0.0
  %2145 = vmatpush.msra.mxu0 0.0
  %2146 = vmatpush.msra.mxu0 %v1811
  %2147 = vmatpush.msra.mxu0 %v1809
  %2148 = vmatpush.msra.mxu0 %v1807
  %2149 = vmatpush.msra.mxu0 %v1805
  %2150 = vmatpush.msra.mxu0 %v1803
  %2151 = vmatpush.msra.mxu0 %v1801
  %2152 = vmatpush.msra.mxu0 %v1799
  %2153 = vmatpush.msra.mxu0 %v1797
  %2154 = vmatmul.f32.gmra.mxu0 %v2136
  %v2155 = vpop.f32.mrf.mxu0
  %v2156 = vadd.f32 %v2131, %v2155
  %2157 = vdwg.mxu0
  %2158 = vmatpush.msra.mxu0 0.0
  %2159 = vmatpush.msra.mxu0 0.0
  %2160 = vmatpush.msra.mxu0 0.0
  %2161 = vmatpush.msra.mxu0 0.0
  %2162 = vmatpush.msra.mxu0 0.0
  %2163 = vmatpush.msra.mxu0 0.0
  %2164 = vmatpush.msra.mxu0 0.0
  %2165 = vmatpush.msra.mxu0 0.0
  %2166 = vmatpush.msra.mxu0 %v1812
  %2167 = vmatpush.msra.mxu0 %v1810
  %2168 = vmatpush.msra.mxu0 %v1808
  %2169 = vmatpush.msra.mxu0 %v1806
  %2170 = vmatpush.msra.mxu0 %v1804
  %2171 = vmatpush.msra.mxu0 %v1802
  %2172 = vmatpush.msra.mxu0 %v1800
  %2173 = vmatpush.msra.mxu0 %v1798
  %2174 = vmatmul.f32.gmra.mxu0 %v2136
  %v2175 = vpop.f32.mrf.mxu0
  %v2176 = vadd.f32 %v2132, %v2175
  %2177 = vdwg.mxu0
  %v2178 = vadd.f32 %v2156, %v1964
  %v2179 = vadd.f32 %v2176, %v1965
  %v2180 = vxor.u32 %v2178, 2147483648
  %v2181 = vxor.u32 %v2179, 2147483648
  %v2182 = vmul.f32 %v2180, 1.442695
  %v2183 = vpow.pop %v2182
  %v2184 = vmul.f32 %v2181, 1.442695
  %v2185 = vpow.pop %v2184
  %v2186 = vadd.f32 %v2183, 1.0
  %v2187 = vadd.f32 %v2185, 1.0
  %v2188 = vrcp.pop %v2186
  %v2189 = vmul.f32 %v2186, %v2188
  %v2190 = vsub.f32 1.0, %v2189
  %v2191 = vmul.f32 %v2188, %v2190
  %v2192 = vadd.f32 %v2188, %v2191
  %vm2193 = vweird.f32 %v2186
  %vm2194 = vweird.f32 %v2188
  %vm2195 = vmor %vm2193, %vm2194
  %v2196 = vsel %vm2195, %v2188, %v2192
  %v2197 = vand.u32 2147483647, %v2186
  %vm2198 = vcmp.eq.f32.partialorder %v2197, 8.507059e+37
  %v2199 = vand.u32 %v2186, 2147483648
  %v2200 = vor.u32 1.1754944e-38, %v2199
  %v2201 = vsel %vm2198, %v2200, %v2196
  %v2202 = vmul.f32 1.0, %v2201
  %v2203 = vrcp.pop %v2187
  %v2204 = vmul.f32 %v2187, %v2203
  %v2205 = vsub.f32 1.0, %v2204
  %v2206 = vmul.f32 %v2203, %v2205
  %v2207 = vadd.f32 %v2203, %v2206
  %vm2208 = vweird.f32 %v2187
  %vm2209 = vweird.f32 %v2203
  %vm2210 = vmor %vm2208, %vm2209
  %v2211 = vsel %vm2210, %v2203, %v2207
  %v2212 = vand.u32 2147483647, %v2187
  %vm2213 = vcmp.eq.f32.partialorder %v2212, 8.507059e+37
  %v2214 = vand.u32 %v2187, 2147483648
  %v2215 = vor.u32 1.1754944e-38, %v2214
  %v2216 = vsel %vm2213, %v2215, %v2211
  %v2217 = vmul.f32 1.0, %v2216
  %v2218 = vtanh.pop %v2179
  %v2219 = vmul.f32 %v2202, %v2124
  %2221 = vrot.lane.b32.xlu0 %v2218, 64
  %v2222 = vpop.permute.xlu0 %2221
  %v2224 = vmul.f32 %v2202, %v2222
  %2226 = vrot.lane.b32.xlu0 %v2224, 64
  %v2227 = vpop.permute.xlu0 %2226
  %v2229 = vadd.f32 %v2219, %v2227
  %v2230 = vtanh.pop %v2229
  %2232 = vrot.lane.b32.xlu0 %v2230, 64
  %v2233 = vpop.permute.xlu0 %2232
  %v2235 = vmul.f32 %v2217, %v2233
  %v2237 = vsel %vm1815, %v2235, 0
  %2239 = vmatpush.msra.mxu0 0.0
  %2240 = vmatpush.msra.mxu0 0.0
  %2241 = vmatpush.msra.mxu0 0.0
  %2242 = vmatpush.msra.mxu0 0.0
  %2243 = vmatpush.msra.mxu0 0.0
  %2244 = vmatpush.msra.mxu0 0.0
  %2245 = vmatpush.msra.mxu0 0.0
  %2246 = vmatpush.msra.mxu0 0.0
  %2247 = vmatpush.msra.mxu0 %v1811
  %2248 = vmatpush.msra.mxu0 %v1809
  %2249 = vmatpush.msra.mxu0 %v1807
  %2250 = vmatpush.msra.mxu0 %v1805
  %2251 = vmatpush.msra.mxu0 %v1803
  %2252 = vmatpush.msra.mxu0 %v1801
  %2253 = vmatpush.msra.mxu0 %v1799
  %2254 = vmatpush.msra.mxu0 %v1797
  %2255 = vmatmul.f32.gmra.mxu0 %v2237
  %v2256 = vpop.f32.mrf.mxu0
  %v2257 = vadd.f32 %v1772, %v2256
  %2258 = vdwg.mxu0
  %2259 = vmatpush.msra.mxu0 0.0
  %2260 = vmatpush.msra.mxu0 0.0
  %2261 = vmatpush.msra.mxu0 0.0
  %2262 = vmatpush.msra.mxu0 0.0
  %2263 = vmatpush.msra.mxu0 0.0
  %2264 = vmatpush.msra.mxu0 0.0
  %2265 = vmatpush.msra.mxu0 0.0
  %2266 = vmatpush.msra.mxu0 0.0
  %2267 = vmatpush.msra.mxu0 %v1812
  %2268 = vmatpush.msra.mxu0 %v1810
  %2269 = vmatpush.msra.mxu0 %v1808
  %2270 = vmatpush.msra.mxu0 %v1806
  %2271 = vmatpush.msra.mxu0 %v1804
  %2272 = vmatpush.msra.mxu0 %v1802
  %2273 = vmatpush.msra.mxu0 %v1800
  %2274 = vmatpush.msra.mxu0 %v1798
  %2275 = vmatmul.f32.gmra.mxu0 %v2237
  %v2276 = vpop.f32.mrf.mxu0
  %v2277 = vadd.f32 %v1795, %v2276
  %2278 = vdwg.mxu0
  %v2279 = vadd.f32 %v2257, %v1964
  %v2280 = vadd.f32 %v2277, %v1965
  %v2281 = vxor.u32 %v2279, 2147483648
  %v2282 = vxor.u32 %v2280, 2147483648
  %v2283 = vmul.f32 %v2281, 1.442695
  %v2284 = vpow.pop %v2283
  %v2285 = vmul.f32 %v2282, 1.442695
  %v2286 = vpow.pop %v2285
  %v2287 = vadd.f32 %v2284, 1.0
  %v2288 = vadd.f32 %v2286, 1.0
  %v2289 = vrcp.pop %v2287
  %v2290 = vmul.f32 %v2287, %v2289
  %v2291 = vsub.f32 1.0, %v2290
  %v2292 = vmul.f32 %v2289, %v2291
  %v2293 = vadd.f32 %v2289, %v2292
  %vm2294 = vweird.f32 %v2287
  %vm2295 = vweird.f32 %v2289
  %vm2296 = vmor %vm2294, %vm2295
  %v2297 = vsel %vm2296, %v2289, %v2293
  %v2298 = vand.u32 2147483647, %v2287
  %vm2299 = vcmp.eq.f32.partialorder %v2298, 8.507059e+37
  %v2300 = vand.u32 %v2287, 2147483648
  %v2301 = vor.u32 1.1754944e-38, %v2300
  %v2302 = vsel %vm2299, %v2301, %v2297
  %v2303 = vmul.f32 1.0, %v2302
  %v2304 = vrcp.pop %v2288
  %v2305 = vmul.f32 %v2288, %v2304
  %v2306 = vsub.f32 1.0, %v2305
  %v2307 = vmul.f32 %v2304, %v2306
  %v2308 = vadd.f32 %v2304, %v2307
  %vm2309 = vweird.f32 %v2288
  %vm2310 = vweird.f32 %v2304
  %vm2311 = vmor %vm2309, %vm2310
  %v2312 = vsel %vm2311, %v2304, %v2308
  %v2313 = vand.u32 2147483647, %v2288
  %vm2314 = vcmp.eq.f32.partialorder %v2313, 8.507059e+37
  %v2315 = vand.u32 %v2288, 2147483648
  %v2316 = vor.u32 1.1754944e-38, %v2315
  %v2317 = vsel %vm2314, %v2316, %v2312
  %v2318 = vmul.f32 1.0, %v2317
  %v2319 = vtanh.pop %v2280
  %v2320 = vmul.f32 %v2303, %v2229
  %2322 = vrot.lane.b32.xlu0 %v2319, 64
  %v2323 = vpop.permute.xlu0 %2322
  %v2325 = vmul.f32 %v2303, %v2323
  %2327 = vrot.lane.b32.xlu0 %v2325, 64
  %v2328 = vpop.permute.xlu0 %2327
  %v2330 = vadd.f32 %v2320, %v2328
  %v2331 = vtanh.pop %v2330
  %2333 = vrot.lane.b32.xlu0 %v2331, 64
  %v2334 = vpop.permute.xlu0 %2333
  %v2336 = vmul.f32 %v2318, %v2334
  %v2339 = vrot.slane %v1772, 2
  %v2340 = vrot.slane %v1795, 2
  %v2344 = vsel %vm1815, %v2336, 0
  %2346 = vmatpush.msra.mxu0 0.0
  %2347 = vmatpush.msra.mxu0 0.0
  %2348 = vmatpush.msra.mxu0 0.0
  %2349 = vmatpush.msra.mxu0 0.0
  %2350 = vmatpush.msra.mxu0 0.0
  %2351 = vmatpush.msra.mxu0 0.0
  %2352 = vmatpush.msra.mxu0 0.0
  %2353 = vmatpush.msra.mxu0 0.0
  %2354 = vmatpush.msra.mxu0 %v1811
  %2355 = vmatpush.msra.mxu0 %v1809
  %2356 = vmatpush.msra.mxu0 %v1807
  %2357 = vmatpush.msra.mxu0 %v1805
  %2358 = vmatpush.msra.mxu0 %v1803
  %2359 = vmatpush.msra.mxu0 %v1801
  %2360 = vmatpush.msra.mxu0 %v1799
  %2361 = vmatpush.msra.mxu0 %v1797
  %2362 = vmatmul.f32.gmra.mxu0 %v2344
  %v2363 = vpop.f32.mrf.mxu0
  %v2364 = vadd.f32 %v2339, %v2363
  %2365 = vdwg.mxu0
  %2366 = vmatpush.msra.mxu0 0.0
  %2367 = vmatpush.msra.mxu0 0.0
  %2368 = vmatpush.msra.mxu0 0.0
  %2369 = vmatpush.msra.mxu0 0.0
  %2370 = vmatpush.msra.mxu0 0.0
  %2371 = vmatpush.msra.mxu0 0.0
  %2372 = vmatpush.msra.mxu0 0.0
  %2373 = vmatpush.msra.mxu0 0.0
  %2374 = vmatpush.msra.mxu0 %v1812
  %2375 = vmatpush.msra.mxu0 %v1810
  %2376 = vmatpush.msra.mxu0 %v1808
  %2377 = vmatpush.msra.mxu0 %v1806
  %2378 = vmatpush.msra.mxu0 %v1804
  %2379 = vmatpush.msra.mxu0 %v1802
  %2380 = vmatpush.msra.mxu0 %v1800
  %2381 = vmatpush.msra.mxu0 %v1798
  %2382 = vmatmul.f32.gmra.mxu0 %v2344
  %v2383 = vpop.f32.mrf.mxu0
  %v2384 = vadd.f32 %v2340, %v2383
  %2385 = vdwg.mxu0
  %v2386 = vadd.f32 %v2364, %v1964
  %v2387 = vadd.f32 %v2384, %v1965
  %v2388 = vxor.u32 %v2386, 2147483648
  %v2389 = vxor.u32 %v2387, 2147483648
  %v2390 = vmul.f32 %v2388, 1.442695
  %v2391 = vpow.pop %v2390
  %v2392 = vmul.f32 %v2389, 1.442695
  %v2393 = vpow.pop %v2392
  %v2394 = vadd.f32 %v2391, 1.0
  %v2395 = vadd.f32 %v2393, 1.0
  %v2396 = vrcp.pop %v2394
  %v2397 = vmul.f32 %v2394, %v2396
  %v2398 = vsub.f32 1.0, %v2397
  %v2399 = vmul.f32 %v2396, %v2398
  %v2400 = vadd.f32 %v2396, %v2399
  %vm2401 = vweird.f32 %v2394
  %vm2402 = vweird.f32 %v2396
  %vm2403 = vmor %vm2401, %vm2402
  %v2404 = vsel %vm2403, %v2396, %v2400
  %v2405 = vand.u32 2147483647, %v2394
  %vm2406 = vcmp.eq.f32.partialorder %v2405, 8.507059e+37
  %v2407 = vand.u32 %v2394, 2147483648
  %v2408 = vor.u32 1.1754944e-38, %v2407
  %v2409 = vsel %vm2406, %v2408, %v2404
  %v2410 = vmul.f32 1.0, %v2409
  %v2411 = vrcp.pop %v2395
  %v2412 = vmul.f32 %v2395, %v2411
  %v2413 = vsub.f32 1.0, %v2412
  %v2414 = vmul.f32 %v2411, %v2413
  %v2415 = vadd.f32 %v2411, %v2414
  %vm2416 = vweird.f32 %v2395
  %vm2417 = vweird.f32 %v2411
  %vm2418 = vmor %vm2416, %vm2417
  %v2419 = vsel %vm2418, %v2411, %v2415
  %v2420 = vand.u32 2147483647, %v2395
  %vm2421 = vcmp.eq.f32.partialorder %v2420, 8.507059e+37
  %v2422 = vand.u32 %v2395, 2147483648
  %v2423 = vor.u32 1.1754944e-38, %v2422
  %v2424 = vsel %vm2421, %v2423, %v2419
  %v2425 = vmul.f32 1.0, %v2424
  %v2426 = vtanh.pop %v2387
  %v2427 = vmul.f32 %v2410, %v2330
  %2429 = vrot.lane.b32.xlu0 %v2426, 64
  %v2430 = vpop.permute.xlu0 %2429
  %v2432 = vmul.f32 %v2410, %v2430
  %2434 = vrot.lane.b32.xlu0 %v2432, 64
  %v2435 = vpop.permute.xlu0 %2434
  %v2437 = vadd.f32 %v2427, %v2435
  %v2438 = vtanh.pop %v2437
  %2440 = vrot.lane.b32.xlu0 %v2438, 64
  %v2441 = vpop.permute.xlu0 %2440
  %v2443 = vmul.f32 %v2425, %v2441
  %v2444 = vrot.slane %v1772, 4
  %v2445 = vrot.slane %v1795, 4
  %v2449 = vsel %vm1815, %v2443, 0
  %2451 = vmatpush.msra.mxu0 0.0
  %2452 = vmatpush.msra.mxu0 0.0
  %2453 = vmatpush.msra.mxu0 0.0
  %2454 = vmatpush.msra.mxu0 0.0
  %2455 = vmatpush.msra.mxu0 0.0
  %2456 = vmatpush.msra.mxu0 0.0
  %2457 = vmatpush.msra.mxu0 0.0
  %2458 = vmatpush.msra.mxu0 0.0
  %2459 = vmatpush.msra.mxu0 %v1811
  %2460 = vmatpush.msra.mxu0 %v1809
  %2461 = vmatpush.msra.mxu0 %v1807
  %2462 = vmatpush.msra.mxu0 %v1805
  %2463 = vmatpush.msra.mxu0 %v1803
  %2464 = vmatpush.msra.mxu0 %v1801
  %2465 = vmatpush.msra.mxu0 %v1799
  %2466 = vmatpush.msra.mxu0 %v1797
  %2467 = vmatmul.f32.gmra.mxu0 %v2449
  %v2468 = vpop.f32.mrf.mxu0
  %v2469 = vadd.f32 %v2444, %v2468
  %2470 = vdwg.mxu0
  %2471 = vmatpush.msra.mxu0 0.0
  %2472 = vmatpush.msra.mxu0 0.0
  %2473 = vmatpush.msra.mxu0 0.0
  %2474 = vmatpush.msra.mxu0 0.0
  %2475 = vmatpush.msra.mxu0 0.0
  %2476 = vmatpush.msra.mxu0 0.0
  %2477 = vmatpush.msra.mxu0 0.0
  %2478 = vmatpush.msra.mxu0 0.0
  %2479 = vmatpush.msra.mxu0 %v1812
  %2480 = vmatpush.msra.mxu0 %v1810
  %2481 = vmatpush.msra.mxu0 %v1808
  %2482 = vmatpush.msra.mxu0 %v1806
  %2483 = vmatpush.msra.mxu0 %v1804
  %2484 = vmatpush.msra.mxu0 %v1802
  %2485 = vmatpush.msra.mxu0 %v1800
  %2486 = vmatpush.msra.mxu0 %v1798
  %2487 = vmatmul.f32.gmra.mxu0 %v2449
  %v2488 = vpop.f32.mrf.mxu0
  %v2489 = vadd.f32 %v2445, %v2488
  %2490 = vdwg.mxu0
  %v2491 = vadd.f32 %v2469, %v1964
  %v2492 = vadd.f32 %v2489, %v1965
  %v2493 = vxor.u32 %v2491, 2147483648
  %v2494 = vxor.u32 %v2492, 2147483648
  %v2495 = vmul.f32 %v2493, 1.442695
  %v2496 = vpow.pop %v2495
  %v2497 = vmul.f32 %v2494, 1.442695
  %v2498 = vpow.pop %v2497
  %v2499 = vadd.f32 %v2496, 1.0
  %v2500 = vadd.f32 %v2498, 1.0
  %v2501 = vrcp.pop %v2499
  %v2502 = vmul.f32 %v2499, %v2501
  %v2503 = vsub.f32 1.0, %v2502
  %v2504 = vmul.f32 %v2501, %v2503
  %v2505 = vadd.f32 %v2501, %v2504
  %vm2506 = vweird.f32 %v2499
  %vm2507 = vweird.f32 %v2501
  %vm2508 = vmor %vm2506, %vm2507
  %v2509 = vsel %vm2508, %v2501, %v2505
  %v2510 = vand.u32 2147483647, %v2499
  %vm2511 = vcmp.eq.f32.partialorder %v2510, 8.507059e+37
  %v2512 = vand.u32 %v2499, 2147483648
  %v2513 = vor.u32 1.1754944e-38, %v2512
  %v2514 = vsel %vm2511, %v2513, %v2509
  %v2515 = vmul.f32 1.0, %v2514
  %v2516 = vrcp.pop %v2500
  %v2517 = vmul.f32 %v2500, %v2516
  %v2518 = vsub.f32 1.0, %v2517
  %v2519 = vmul.f32 %v2516, %v2518
  %v2520 = vadd.f32 %v2516, %v2519
  %vm2521 = vweird.f32 %v2500
  %vm2522 = vweird.f32 %v2516
  %vm2523 = vmor %vm2521, %vm2522
  %v2524 = vsel %vm2523, %v2516, %v2520
  %v2525 = vand.u32 2147483647, %v2500
  %vm2526 = vcmp.eq.f32.partialorder %v2525, 8.507059e+37
  %v2527 = vand.u32 %v2500, 2147483648
  %v2528 = vor.u32 1.1754944e-38, %v2527
  %v2529 = vsel %vm2526, %v2528, %v2524
  %v2530 = vmul.f32 1.0, %v2529
  %v2531 = vtanh.pop %v2492
  %v2532 = vmul.f32 %v2515, %v2437
  %2534 = vrot.lane.b32.xlu0 %v2531, 64
  %v2535 = vpop.permute.xlu0 %2534
  %v2537 = vmul.f32 %v2515, %v2535
  %2539 = vrot.lane.b32.xlu0 %v2537, 64
  %v2540 = vpop.permute.xlu0 %2539
  %v2542 = vadd.f32 %v2532, %v2540
  %v2543 = vtanh.pop %v2542
  %2545 = vrot.lane.b32.xlu0 %v2543, 64
  %v2546 = vpop.permute.xlu0 %2545
  %v2548 = vmul.f32 %v2530, %v2546
  %v2549 = vrot.slane %v1772, 6
  %v2550 = vrot.slane %v1795, 6
  %v2554 = vsel %vm1815, %v2548, 0
  %2556 = vmatpush.msra.mxu0 0.0
  %2557 = vmatpush.msra.mxu0 0.0
  %2558 = vmatpush.msra.mxu0 0.0
  %2559 = vmatpush.msra.mxu0 0.0
  %2560 = vmatpush.msra.mxu0 0.0
  %2561 = vmatpush.msra.mxu0 0.0
  %2562 = vmatpush.msra.mxu0 0.0
  %2563 = vmatpush.msra.mxu0 0.0
  %2564 = vmatpush.msra.mxu0 %v1811
  %2565 = vmatpush.msra.mxu0 %v1809
  %2566 = vmatpush.msra.mxu0 %v1807
  %2567 = vmatpush.msra.mxu0 %v1805
  %2568 = vmatpush.msra.mxu0 %v1803
  %2569 = vmatpush.msra.mxu0 %v1801
  %2570 = vmatpush.msra.mxu0 %v1799
  %2571 = vmatpush.msra.mxu0 %v1797
  %2572 = vmatmul.f32.gmra.mxu0 %v2554
  %v2573 = vpop.f32.mrf.mxu0
  %v2574 = vadd.f32 %v2549, %v2573
  %2575 = vdwg.mxu0
  %2576 = vmatpush.msra.mxu0 0.0
  %2577 = vmatpush.msra.mxu0 0.0
  %2578 = vmatpush.msra.mxu0 0.0
  %2579 = vmatpush.msra.mxu0 0.0
  %2580 = vmatpush.msra.mxu0 0.0
  %2581 = vmatpush.msra.mxu0 0.0
  %2582 = vmatpush.msra.mxu0 0.0
  %2583 = vmatpush.msra.mxu0 0.0
  %2584 = vmatpush.msra.mxu0 %v1812
  %2585 = vmatpush.msra.mxu0 %v1810
  %2586 = vmatpush.msra.mxu0 %v1808
  %2587 = vmatpush.msra.mxu0 %v1806
  %2588 = vmatpush.msra.mxu0 %v1804
  %2589 = vmatpush.msra.mxu0 %v1802
  %2590 = vmatpush.msra.mxu0 %v1800
  %2591 = vmatpush.msra.mxu0 %v1798
  %2592 = vmatmul.f32.gmra.mxu0 %v2554
  %v2593 = vpop.f32.mrf.mxu0
  %v2594 = vadd.f32 %v2550, %v2593
  %2595 = vdwg.mxu0
  %v2596 = vadd.f32 %v2574, %v1964
  %v2597 = vadd.f32 %v2594, %v1965
  %v2598 = vxor.u32 %v2596, 2147483648
  %v2599 = vxor.u32 %v2597, 2147483648
  %v2600 = vmul.f32 %v2598, 1.442695
  %v2601 = vpow.pop %v2600
  %v2602 = vmul.f32 %v2599, 1.442695
  %v2603 = vpow.pop %v2602
  %v2604 = vadd.f32 %v2601, 1.0
  %v2605 = vadd.f32 %v2603, 1.0
  %v2606 = vrcp.pop %v2604
  %v2607 = vmul.f32 %v2604, %v2606
  %v2608 = vsub.f32 1.0, %v2607
  %v2609 = vmul.f32 %v2606, %v2608
  %v2610 = vadd.f32 %v2606, %v2609
  %vm2611 = vweird.f32 %v2604
  %vm2612 = vweird.f32 %v2606
  %vm2613 = vmor %vm2611, %vm2612
  %v2614 = vsel %vm2613, %v2606, %v2610
  %v2615 = vand.u32 2147483647, %v2604
  %vm2616 = vcmp.eq.f32.partialorder %v2615, 8.507059e+37
  %v2617 = vand.u32 %v2604, 2147483648
  %v2618 = vor.u32 1.1754944e-38, %v2617
  %v2619 = vsel %vm2616, %v2618, %v2614
  %v2620 = vmul.f32 1.0, %v2619
  %v2621 = vrcp.pop %v2605
  %v2622 = vmul.f32 %v2605, %v2621
  %v2623 = vsub.f32 1.0, %v2622
  %v2624 = vmul.f32 %v2621, %v2623
  %v2625 = vadd.f32 %v2621, %v2624
  %vm2626 = vweird.f32 %v2605
  %vm2627 = vweird.f32 %v2621
  %vm2628 = vmor %vm2626, %vm2627
  %v2629 = vsel %vm2628, %v2621, %v2625
  %v2630 = vand.u32 2147483647, %v2605
  %vm2631 = vcmp.eq.f32.partialorder %v2630, 8.507059e+37
  %v2632 = vand.u32 %v2605, 2147483648
  %v2633 = vor.u32 1.1754944e-38, %v2632
  %v2634 = vsel %vm2631, %v2633, %v2629
  %v2635 = vmul.f32 1.0, %v2634
  %v2636 = vtanh.pop %v2597
  %v2637 = vmul.f32 %v2620, %v2542
  %2639 = vrot.lane.b32.xlu0 %v2636, 64
  %v2640 = vpop.permute.xlu0 %2639
  %v2642 = vmul.f32 %v2620, %v2640
  %2644 = vrot.lane.b32.xlu0 %v2642, 64
  %v2645 = vpop.permute.xlu0 %2644
  %v2647 = vadd.f32 %v2637, %v2645
  %v2648 = vtanh.pop %v2647
  %2650 = vrot.lane.b32.xlu0 %v2648, 64
  %v2651 = vpop.permute.xlu0 %2650
  %v2653 = vmul.f32 %v2635, %v2651
  %v2655 = vsel %vm1815, %v2653, 0
  %2657 = vmatpush.msra.mxu0 0.0
  %2658 = vmatpush.msra.mxu0 0.0
  %2659 = vmatpush.msra.mxu0 0.0
  %2660 = vmatpush.msra.mxu0 0.0
  %2661 = vmatpush.msra.mxu0 0.0
  %2662 = vmatpush.msra.mxu0 0.0
  %2663 = vmatpush.msra.mxu0 0.0
  %2664 = vmatpush.msra.mxu0 0.0
  %2665 = vmatpush.msra.mxu0 %v1811
  %2666 = vmatpush.msra.mxu0 %v1809
  %2667 = vmatpush.msra.mxu0 %v1807
  %2668 = vmatpush.msra.mxu0 %v1805
  %2669 = vmatpush.msra.mxu0 %v1803
  %2670 = vmatpush.msra.mxu0 %v1801
  %2671 = vmatpush.msra.mxu0 %v1799
  %2672 = vmatpush.msra.mxu0 %v1797
  %2673 = vmatmul.f32.gmra.mxu0 %v2655
  %v2674 = vpop.f32.mrf.mxu0
  %v2675 = vadd.f32 %v1964, %v2674
  %2676 = vdwg.mxu0
  %2677 = vmatpush.msra.mxu0 0.0
  %2678 = vmatpush.msra.mxu0 0.0
  %2679 = vmatpush.msra.mxu0 0.0
  %2680 = vmatpush.msra.mxu0 0.0
  %2681 = vmatpush.msra.mxu0 0.0
  %2682 = vmatpush.msra.mxu0 0.0
  %2683 = vmatpush.msra.mxu0 0.0
  %2684 = vmatpush.msra.mxu0 0.0
  %2685 = vmatpush.msra.mxu0 %v1812
  %2686 = vmatpush.msra.mxu0 %v1810
  %2687 = vmatpush.msra.mxu0 %v1808
  %2688 = vmatpush.msra.mxu0 %v1806
  %2689 = vmatpush.msra.mxu0 %v1804
  %2690 = vmatpush.msra.mxu0 %v1802
  %2691 = vmatpush.msra.mxu0 %v1800
  %2692 = vmatpush.msra.mxu0 %v1798
  %2693 = vmatmul.f32.gmra.mxu0 %v2655
  %v2694 = vpop.f32.mrf.mxu0
  %v2695 = vadd.f32 %v1965, %v2694
  %2696 = vdwg.mxu0
  %v2697 = vxor.u32 %v2675, 2147483648
  %v2698 = vxor.u32 %v2695, 2147483648
  %v2699 = vmul.f32 %v2697, 1.442695
  %v2700 = vpow.pop %v2699
  %v2701 = vmul.f32 %v2698, 1.442695
  %v2702 = vpow.pop %v2701
  %v2703 = vadd.f32 %v2700, 1.0
  %v2704 = vadd.f32 %v2702, 1.0
  %v2705 = vrcp.pop %v2703
  %v2706 = vmul.f32 %v2703, %v2705
  %v2707 = vsub.f32 1.0, %v2706
  %v2708 = vmul.f32 %v2705, %v2707
  %v2709 = vadd.f32 %v2705, %v2708
  %vm2710 = vweird.f32 %v2703
  %vm2711 = vweird.f32 %v2705
  %vm2712 = vmor %vm2710, %vm2711
  %v2713 = vsel %vm2712, %v2705, %v2709
  %v2714 = vand.u32 2147483647, %v2703
  %vm2715 = vcmp.eq.f32.partialorder %v2714, 8.507059e+37
  %v2716 = vand.u32 %v2703, 2147483648
  %v2717 = vor.u32 1.1754944e-38, %v2716
  %v2718 = vsel %vm2715, %v2717, %v2713
  %v2719 = vmul.f32 1.0, %v2718
  %v2720 = vrcp.pop %v2704
  %v2721 = vmul.f32 %v2704, %v2720
  %v2722 = vsub.f32 1.0, %v2721
  %v2723 = vmul.f32 %v2720, %v2722
  %v2724 = vadd.f32 %v2720, %v2723
  %vm2725 = vweird.f32 %v2704
  %vm2726 = vweird.f32 %v2720
  %vm2727 = vmor %vm2725, %vm2726
  %v2728 = vsel %vm2727, %v2720, %v2724
  %v2729 = vand.u32 2147483647, %v2704
  %vm2730 = vcmp.eq.f32.partialorder %v2729, 8.507059e+37
  %v2731 = vand.u32 %v2704, 2147483648
  %v2732 = vor.u32 1.1754944e-38, %v2731
  %v2733 = vsel %vm2730, %v2732, %v2728
  %v2734 = vmul.f32 1.0, %v2733
  %v2735 = vtanh.pop %v2695
  %v2736 = vmul.f32 %v2719, %v2647
  %2738 = vrot.lane.b32.xlu0 %v2735, 64
  %v2739 = vpop.permute.xlu0 %2738
  %v2741 = vmul.f32 %v2719, %v2739
  %2743 = vrot.lane.b32.xlu0 %v2741, 64
  %v2744 = vpop.permute.xlu0 %2743
  %v2746 = vadd.f32 %v2736, %v2744
  %v2747 = vtanh.pop %v2746
  %2749 = vrot.lane.b32.xlu0 %v2747, 64
  %v2750 = vpop.permute.xlu0 %2749
  %v2752 = vmul.f32 %v2734, %v2750
  %v2753 = vld [vmem:[%s3 + $0xa8] sm:$0xff]
  %v2754 = vld [vmem:[%s3 + $0xb0] sm:$0xff]
  %v2755 = vld [vmem:[%s3 + $0xb8] sm:$0xff]
  %v2756 = vld [vmem:[%s3 + $0xc0] sm:$0xff]
  %v2757 = vld [vmem:[%s3 + $0xc8] sm:$0x1]
  %v2758 = vperm.slane %v2757, 0
  %2760 = vrot.lane.b32.xlu0 %v2752, 96
  %v2761 = vpop.permute.xlu0 %2760
  %v2762 = vsel %vm295, %v2761, 0
  %2764 = vmatpush.msra.mxu0 0.0
  %2765 = vmatpush.msra.mxu0 0.0
  %2766 = vmatpush.msra.mxu0 0.0
  %2767 = vmatpush.msra.mxu0 0.0
  %2768 = vmatpush.msra.mxu0 0.0
  %2769 = vmatpush.msra.mxu0 0.0
  %2770 = vmatpush.msra.mxu0 0.0
  %2771 = vmatpush.msra.mxu0 0.0
  %2772 = vmatpush.msra.mxu0 0.0
  %2773 = vmatpush.msra.mxu0 0.0
  %2774 = vmatpush.msra.mxu0 0.0
  %2775 = vmatpush.msra.mxu0 0.0
  %2776 = vmatpush.msra.mxu0 %v2756
  %2777 = vmatpush.msra.mxu0 %v2755
  %2778 = vmatpush.msra.mxu0 %v2754
  %2779 = vmatpush.msra.mxu0 %v2753
  %2780 = vmatmul.f32.gmra.mxu0 %v2762
  %v2781 = vpop.f32.mrf.mxu0
  %v2782 = vadd.f32 %v2758, %v2781
  %2783 = vdwg.mxu0
  %vm2784 = vcmask 1024
  %2785 = vst.msk [vmem:[%s5] sm:$0x3] %vm2784, %v2782
  // Predicated region
  $region22: #{raven_forward.1} parent=0 // pred_check
    _
  $region23: #{raven_forward.1} parent=0 // pred_check_branch
    %2787 = sbr.rel (0) target = $region25
  $region24: #{raven_forward.1} parent=0 // pred_region
    _
  $region25: #{raven_forward.1} parent=0 // pred_fallthru
    _
  // Predicated region
  $region26: #{raven_forward.1} parent=0 // pred_check
    _
  $region27: #{raven_forward.1} parent=0 // pred_check_branch
    %2789 = sbr.rel (0) target = $region29
  $region28: #{raven_forward.1} parent=0 // pred_region
    _
  $region29: #{raven_forward.1} parent=0 // pred_fallthru
    _

</llo_original>
